<compile_context>
chip_gen: v5e
topology: v5e:2x2
jax: 0.10.0
libtpu: 0.0.40
codegen_flags: <defaults>
</compile_context>

<pallas_src>
import jax
import jax.numpy as jnp
import numpy as np
from jax.experimental import pallas as pl
from jax.experimental.pallas import tpu as pltpu


# -----------------------------------------------------------------------------
# Fused Pallas kernel: bn1 + dense1 + CELU + full conv stack for one batch tile
# -----------------------------------------------------------------------------
def _tabcnn_kernel(x_ref,
                   d_s_ref, d_t_ref, d_w_ref, d_b_ref,
                   s1_ref, t1_ref, w1_ref, mask1_ref, p_ref,
                   s2_ref, t2_ref, w2_ref, b2_ref, mask2_ref,
                   s3_ref, t3_ref, w3_ref, b3_ref,
                   s6_ref, t6_ref, w6_ref, b6_ref,
                   s10_ref, t10_ref, w10_ref, b10_ref,
                   o_ref,
                   h_ref, z1_ref):
    f32 = jnp.float32
    B, _ = x_ref.shape                      # batch tile
    C = s1_ref.shape[0]                     # cha_input
    H = d_w_ref.shape[1]                    # C * L1
    L1 = H // C

    def mm(a, b):
        # default (single-pass bf16) MXU precision, f32 accumulation
        return jnp.dot(a, b, preferred_element_type=f32)

    def relu(a):
        return jnp.maximum(a, 0.0)

    # ---- bn1 (folded) + dense1 + CELU: lane-dense [B, H] matmul ----
    xb = x_ref[...] * d_s_ref[...] + d_t_ref[...]
    h = mm(xb, d_w_ref[...]) + d_b_ref[...]
    h = jnp.where(h > 0.0, h, jnp.exp(jnp.minimum(h, 0.0)) - 1.0)      # CELU(alpha=1)
    h_ref[...] = h

    # ---- relayout [B, C*L1] -> [C, B*L1] (batch folded into the lane axis) ----
    # Small static VMEM copies (C*B of them); all offsets are compile-time constants.
    for c in range(C):
        for b in range(B):
            z1_ref[pl.ds(c, 1), pl.ds(b * L1, L1)] = h_ref[pl.ds(b, 1), pl.ds(c * L1, L1)]

    # Boundary masks for per-sample seams inside the [*, B*L] lane axis.
    m1_m2 = mask1_ref[pl.ds(0, 1), :]       # d = -2  (L1 grid)
    m1_m1 = mask1_ref[pl.ds(1, 1), :]       # d = -1
    m1_p1 = mask1_ref[pl.ds(2, 1), :]       # d = +1
    m1_p2 = mask1_ref[pl.ds(3, 1), :]       # d = +2
    m2_m1 = mask2_ref[pl.ds(0, 1), :]       # d = -1  (L2 grid)
    m2_p1 = mask2_ref[pl.ds(1, 1), :]       # d = +1

    def sh(z, d, mask):
        # out[:, m] = z[:, m + d] inside each per-sample window, zero outside.
        lanes = z.shape[-1]
        return pltpu.roll(z, (-d) % lanes, axis=1) * mask

    def conv_k3(z, wp, b):
        # one MXU matmul per k=3 conv: [O, 3*I] x [3*I, B*L2]
        stacked = jnp.concatenate([sh(z, -1, m2_m1), z, sh(z, 1, m2_p1)], axis=0)
        return mm(wp, stacked) + b

    # ---- bn_cv1 + grouped conv1 (k=5, pad=2, no bias) + ReLU ----
    z = z1_ref[...] * s1_ref[...] + t1_ref[...]                         # [C, B*L1]
    y = mm(w1_ref[2], z)
    y += mm(w1_ref[0], sh(z, -2, m1_m2))
    y += mm(w1_ref[1], sh(z, -1, m1_m1))
    y += mm(w1_ref[3], sh(z, 1, m1_p1))
    y += mm(w1_ref[4], sh(z, 2, m1_p2))
    y = relu(y)                                                         # [CK, B*L1]

    # ---- AdaptiveAvgPool1d(2E -> E) as one matmul ----
    y = mm(y, p_ref[...])                                               # [CK, B*L2]

    # ---- bn_cv2 (+dropout2=id) + conv2 + ReLU + residual ----
    z = relu(conv_k3(y * s2_ref[...] + t2_ref[...], w2_ref[...], b2_ref[...])) + y

    # ---- bn_cv3 + conv3 + ReLU ----
    z = relu(conv_k3(z * s3_ref[...] + t3_ref[...], w3_ref[...], b3_ref[...]))   # [CH, B*L2]

    # ---- 6 residual conv blocks (weights indexed per iteration) ----
    for i in range(6):
        zi = z
        z = relu(conv_k3(z * s6_ref[i] + t6_ref[i], w6_ref[i], b6_ref[i])) + zi

    # ---- bn_cv10 + conv10 + ReLU ----
    z = relu(conv_k3(z * s10_ref[...] + t10_ref[...], w10_ref[...], b10_ref[...]))  # [C, B*L2]
    o_ref[0] = z


# -----------------------------------------------------------------------------
# Wrapper (pallas_call glue)
# -----------------------------------------------------------------------------
def pallas_forward(x, kp, input_dim, embed_dim, K, batch_tile=8):
    # batch_tile*embed_dim should be a multiple of 128 (lane-dense stores); a larger
    # tile amortizes per-grid-step overhead (plenty of VMEM headroom here), and an
    # even number of tiles lets v7x's two TensorCores both get work ("parallel" axis).
    N, D = x.shape
    C, E = input_dim, embed_dim
    L1, L2 = 2 * E, E
    H = C * L1
    B = batch_tile
    T = -(-N // B)
    Np = T * B
    if Np != N:
        x = jnp.pad(x, ((0, Np - N), (0, 0)))

    # Per-sample seam masks for lane shifts on the packed [*, B*L] lane axis.
    def shift_mask(L, d):
        pos = jnp.arange(B * L, dtype=jnp.int32) % L
        ok = (pos + d >= 0) & (pos + d <= L - 1)
        return ok.astype(jnp.float32)[None, :]

    mask1 = jnp.concatenate([shift_mask(L1, d) for d in (-2, -1, 1, 2)], axis=0)  # [4, B*L1]
    mask2 = jnp.concatenate([shift_mask(L2, d) for d in (-1, 1)], axis=0)         # [2, B*L2]

    # AdaptiveAvgPool1d(2E -> E): adjacent-lane pair averaging as a matmul.
    r = jnp.arange(B * L1)[:, None]
    c = jnp.arange(B * L2)[None, :]
    pool = 0.5 * ((r == 2 * c) | (r == 2 * c + 1)).astype(jnp.float32)            # [B*L1, B*L2]

    weights = [kp['d_s'], kp['d_t'], kp['d_w'], kp['d_b'],
               kp['s_cv1'], kp['t_cv1'], kp['w1s'], mask1, pool,
               kp['s2'], kp['t2'], kp['w2p'], kp['b2'], mask2,
               kp['s3'], kp['t3'], kp['w3p'], kp['b3'],
               kp['s6'], kp['t6'], kp['w6p'], kp['b6'],
               kp['s10'], kp['t10'], kp['w10p'], kp['b10']]

    def fs(a):
        nd = a.ndim
        return pl.BlockSpec(a.shape, lambda i, _nd=nd: (0,) * _nd)

    out = pl.pallas_call(
        _tabcnn_kernel,
        out_shape=jax.ShapeDtypeStruct((T, C, B * L2), jnp.float32),
        grid=(T,),
        in_specs=[pl.BlockSpec((B, D), lambda i: (i, 0))] + [fs(a) for a in weights],
        out_specs=pl.BlockSpec((1, C, B * L2), lambda i: (i, 0, 0)),
        scratch_shapes=[pltpu.VMEM((B, H), jnp.float32),        # dense/CELU activations
                        pltpu.VMEM((C, B * L1), jnp.float32)],  # relayouted conv input
        compiler_params=pltpu.CompilerParams(dimension_semantics=("parallel",)),
    )(x, *weights)

    # Undo the batch-in-lanes packing: [T, C, B*L2] -> [N, C, L2]
    out = out.reshape(T, C, B, L2).transpose(0, 2, 1, 3).reshape(Np, C, L2)
    return out[:N]


# -----------------------------------------------------------------------------
# Deterministic parameter initialization (torch-layout) + kernel param packing
# -----------------------------------------------------------------------------
def init_params(key, input_dim, embed_dim, K):
    C, E = input_dim, embed_dim
    H = C * E * 2
    CK = C * K
    CH = C * (K // 2)
    keys = iter(jax.random.split(key, 96))

    def nrm(shape, scale):
        return scale * jax.random.normal(next(keys), shape, jnp.float32)

    def bn_params(n):
        g = 0.5 + jax.random.uniform(next(keys), (n,), jnp.float32)
        b = 0.1 * jax.random.normal(next(keys), (n,), jnp.float32)
        m = 0.1 * jax.random.normal(next(keys), (n,), jnp.float32)
        v = 0.5 + jax.random.uniform(next(keys), (n,), jnp.float32)
        return g, b, m, v

    rp = dict(
        bn1=bn_params(C),
        dense1_w=nrm((H, C), 1.0 / np.sqrt(C)),
        dense1_b=nrm((H,), 0.1),
        bn_cv1=bn_params(C),
        conv1_w=nrm((CK, 1, 5), 1.0 / np.sqrt(5.0)),
        bn_cv2=bn_params(CK),
        conv2_w=nrm((CK, CK, 3), 1.0 / np.sqrt(3.0 * CK)),
        conv2_b=nrm((CK,), 0.1),
        bn_cv3=bn_params(CK),
        conv3_w=nrm((CH, CK, 3), 1.0 / np.sqrt(3.0 * CK)),
        conv3_b=nrm((CH,), 0.1),
        bn6=[bn_params(CH) for _ in range(6)],
        conv6_w=[nrm((CH, CH, 3), 1.0 / np.sqrt(3.0 * CH)) for _ in range(6)],
        conv6_b=[nrm((CH,), 0.1) for _ in range(6)],
        bn_cv10=bn_params(CH),
        conv10_w=nrm((C, CH, 3), 1.0 / np.sqrt(3.0 * CH)),
        conv10_b=nrm((C,), 0.1),
    )
    return rp


def to_kernel_params(rp, input_dim, embed_dim, K, eps=1e-5):
    C = input_dim
    CK = C * K

    def fold(p):
        g, b, m, v = p
        s = g / jnp.sqrt(v + eps)
        return s, b - m * s

    def fold_col(p):
        s, t = fold(p)
        return s[:, None], t[:, None]

    def pack3(w):                        # torch [O, I, 3] -> [O, 3*I], tap-major blocks
        return jnp.concatenate([w[:, :, t] for t in range(3)], axis=1)

    kp = {}
    s1, t1 = fold(rp['bn1'])
    kp['d_s'], kp['d_t'] = s1[None, :], t1[None, :]            # [1, C]
    kp['d_w'] = rp['dense1_w'].T                               # [C, H]
    kp['d_b'] = rp['dense1_b'][None, :]                        # [1, H]

    kp['s_cv1'], kp['t_cv1'] = fold_col(rp['bn_cv1'])          # [C, 1]
    grp = (jnp.arange(CK)[:, None] // K
           == jnp.arange(C)[None, :]).astype(jnp.float32)      # [CK, C] group expansion
    w1 = rp['conv1_w'][:, 0, :]                                # [CK, 5]
    kp['w1s'] = jnp.stack([grp * w1[:, t][:, None] for t in range(5)], axis=0)   # [5, CK, C]

    kp['s2'], kp['t2'] = fold_col(rp['bn_cv2'])
    kp['w2p'] = pack3(rp['conv2_w'])                           # [CK, 3*CK]
    kp['b2'] = rp['conv2_b'][:, None]
    kp['s3'], kp['t3'] = fold_col(rp['bn_cv3'])
    kp['w3p'] = pack3(rp['conv3_w'])                           # [CH, 3*CK]
    kp['b3'] = rp['conv3_b'][:, None]
    s6, t6 = zip(*[fold_col(p) for p in rp['bn6']])
    kp['s6'], kp['t6'] = jnp.stack(s6), jnp.stack(t6)          # [6, CH, 1]
    kp['w6p'] = jnp.stack([pack3(w) for w in rp['conv6_w']])   # [6, CH, 3*CH]
    kp['b6'] = jnp.stack([b[:, None] for b in rp['conv6_b']])  # [6, CH, 1]
    kp['s10'], kp['t10'] = fold_col(rp['bn_cv10'])
    kp['w10p'] = pack3(rp['conv10_w'])                         # [C, 3*CH]
    kp['b10'] = rp['conv10_b'][:, None]
    return kp


# -----------------------------------------------------------------------------
# Pure-JAX reference (exact f32 elementwise math, for verification)
# -----------------------------------------------------------------------------
def _conv1d_ref(x, w, b):
    k = w.shape[-1]
    pad = k // 2
    L = x.shape[-1]
    xp = jnp.pad(x, ((0, 0), (0, 0), (pad, pad)))
    y = jnp.zeros((x.shape[0], w.shape[0], L), jnp.float32)
    for t in range(k):
        y = y + (w[None, :, :, t, None] * xp[:, None, :, t:t + L]).sum(axis=2)
    if b is not None:
        y = y + b[None, :, None]
    return y


def _dwconv1d_ref(x, w, rep):
    k = w.shape[-1]
    pad = k // 2
    L = x.shape[-1]
    xg = jnp.repeat(x, rep, axis=1)
    xp = jnp.pad(xg, ((0, 0), (0, 0), (pad, pad)))
    y = jnp.zeros((x.shape[0], w.shape[0], L), jnp.float32)
    for t in range(k):
        y = y + w[None, :, 0, t, None] * xp[:, :, t:t + L]
    return y


def ref_forward(x, rp, input_dim, embed_dim, K, eps=1e-5):
    N = x.shape[0]
    C, E = input_dim, embed_dim
    L1, L2, CK = 2 * E, E, C * K

    def bn(u, p):
        g, b, m, v = p
        sh = (1, -1) + (1,) * (u.ndim - 2)
        return (u - m.reshape(sh)) / jnp.sqrt(v.reshape(sh) + eps) * g.reshape(sh) + b.reshape(sh)

    h = bn(x, rp['bn1'])                                  # dropout1: identity (eval)
    h = (h[:, None, :] * rp['dense1_w'][None, :, :]).sum(-1) + rp['dense1_b'][None, :]
    h = jax.nn.celu(h)
    h = h.reshape(N, C, L1)
    h = bn(h, rp['bn_cv1'])
    h = jax.nn.relu(_dwconv1d_ref(h, rp['conv1_w'], K))
    h = h.reshape(N, CK, L2, 2).mean(-1)                  # AdaptiveAvgPool1d(E)
    x_in = h
    h = bn(h, rp['bn_cv2'])                               # dropout2: identity (eval)
    h = jax.nn.relu(_conv1d_ref(h, rp['conv2_w'], rp['conv2_b']))
    h = h + x_in
    h = bn(h, rp['bn_cv3'])
    h = jax.nn.relu(_conv1d_ref(h, rp['conv3_w'], rp['conv3_b']))
    for i in range(6):
        x_in = h
        h = bn(h, rp['bn6'][i])
        h = jax.nn.relu(_conv1d_ref(h, rp['conv6_w'][i], rp['conv6_b'][i]))
        h = h + x_in
    h = bn(h, rp['bn_cv10'])
    h = jax.nn.relu(_conv1d_ref(h, rp['conv10_w'], rp['conv10_b']))
    return h


# -----------------------------------------------------------------------------
if __name__ == "__main__":
    # hid_dim = 128, L1 = 32, L2 = 16, CK = 16, CH = 8; batch 16 split into 2 tiles of 8
    input_dim, embed_dim, K = 4, 16, 4
    N, B = 16, 8

    key = jax.random.PRNGKey(0)
    kx, kparam = jax.random.split(key)
    x = jax.random.normal(kx, (N, input_dim), jnp.float32)

    rp = init_params(kparam, input_dim, embed_dim, K)
    kp = to_kernel_params(rp, input_dim, embed_dim, K)

    out = pallas_forward(x, kp, input_dim, embed_dim, K, batch_tile=B)
    out = jax.block_until_ready(out)

    ref = ref_forward(x, rp, input_dim, embed_dim, K)
    # Tolerance accounts for single-pass bf16 MXU matmuls (default precision) vs f32 ref.
    np.testing.assert_allclose(np.asarray(out), np.asarray(ref), rtol=3e-2, atol=3e-2)

    print("KERNEL_OK")
</pallas_src>

<mosaic_0001>
module attributes {stable_mosaic.version = 11 : i64} {
  func.func @_tabcnn_kernel(%arg0: i32, %arg1: memref<8x4xf32, #tpu.memory_space<vmem>>, %arg2: memref<1x4xf32, #tpu.memory_space<vmem>>, %arg3: memref<1x4xf32, #tpu.memory_space<vmem>>, %arg4: memref<4x128xf32, #tpu.memory_space<vmem>>, %arg5: memref<1x128xf32, #tpu.memory_space<vmem>>, %arg6: memref<4x1xf32, #tpu.memory_space<vmem>>, %arg7: memref<4x1xf32, #tpu.memory_space<vmem>>, %arg8: memref<5x16x4xf32, #tpu.memory_space<vmem>>, %arg9: memref<4x256xf32, #tpu.memory_space<vmem>>, %arg10: memref<256x128xf32, #tpu.memory_space<vmem>>, %arg11: memref<16x1xf32, #tpu.memory_space<vmem>>, %arg12: memref<16x1xf32, #tpu.memory_space<vmem>>, %arg13: memref<16x48xf32, #tpu.memory_space<vmem>>, %arg14: memref<16x1xf32, #tpu.memory_space<vmem>>, %arg15: memref<2x128xf32, #tpu.memory_space<vmem>>, %arg16: memref<16x1xf32, #tpu.memory_space<vmem>>, %arg17: memref<16x1xf32, #tpu.memory_space<vmem>>, %arg18: memref<8x48xf32, #tpu.memory_space<vmem>>, %arg19: memref<8x1xf32, #tpu.memory_space<vmem>>, %arg20: memref<6x8x1xf32, #tpu.memory_space<vmem>>, %arg21: memref<6x8x1xf32, #tpu.memory_space<vmem>>, %arg22: memref<6x8x24xf32, #tpu.memory_space<vmem>>, %arg23: memref<6x8x1xf32, #tpu.memory_space<vmem>>, %arg24: memref<8x1xf32, #tpu.memory_space<vmem>>, %arg25: memref<8x1xf32, #tpu.memory_space<vmem>>, %arg26: memref<4x24xf32, #tpu.memory_space<vmem>>, %arg27: memref<4x1xf32, #tpu.memory_space<vmem>>, %arg28: memref<1x4x128xf32, #tpu.memory_space<vmem>>, %arg29: memref<8x128xf32, #tpu.memory_space<vmem>>, %arg30: memref<4x256xf32, #tpu.memory_space<vmem>>) attributes {dimension_semantics = [#tpu.dimension_semantics<parallel>], iteration_bounds = array<i64: 2>, scalar_prefetch = 0 : i64, scratch_operands = 2 : i64, tpu.core_type = #tpu.core_type<tc>, window_params = [{transform_indices = @transform_0, window_bounds = array<i64: 8, 4>}, {pipeline_mode = #tpu.pipeline_mode<synchronous>, transform_indices = @transform_1, window_bounds = array<i64: 1, 4>}, {pipeline_mode = #tpu.pipeline_mode<synchronous>, transform_indices = @transform_2, window_bounds = array<i64: 1, 4>}, {pipeline_mode = #tpu.pipeline_mode<synchronous>, transform_indices = @transform_3, window_bounds = array<i64: 4, 128>}, {pipeline_mode = #tpu.pipeline_mode<synchronous>, transform_indices = @transform_4, window_bounds = array<i64: 1, 128>}, {pipeline_mode = #tpu.pipeline_mode<synchronous>, transform_indices = @transform_5, window_bounds = array<i64: 4, 1>}, {pipeline_mode = #tpu.pipeline_mode<synchronous>, transform_indices = @transform_6, window_bounds = array<i64: 4, 1>}, {pipeline_mode = #tpu.pipeline_mode<synchronous>, transform_indices = @transform_7, window_bounds = array<i64: 5, 16, 4>}, {pipeline_mode = #tpu.pipeline_mode<synchronous>, transform_indices = @transform_8, window_bounds = array<i64: 4, 256>}, {pipeline_mode = #tpu.pipeline_mode<synchronous>, transform_indices = @transform_9, window_bounds = array<i64: 256, 128>}, {pipeline_mode = #tpu.pipeline_mode<synchronous>, transform_indices = @transform_10, window_bounds = array<i64: 16, 1>}, {pipeline_mode = #tpu.pipeline_mode<synchronous>, transform_indices = @transform_11, window_bounds = array<i64: 16, 1>}, {pipeline_mode = #tpu.pipeline_mode<synchronous>, transform_indices = @transform_12, window_bounds = array<i64: 16, 48>}, {pipeline_mode = #tpu.pipeline_mode<synchronous>, transform_indices = @transform_13, window_bounds = array<i64: 16, 1>}, {pipeline_mode = #tpu.pipeline_mode<synchronous>, transform_indices = @transform_14, window_bounds = array<i64: 2, 128>}, {pipeline_mode = #tpu.pipeline_mode<synchronous>, transform_indices = @transform_15, window_bounds = array<i64: 16, 1>}, {pipeline_mode = #tpu.pipeline_mode<synchronous>, transform_indices = @transform_16, window_bounds = array<i64: 16, 1>}, {pipeline_mode = #tpu.pipeline_mode<synchronous>, transform_indices = @transform_17, window_bounds = array<i64: 8, 48>}, {pipeline_mode = #tpu.pipeline_mode<synchronous>, transform_indices = @transform_18, window_bounds = array<i64: 8, 1>}, {pipeline_mode = #tpu.pipeline_mode<synchronous>, transform_indices = @transform_19, window_bounds = array<i64: 6, 8, 1>}, {pipeline_mode = #tpu.pipeline_mode<synchronous>, transform_indices = @transform_20, window_bounds = array<i64: 6, 8, 1>}, {pipeline_mode = #tpu.pipeline_mode<synchronous>, transform_indices = @transform_21, window_bounds = array<i64: 6, 8, 24>}, {pipeline_mode = #tpu.pipeline_mode<synchronous>, transform_indices = @transform_22, window_bounds = array<i64: 6, 8, 1>}, {pipeline_mode = #tpu.pipeline_mode<synchronous>, transform_indices = @transform_23, window_bounds = array<i64: 8, 1>}, {pipeline_mode = #tpu.pipeline_mode<synchronous>, transform_indices = @transform_24, window_bounds = array<i64: 8, 1>}, {pipeline_mode = #tpu.pipeline_mode<synchronous>, transform_indices = @transform_25, window_bounds = array<i64: 4, 24>}, {pipeline_mode = #tpu.pipeline_mode<synchronous>, transform_indices = @transform_26, window_bounds = array<i64: 4, 1>}, {transform_indices = @transform_27, window_bounds = array<i64: 1, 4, 128>}]} {
    %c0 = arith.constant 0 : index
    %c0_0 = arith.constant 0 : index
    %0 = vector.load %arg1[%c0, %c0_0] : memref<8x4xf32, #tpu.memory_space<vmem>>, vector<8x4xf32>
    %c0_1 = arith.constant 0 : index
    %c0_2 = arith.constant 0 : index
    %1 = vector.load %arg2[%c0_1, %c0_2] : memref<1x4xf32, #tpu.memory_space<vmem>>, vector<1x4xf32>
    %2 = vector.broadcast %1 : vector<1x4xf32> to vector<8x4xf32>
    %3 = arith.mulf %0, %2 : vector<8x4xf32>
    %c0_3 = arith.constant 0 : index
    %c0_4 = arith.constant 0 : index
    %4 = vector.load %arg3[%c0_3, %c0_4] : memref<1x4xf32, #tpu.memory_space<vmem>>, vector<1x4xf32>
    %5 = vector.broadcast %4 : vector<1x4xf32> to vector<8x4xf32>
    %6 = arith.addf %3, %5 : vector<8x4xf32>
    %c0_5 = arith.constant 0 : index
    %c0_6 = arith.constant 0 : index
    %7 = vector.load %arg4[%c0_5, %c0_6] : memref<4x128xf32, #tpu.memory_space<vmem>>, vector<4x128xf32>
    %cst = arith.constant dense<0.000000e+00> : vector<8x128xf32>
    %8 = tpu.matmul %6, %7, %cst {dimension_numbers = #tpu.dot_dimension_numbers<[1], [0], [0], [1], [0, 0, 1, 1], [], []>} : vector<8x4xf32>, vector<4x128xf32>, vector<8x128xf32> -> vector<8x128xf32>
    %c0_7 = arith.constant 0 : index
    %c0_8 = arith.constant 0 : index
    %9 = vector.load %arg5[%c0_7, %c0_8] : memref<1x128xf32, #tpu.memory_space<vmem>>, vector<1x128xf32>
    %10 = vector.broadcast %9 : vector<1x128xf32> to vector<8x128xf32>
    %11 = arith.addf %8, %10 : vector<8x128xf32>
    %cst_9 = arith.constant 0.000000e+00 : f32
    %12 = vector.broadcast %cst_9 : f32 to vector<8x128xf32>
    %13 = arith.cmpf ogt, %11, %12 : vector<8x128xf32>
    %cst_10 = arith.constant 0.000000e+00 : f32
    %14 = vector.broadcast %cst_10 : f32 to vector<8x128xf32>
    %15 = arith.minimumf %11, %14 : vector<8x128xf32>
    %16 = math.exp %15 : vector<8x128xf32>
    %cst_11 = arith.constant 1.000000e+00 : f32
    %17 = vector.broadcast %cst_11 : f32 to vector<8x128xf32>
    %18 = arith.subf %16, %17 : vector<8x128xf32>
    %19 = arith.select %13, %11, %18 : vector<8x128xi1>, vector<8x128xf32>
    %c0_12 = arith.constant 0 : index
    %c0_13 = arith.constant 0 : index
    %20 = vector.load %arg29[%c0_12, %c0_13] : memref<8x128xf32, #tpu.memory_space<vmem>>, vector<8x128xf32>
    tpu.vector_store %arg29[%c0_12, %c0_13], %19 {strides = array<i32>} : memref<8x128xf32, #tpu.memory_space<vmem>>, vector<8x128xf32>,
    %c0_14 = arith.constant 0 : index
    %c0_15 = arith.constant 0 : index
    %21 = vector.load %arg29[%c0_14, %c0_15] : memref<8x128xf32, #tpu.memory_space<vmem>>, vector<1x32xf32>
    %c0_16 = arith.constant 0 : index
    %c0_17 = arith.constant 0 : index
    %22 = vector.load %arg30[%c0_16, %c0_17] : memref<4x256xf32, #tpu.memory_space<vmem>>, vector<1x32xf32>
    tpu.vector_store %arg30[%c0_16, %c0_17], %21 {strides = array<i32>} : memref<4x256xf32, #tpu.memory_space<vmem>>, vector<1x32xf32>,
    %c1 = arith.constant 1 : index
    %c0_18 = arith.constant 0 : index
    %23 = vector.load %arg29[%c1, %c0_18] : memref<8x128xf32, #tpu.memory_space<vmem>>, vector<1x32xf32>
    %c0_19 = arith.constant 0 : index
    %c32 = arith.constant 32 : index
    %24 = vector.load %arg30[%c0_19, %c32] : memref<4x256xf32, #tpu.memory_space<vmem>>, vector<1x32xf32>
    tpu.vector_store %arg30[%c0_19, %c32], %23 {strides = array<i32>} : memref<4x256xf32, #tpu.memory_space<vmem>>, vector<1x32xf32>,
    %c2 = arith.constant 2 : index
    %c0_20 = arith.constant 0 : index
    %25 = vector.load %arg29[%c2, %c0_20] : memref<8x128xf32, #tpu.memory_space<vmem>>, vector<1x32xf32>
    %c0_21 = arith.constant 0 : index
    %c64 = arith.constant 64 : index
    %26 = vector.load %arg30[%c0_21, %c64] : memref<4x256xf32, #tpu.memory_space<vmem>>, vector<1x32xf32>
    tpu.vector_store %arg30[%c0_21, %c64], %25 {strides = array<i32>} : memref<4x256xf32, #tpu.memory_space<vmem>>, vector<1x32xf32>,
    %c3 = arith.constant 3 : index
    %c0_22 = arith.constant 0 : index
    %27 = vector.load %arg29[%c3, %c0_22] : memref<8x128xf32, #tpu.memory_space<vmem>>, vector<1x32xf32>
    %c0_23 = arith.constant 0 : index
    %c96 = arith.constant 96 : index
    %28 = vector.load %arg30[%c0_23, %c96] : memref<4x256xf32, #tpu.memory_space<vmem>>, vector<1x32xf32>
    tpu.vector_store %arg30[%c0_23, %c96], %27 {strides = array<i32>} : memref<4x256xf32, #tpu.memory_space<vmem>>, vector<1x32xf32>,
    %c4 = arith.constant 4 : index
    %c0_24 = arith.constant 0 : index
    %29 = vector.load %arg29[%c4, %c0_24] : memref<8x128xf32, #tpu.memory_space<vmem>>, vector<1x32xf32>
    %c0_25 = arith.constant 0 : index
    %c128 = arith.constant 128 : index
    %30 = vector.load %arg30[%c0_25, %c128] : memref<4x256xf32, #tpu.memory_space<vmem>>, vector<1x32xf32>
    tpu.vector_store %arg30[%c0_25, %c128], %29 {strides = array<i32>} : memref<4x256xf32, #tpu.memory_space<vmem>>, vector<1x32xf32>,
    %c5 = arith.constant 5 : index
    %c0_26 = arith.constant 0 : index
    %31 = vector.load %arg29[%c5, %c0_26] : memref<8x128xf32, #tpu.memory_space<vmem>>, vector<1x32xf32>
    %c0_27 = arith.constant 0 : index
    %c160 = arith.constant 160 : index
    %32 = vector.load %arg30[%c0_27, %c160] : memref<4x256xf32, #tpu.memory_space<vmem>>, vector<1x32xf32>
    tpu.vector_store %arg30[%c0_27, %c160], %31 {strides = array<i32>} : memref<4x256xf32, #tpu.memory_space<vmem>>, vector<1x32xf32>,
    %c6 = arith.constant 6 : index
    %c0_28 = arith.constant 0 : index
    %33 = vector.load %arg29[%c6, %c0_28] : memref<8x128xf32, #tpu.memory_space<vmem>>, vector<1x32xf32>
    %c0_29 = arith.constant 0 : index
    %c192 = arith.constant 192 : index
    %34 = vector.load %arg30[%c0_29, %c192] : memref<4x256xf32, #tpu.memory_space<vmem>>, vector<1x32xf32>
    tpu.vector_store %arg30[%c0_29, %c192], %33 {strides = array<i32>} : memref<4x256xf32, #tpu.memory_space<vmem>>, vector<1x32xf32>,
    %c7 = arith.constant 7 : index
    %c0_30 = arith.constant 0 : index
    %35 = vector.load %arg29[%c7, %c0_30] : memref<8x128xf32, #tpu.memory_space<vmem>>, vector<1x32xf32>
    %c0_31 = arith.constant 0 : index
    %c224 = arith.constant 224 : index
    %36 = vector.load %arg30[%c0_31, %c224] : memref<4x256xf32, #tpu.memory_space<vmem>>, vector<1x32xf32>
    tpu.vector_store %arg30[%c0_31, %c224], %35 {strides = array<i32>} : memref<4x256xf32, #tpu.memory_space<vmem>>, vector<1x32xf32>,
    %c0_32 = arith.constant 0 : index
    %c32_33 = arith.constant 32 : index
    %37 = vector.load %arg29[%c0_32, %c32_33] : memref<8x128xf32, #tpu.memory_space<vmem>>, vector<1x32xf32>
    %c1_34 = arith.constant 1 : index
    %c0_35 = arith.constant 0 : index
    %38 = vector.load %arg30[%c1_34, %c0_35] : memref<4x256xf32, #tpu.memory_space<vmem>>, vector<1x32xf32>
    tpu.vector_store %arg30[%c1_34, %c0_35], %37 {strides = array<i32>} : memref<4x256xf32, #tpu.memory_space<vmem>>, vector<1x32xf32>,
    %c1_36 = arith.constant 1 : index
    %c32_37 = arith.constant 32 : index
    %39 = vector.load %arg29[%c1_36, %c32_37] : memref<8x128xf32, #tpu.memory_space<vmem>>, vector<1x32xf32>
    %c1_38 = arith.constant 1 : index
    %c32_39 = arith.constant 32 : index
    %40 = vector.load %arg30[%c1_38, %c32_39] : memref<4x256xf32, #tpu.memory_space<vmem>>, vector<1x32xf32>
    tpu.vector_store %arg30[%c1_38, %c32_39], %39 {strides = array<i32>} : memref<4x256xf32, #tpu.memory_space<vmem>>, vector<1x32xf32>,
    %c2_40 = arith.constant 2 : index
    %c32_41 = arith.constant 32 : index
    %41 = vector.load %arg29[%c2_40, %c32_41] : memref<8x128xf32, #tpu.memory_space<vmem>>, vector<1x32xf32>
    %c1_42 = arith.constant 1 : index
    %c64_43 = arith.constant 64 : index
    %42 = vector.load %arg30[%c1_42, %c64_43] : memref<4x256xf32, #tpu.memory_space<vmem>>, vector<1x32xf32>
    tpu.vector_store %arg30[%c1_42, %c64_43], %41 {strides = array<i32>} : memref<4x256xf32, #tpu.memory_space<vmem>>, vector<1x32xf32>,
    %c3_44 = arith.constant 3 : index
    %c32_45 = arith.constant 32 : index
    %43 = vector.load %arg29[%c3_44, %c32_45] : memref<8x128xf32, #tpu.memory_space<vmem>>, vector<1x32xf32>
    %c1_46 = arith.constant 1 : index
    %c96_47 = arith.constant 96 : index
    %44 = vector.load %arg30[%c1_46, %c96_47] : memref<4x256xf32, #tpu.memory_space<vmem>>, vector<1x32xf32>
    tpu.vector_store %arg30[%c1_46, %c96_47], %43 {strides = array<i32>} : memref<4x256xf32, #tpu.memory_space<vmem>>, vector<1x32xf32>,
    %c4_48 = arith.constant 4 : index
    %c32_49 = arith.constant 32 : index
    %45 = vector.load %arg29[%c4_48, %c32_49] : memref<8x128xf32, #tpu.memory_space<vmem>>, vector<1x32xf32>
    %c1_50 = arith.constant 1 : index
    %c128_51 = arith.constant 128 : index
    %46 = vector.load %arg30[%c1_50, %c128_51] : memref<4x256xf32, #tpu.memory_space<vmem>>, vector<1x32xf32>
    tpu.vector_store %arg30[%c1_50, %c128_51], %45 {strides = array<i32>} : memref<4x256xf32, #tpu.memory_space<vmem>>, vector<1x32xf32>,
    %c5_52 = arith.constant 5 : index
    %c32_53 = arith.constant 32 : index
    %47 = vector.load %arg29[%c5_52, %c32_53] : memref<8x128xf32, #tpu.memory_space<vmem>>, vector<1x32xf32>
    %c1_54 = arith.constant 1 : index
    %c160_55 = arith.constant 160 : index
    %48 = vector.load %arg30[%c1_54, %c160_55] : memref<4x256xf32, #tpu.memory_space<vmem>>, vector<1x32xf32>
    tpu.vector_store %arg30[%c1_54, %c160_55], %47 {strides = array<i32>} : memref<4x256xf32, #tpu.memory_space<vmem>>, vector<1x32xf32>,
    %c6_56 = arith.constant 6 : index
    %c32_57 = arith.constant 32 : index
    %49 = vector.load %arg29[%c6_56, %c32_57] : memref<8x128xf32, #tpu.memory_space<vmem>>, vector<1x32xf32>
    %c1_58 = arith.constant 1 : index
    %c192_59 = arith.constant 192 : index
    %50 = vector.load %arg30[%c1_58, %c192_59] : memref<4x256xf32, #tpu.memory_space<vmem>>, vector<1x32xf32>
    tpu.vector_store %arg30[%c1_58, %c192_59], %49 {strides = array<i32>} : memref<4x256xf32, #tpu.memory_space<vmem>>, vector<1x32xf32>,
    %c7_60 = arith.constant 7 : index
    %c32_61 = arith.constant 32 : index
    %51 = vector.load %arg29[%c7_60, %c32_61] : memref<8x128xf32, #tpu.memory_space<vmem>>, vector<1x32xf32>
    %c1_62 = arith.constant 1 : index
    %c224_63 = arith.constant 224 : index
    %52 = vector.load %arg30[%c1_62, %c224_63] : memref<4x256xf32, #tpu.memory_space<vmem>>, vector<1x32xf32>
    tpu.vector_store %arg30[%c1_62, %c224_63], %51 {strides = array<i32>} : memref<4x256xf32, #tpu.memory_space<vmem>>, vector<1x32xf32>,
    %c0_64 = arith.constant 0 : index
    %c64_65 = arith.constant 64 : index
    %53 = vector.load %arg29[%c0_64, %c64_65] : memref<8x128xf32, #tpu.memory_space<vmem>>, vector<1x32xf32>
    %c2_66 = arith.constant 2 : index
    %c0_67 = arith.constant 0 : index
    %54 = vector.load %arg30[%c2_66, %c0_67] : memref<4x256xf32, #tpu.memory_space<vmem>>, vector<1x32xf32>
    tpu.vector_store %arg30[%c2_66, %c0_67], %53 {strides = array<i32>} : memref<4x256xf32, #tpu.memory_space<vmem>>, vector<1x32xf32>,
    %c1_68 = arith.constant 1 : index
    %c64_69 = arith.constant 64 : index
    %55 = vector.load %arg29[%c1_68, %c64_69] : memref<8x128xf32, #tpu.memory_space<vmem>>, vector<1x32xf32>
    %c2_70 = arith.constant 2 : index
    %c32_71 = arith.constant 32 : index
    %56 = vector.load %arg30[%c2_70, %c32_71] : memref<4x256xf32, #tpu.memory_space<vmem>>, vector<1x32xf32>
    tpu.vector_store %arg30[%c2_70, %c32_71], %55 {strides = array<i32>} : memref<4x256xf32, #tpu.memory_space<vmem>>, vector<1x32xf32>,
    %c2_72 = arith.constant 2 : index
    %c64_73 = arith.constant 64 : index
    %57 = vector.load %arg29[%c2_72, %c64_73] : memref<8x128xf32, #tpu.memory_space<vmem>>, vector<1x32xf32>
    %c2_74 = arith.constant 2 : index
    %c64_75 = arith.constant 64 : index
    %58 = vector.load %arg30[%c2_74, %c64_75] : memref<4x256xf32, #tpu.memory_space<vmem>>, vector<1x32xf32>
    tpu.vector_store %arg30[%c2_74, %c64_75], %57 {strides = array<i32>} : memref<4x256xf32, #tpu.memory_space<vmem>>, vector<1x32xf32>,
    %c3_76 = arith.constant 3 : index
    %c64_77 = arith.constant 64 : index
    %59 = vector.load %arg29[%c3_76, %c64_77] : memref<8x128xf32, #tpu.memory_space<vmem>>, vector<1x32xf32>
    %c2_78 = arith.constant 2 : index
    %c96_79 = arith.constant 96 : index
    %60 = vector.load %arg30[%c2_78, %c96_79] : memref<4x256xf32, #tpu.memory_space<vmem>>, vector<1x32xf32>
    tpu.vector_store %arg30[%c2_78, %c96_79], %59 {strides = array<i32>} : memref<4x256xf32, #tpu.memory_space<vmem>>, vector<1x32xf32>,
    %c4_80 = arith.constant 4 : index
    %c64_81 = arith.constant 64 : index
    %61 = vector.load %arg29[%c4_80, %c64_81] : memref<8x128xf32, #tpu.memory_space<vmem>>, vector<1x32xf32>
    %c2_82 = arith.constant 2 : index
    %c128_83 = arith.constant 128 : index
    %62 = vector.load %arg30[%c2_82, %c128_83] : memref<4x256xf32, #tpu.memory_space<vmem>>, vector<1x32xf32>
    tpu.vector_store %arg30[%c2_82, %c128_83], %61 {strides = array<i32>} : memref<4x256xf32, #tpu.memory_space<vmem>>, vector<1x32xf32>,
    %c5_84 = arith.constant 5 : index
    %c64_85 = arith.constant 64 : index
    %63 = vector.load %arg29[%c5_84, %c64_85] : memref<8x128xf32, #tpu.memory_space<vmem>>, vector<1x32xf32>
    %c2_86 = arith.constant 2 : index
    %c160_87 = arith.constant 160 : index
    %64 = vector.load %arg30[%c2_86, %c160_87] : memref<4x256xf32, #tpu.memory_space<vmem>>, vector<1x32xf32>
    tpu.vector_store %arg30[%c2_86, %c160_87], %63 {strides = array<i32>} : memref<4x256xf32, #tpu.memory_space<vmem>>, vector<1x32xf32>,
    %c6_88 = arith.constant 6 : index
    %c64_89 = arith.constant 64 : index
    %65 = vector.load %arg29[%c6_88, %c64_89] : memref<8x128xf32, #tpu.memory_space<vmem>>, vector<1x32xf32>
    %c2_90 = arith.constant 2 : index
    %c192_91 = arith.constant 192 : index
    %66 = vector.load %arg30[%c2_90, %c192_91] : memref<4x256xf32, #tpu.memory_space<vmem>>, vector<1x32xf32>
    tpu.vector_store %arg30[%c2_90, %c192_91], %65 {strides = array<i32>} : memref<4x256xf32, #tpu.memory_space<vmem>>, vector<1x32xf32>,
    %c7_92 = arith.constant 7 : index
    %c64_93 = arith.constant 64 : index
    %67 = vector.load %arg29[%c7_92, %c64_93] : memref<8x128xf32, #tpu.memory_space<vmem>>, vector<1x32xf32>
    %c2_94 = arith.constant 2 : index
    %c224_95 = arith.constant 224 : index
    %68 = vector.load %arg30[%c2_94, %c224_95] : memref<4x256xf32, #tpu.memory_space<vmem>>, vector<1x32xf32>
    tpu.vector_store %arg30[%c2_94, %c224_95], %67 {strides = array<i32>} : memref<4x256xf32, #tpu.memory_space<vmem>>, vector<1x32xf32>,
    %c0_96 = arith.constant 0 : index
    %c96_97 = arith.constant 96 : index
    %69 = vector.load %arg29[%c0_96, %c96_97] : memref<8x128xf32, #tpu.memory_space<vmem>>, vector<1x32xf32>
    %c3_98 = arith.constant 3 : index
    %c0_99 = arith.constant 0 : index
    %70 = vector.load %arg30[%c3_98, %c0_99] : memref<4x256xf32, #tpu.memory_space<vmem>>, vector<1x32xf32>
    tpu.vector_store %arg30[%c3_98, %c0_99], %69 {strides = array<i32>} : memref<4x256xf32, #tpu.memory_space<vmem>>, vector<1x32xf32>,
    %c1_100 = arith.constant 1 : index
    %c96_101 = arith.constant 96 : index
    %71 = vector.load %arg29[%c1_100, %c96_101] : memref<8x128xf32, #tpu.memory_space<vmem>>, vector<1x32xf32>
    %c3_102 = arith.constant 3 : index
    %c32_103 = arith.constant 32 : index
    %72 = vector.load %arg30[%c3_102, %c32_103] : memref<4x256xf32, #tpu.memory_space<vmem>>, vector<1x32xf32>
    tpu.vector_store %arg30[%c3_102, %c32_103], %71 {strides = array<i32>} : memref<4x256xf32, #tpu.memory_space<vmem>>, vector<1x32xf32>,
    %c2_104 = arith.constant 2 : index
    %c96_105 = arith.constant 96 : index
    %73 = vector.load %arg29[%c2_104, %c96_105] : memref<8x128xf32, #tpu.memory_space<vmem>>, vector<1x32xf32>
    %c3_106 = arith.constant 3 : index
    %c64_107 = arith.constant 64 : index
    %74 = vector.load %arg30[%c3_106, %c64_107] : memref<4x256xf32, #tpu.memory_space<vmem>>, vector<1x32xf32>
    tpu.vector_store %arg30[%c3_106, %c64_107], %73 {strides = array<i32>} : memref<4x256xf32, #tpu.memory_space<vmem>>, vector<1x32xf32>,
    %c3_108 = arith.constant 3 : index
    %c96_109 = arith.constant 96 : index
    %75 = vector.load %arg29[%c3_108, %c96_109] : memref<8x128xf32, #tpu.memory_space<vmem>>, vector<1x32xf32>
    %c3_110 = arith.constant 3 : index
    %c96_111 = arith.constant 96 : index
    %76 = vector.load %arg30[%c3_110, %c96_111] : memref<4x256xf32, #tpu.memory_space<vmem>>, vector<1x32xf32>
    tpu.vector_store %arg30[%c3_110, %c96_111], %75 {strides = array<i32>} : memref<4x256xf32, #tpu.memory_space<vmem>>, vector<1x32xf32>,
    %c4_112 = arith.constant 4 : index
    %c96_113 = arith.constant 96 : index
    %77 = vector.load %arg29[%c4_112, %c96_113] : memref<8x128xf32, #tpu.memory_space<vmem>>, vector<1x32xf32>
    %c3_114 = arith.constant 3 : index
    %c128_115 = arith.constant 128 : index
    %78 = vector.load %arg30[%c3_114, %c128_115] : memref<4x256xf32, #tpu.memory_space<vmem>>, vector<1x32xf32>
    tpu.vector_store %arg30[%c3_114, %c128_115], %77 {strides = array<i32>} : memref<4x256xf32, #tpu.memory_space<vmem>>, vector<1x32xf32>,
    %c5_116 = arith.constant 5 : index
    %c96_117 = arith.constant 96 : index
    %79 = vector.load %arg29[%c5_116, %c96_117] : memref<8x128xf32, #tpu.memory_space<vmem>>, vector<1x32xf32>
    %c3_118 = arith.constant 3 : index
    %c160_119 = arith.constant 160 : index
    %80 = vector.load %arg30[%c3_118, %c160_119] : memref<4x256xf32, #tpu.memory_space<vmem>>, vector<1x32xf32>
    tpu.vector_store %arg30[%c3_118, %c160_119], %79 {strides = array<i32>} : memref<4x256xf32, #tpu.memory_space<vmem>>, vector<1x32xf32>,
    %c6_120 = arith.constant 6 : index
    %c96_121 = arith.constant 96 : index
    %81 = vector.load %arg29[%c6_120, %c96_121] : memref<8x128xf32, #tpu.memory_space<vmem>>, vector<1x32xf32>
    %c3_122 = arith.constant 3 : index
    %c192_123 = arith.constant 192 : index
    %82 = vector.load %arg30[%c3_122, %c192_123] : memref<4x256xf32, #tpu.memory_space<vmem>>, vector<1x32xf32>
    tpu.vector_store %arg30[%c3_122, %c192_123], %81 {strides = array<i32>} : memref<4x256xf32, #tpu.memory_space<vmem>>, vector<1x32xf32>,
    %c7_124 = arith.constant 7 : index
    %c96_125 = arith.constant 96 : index
    %83 = vector.load %arg29[%c7_124, %c96_125] : memref<8x128xf32, #tpu.memory_space<vmem>>, vector<1x32xf32>
    %c3_126 = arith.constant 3 : index
    %c224_127 = arith.constant 224 : index
    %84 = vector.load %arg30[%c3_126, %c224_127] : memref<4x256xf32, #tpu.memory_space<vmem>>, vector<1x32xf32>
    tpu.vector_store %arg30[%c3_126, %c224_127], %83 {strides = array<i32>} : memref<4x256xf32, #tpu.memory_space<vmem>>, vector<1x32xf32>,
    %c0_128 = arith.constant 0 : index
    %c0_129 = arith.constant 0 : index
    %85 = vector.load %arg9[%c0_128, %c0_129] : memref<4x256xf32, #tpu.memory_space<vmem>>, vector<1x256xf32>
    %c1_130 = arith.constant 1 : index
    %c0_131 = arith.constant 0 : index
    %86 = vector.load %arg9[%c1_130, %c0_131] : memref<4x256xf32, #tpu.memory_space<vmem>>, vector<1x256xf32>
    %c2_132 = arith.constant 2 : index
    %c0_133 = arith.constant 0 : index
    %87 = vector.load %arg9[%c2_132, %c0_133] : memref<4x256xf32, #tpu.memory_space<vmem>>, vector<1x256xf32>
    %c3_134 = arith.constant 3 : index
    %c0_135 = arith.constant 0 : index
    %88 = vector.load %arg9[%c3_134, %c0_135] : memref<4x256xf32, #tpu.memory_space<vmem>>, vector<1x256xf32>
    %c0_136 = arith.constant 0 : index
    %c0_137 = arith.constant 0 : index
    %89 = vector.load %arg15[%c0_136, %c0_137] : memref<2x128xf32, #tpu.memory_space<vmem>>, vector<1x128xf32>
    %c1_138 = arith.constant 1 : index
    %c0_139 = arith.constant 0 : index
    %90 = vector.load %arg15[%c1_138, %c0_139] : memref<2x128xf32, #tpu.memory_space<vmem>>, vector<1x128xf32>
    %c0_140 = arith.constant 0 : index
    %c0_141 = arith.constant 0 : index
    %91 = vector.load %arg30[%c0_140, %c0_141] : memref<4x256xf32, #tpu.memory_space<vmem>>, vector<4x256xf32>
    %c0_142 = arith.constant 0 : index
    %c0_143 = arith.constant 0 : index
    %92 = vector.load %arg6[%c0_142, %c0_143] : memref<4x1xf32, #tpu.memory_space<vmem>>, vector<4x1xf32>
    %93 = vector.broadcast %92 : vector<4x1xf32> to vector<4x256xf32>
    %94 = arith.mulf %91, %93 : vector<4x256xf32>
    %c0_144 = arith.constant 0 : index
    %c0_145 = arith.constant 0 : index
    %95 = vector.load %arg7[%c0_144, %c0_145] : memref<4x1xf32, #tpu.memory_space<vmem>>, vector<4x1xf32>
    %96 = vector.broadcast %95 : vector<4x1xf32> to vector<4x256xf32>
    %97 = arith.addf %94, %96 : vector<4x256xf32>
    %c2_146 = arith.constant 2 : index
    %c0_147 = arith.constant 0 : index
    %c0_148 = arith.constant 0 : index
    %98 = vector.load %arg8[%c2_146, %c0_147, %c0_148] : memref<5x16x4xf32, #tpu.memory_space<vmem>>, vector<1x16x4xf32>
    %99 = vector.shape_cast %98 : vector<1x16x4xf32> to vector<16x4xf32>
    %cst_149 = arith.constant dense<0.000000e+00> : vector<16x256xf32>
    %100 = tpu.matmul %99, %97, %cst_149 {dimension_numbers = #tpu.dot_dimension_numbers<[1], [0], [0], [1], [0, 0, 1, 1], [], []>} : vector<16x4xf32>, vector<4x256xf32>, vector<16x256xf32> -> vector<16x256xf32>
    %c0_150 = arith.constant 0 : index
    %c0_151 = arith.constant 0 : index
    %c0_152 = arith.constant 0 : index
    %101 = vector.load %arg8[%c0_150, %c0_151, %c0_152] : memref<5x16x4xf32, #tpu.memory_space<vmem>>, vector<1x16x4xf32>
    %102 = vector.shape_cast %101 : vector<1x16x4xf32> to vector<16x4xf32>
    %c2_i32 = arith.constant 2 : i32
    %103 = tpu.dynamic_rotate %97 by %c2_i32 dim 1 : vector<4x256xf32>, i32 -> vector<4x256xf32>
    %104 = vector.broadcast %85 : vector<1x256xf32> to vector<4x256xf32>
    %105 = arith.mulf %103, %104 : vector<4x256xf32>
    %cst_153 = arith.constant dense<0.000000e+00> : vector<16x256xf32>
    %106 = tpu.matmul %102, %105, %cst_153 {dimension_numbers = #tpu.dot_dimension_numbers<[1], [0], [0], [1], [0, 0, 1, 1], [], []>} : vector<16x4xf32>, vector<4x256xf32>, vector<16x256xf32> -> vector<16x256xf32>
    %107 = arith.addf %100, %106 : vector<16x256xf32>
    %c1_154 = arith.constant 1 : index
    %c0_155 = arith.constant 0 : index
    %c0_156 = arith.constant 0 : index
    %108 = vector.load %arg8[%c1_154, %c0_155, %c0_156] : memref<5x16x4xf32, #tpu.memory_space<vmem>>, vector<1x16x4xf32>
    %109 = vector.shape_cast %108 : vector<1x16x4xf32> to vector<16x4xf32>
    %c1_i32 = arith.constant 1 : i32
    %110 = tpu.dynamic_rotate %97 by %c1_i32 dim 1 : vector<4x256xf32>, i32 -> vector<4x256xf32>
    %111 = vector.broadcast %86 : vector<1x256xf32> to vector<4x256xf32>
    %112 = arith.mulf %110, %111 : vector<4x256xf32>
    %cst_157 = arith.constant dense<0.000000e+00> : vector<16x256xf32>
    %113 = tpu.matmul %109, %112, %cst_157 {dimension_numbers = #tpu.dot_dimension_numbers<[1], [0], [0], [1], [0, 0, 1, 1], [], []>} : vector<16x4xf32>, vector<4x256xf32>, vector<16x256xf32> -> vector<16x256xf32>
    %114 = arith.addf %107, %113 : vector<16x256xf32>
    %c3_158 = arith.constant 3 : index
    %c0_159 = arith.constant 0 : index
    %c0_160 = arith.constant 0 : index
    %115 = vector.load %arg8[%c3_158, %c0_159, %c0_160] : memref<5x16x4xf32, #tpu.memory_space<vmem>>, vector<1x16x4xf32>
    %116 = vector.shape_cast %115 : vector<1x16x4xf32> to vector<16x4xf32>
    %c255_i32 = arith.constant 255 : i32
    %117 = tpu.dynamic_rotate %97 by %c255_i32 dim 1 : vector<4x256xf32>, i32 -> vector<4x256xf32>
    %118 = vector.broadcast %87 : vector<1x256xf32> to vector<4x256xf32>
    %119 = arith.mulf %117, %118 : vector<4x256xf32>
    %cst_161 = arith.constant dense<0.000000e+00> : vector<16x256xf32>
    %120 = tpu.matmul %116, %119, %cst_161 {dimension_numbers = #tpu.dot_dimension_numbers<[1], [0], [0], [1], [0, 0, 1, 1], [], []>} : vector<16x4xf32>, vector<4x256xf32>, vector<16x256xf32> -> vector<16x256xf32>
    %121 = arith.addf %114, %120 : vector<16x256xf32>
    %c4_162 = arith.constant 4 : index
    %c0_163 = arith.constant 0 : index
    %c0_164 = arith.constant 0 : index
    %122 = vector.load %arg8[%c4_162, %c0_163, %c0_164] : memref<5x16x4xf32, #tpu.memory_space<vmem>>, vector<1x16x4xf32>
    %123 = vector.shape_cast %122 : vector<1x16x4xf32> to vector<16x4xf32>
    %c254_i32 = arith.constant 254 : i32
    %124 = tpu.dynamic_rotate %97 by %c254_i32 dim 1 : vector<4x256xf32>, i32 -> vector<4x256xf32>
    %125 = vector.broadcast %88 : vector<1x256xf32> to vector<4x256xf32>
    %126 = arith.mulf %124, %125 : vector<4x256xf32>
    %cst_165 = arith.constant dense<0.000000e+00> : vector<16x256xf32>
    %127 = tpu.matmul %123, %126, %cst_165 {dimension_numbers = #tpu.dot_dimension_numbers<[1], [0], [0], [1], [0, 0, 1, 1], [], []>} : vector<16x4xf32>, vector<4x256xf32>, vector<16x256xf32> -> vector<16x256xf32>
    %128 = arith.addf %121, %127 : vector<16x256xf32>
    %cst_166 = arith.constant 0.000000e+00 : f32
    %129 = vector.broadcast %cst_166 : f32 to vector<16x256xf32>
    %130 = arith.maximumf %128, %129 : vector<16x256xf32>
    %c0_167 = arith.constant 0 : index
    %c0_168 = arith.constant 0 : index
    %131 = vector.load %arg10[%c0_167, %c0_168] : memref<256x128xf32, #tpu.memory_space<vmem>>, vector<256x128xf32>
    %cst_169 = arith.constant dense<0.000000e+00> : vector<16x128xf32>
    %132 = tpu.matmul %130, %131, %cst_169 {dimension_numbers = #tpu.dot_dimension_numbers<[1], [0], [0], [1], [0, 0, 1, 1], [], []>} : vector<16x256xf32>, vector<256x128xf32>, vector<16x128xf32> -> vector<16x128xf32>
    %c0_170 = arith.constant 0 : index
    %c0_171 = arith.constant 0 : index
    %133 = vector.load %arg11[%c0_170, %c0_171] : memref<16x1xf32, #tpu.memory_space<vmem>>, vector<16x1xf32>
    %134 = vector.broadcast %133 : vector<16x1xf32> to vector<16x128xf32>
    %135 = arith.mulf %132, %134 : vector<16x128xf32>
    %c0_172 = arith.constant 0 : index
    %c0_173 = arith.constant 0 : index
    %136 = vector.load %arg12[%c0_172, %c0_173] : memref<16x1xf32, #tpu.memory_space<vmem>>, vector<16x1xf32>
    %137 = vector.broadcast %136 : vector<16x1xf32> to vector<16x128xf32>
    %138 = arith.addf %135, %137 : vector<16x128xf32>
    %c0_174 = arith.constant 0 : index
    %c0_175 = arith.constant 0 : index
    %139 = vector.load %arg13[%c0_174, %c0_175] : memref<16x48xf32, #tpu.memory_space<vmem>>, vector<16x48xf32>
    %c0_176 = arith.constant 0 : index
    %c0_177 = arith.constant 0 : index
    %140 = vector.load %arg14[%c0_176, %c0_177] : memref<16x1xf32, #tpu.memory_space<vmem>>, vector<16x1xf32>
    %c1_i32_178 = arith.constant 1 : i32
    %141 = tpu.dynamic_rotate %138 by %c1_i32_178 dim 1 : vector<16x128xf32>, i32 -> vector<16x128xf32>
    %142 = vector.broadcast %89 : vector<1x128xf32> to vector<16x128xf32>
    %143 = arith.mulf %141, %142 : vector<16x128xf32>
    %c127_i32 = arith.constant 127 : i32
    %144 = tpu.dynamic_rotate %138 by %c127_i32 dim 1 : vector<16x128xf32>, i32 -> vector<16x128xf32>
    %145 = vector.broadcast %90 : vector<1x128xf32> to vector<16x128xf32>
    %146 = arith.mulf %144, %145 : vector<16x128xf32>
    %147 = tpu.concatenate %143, %138, %146 in 0 : vector<16x128xf32>, vector<16x128xf32>, vector<16x128xf32> -> vector<48x128xf32>
    %cst_179 = arith.constant dense<0.000000e+00> : vector<16x128xf32>
    %148 = tpu.matmul %139, %147, %cst_179 {dimension_numbers = #tpu.dot_dimension_numbers<[1], [0], [0], [1], [0, 0, 1, 1], [], []>} : vector<16x48xf32>, vector<48x128xf32>, vector<16x128xf32> -> vector<16x128xf32>
    %149 = vector.broadcast %140 : vector<16x1xf32> to vector<16x128xf32>
    %150 = arith.addf %148, %149 : vector<16x128xf32>
    %cst_180 = arith.constant 0.000000e+00 : f32
    %151 = vector.broadcast %cst_180 : f32 to vector<16x128xf32>
    %152 = arith.maximumf %150, %151 : vector<16x128xf32>
    %153 = arith.addf %152, %132 : vector<16x128xf32>
    %c0_181 = arith.constant 0 : index
    %c0_182 = arith.constant 0 : index
    %154 = vector.load %arg16[%c0_181, %c0_182] : memref<16x1xf32, #tpu.memory_space<vmem>>, vector<16x1xf32>
    %155 = vector.broadcast %154 : vector<16x1xf32> to vector<16x128xf32>
    %156 = arith.mulf %153, %155 : vector<16x128xf32>
    %c0_183 = arith.constant 0 : index
    %c0_184 = arith.constant 0 : index
    %157 = vector.load %arg17[%c0_183, %c0_184] : memref<16x1xf32, #tpu.memory_space<vmem>>, vector<16x1xf32>
    %158 = vector.broadcast %157 : vector<16x1xf32> to vector<16x128xf32>
    %159 = arith.addf %156, %158 : vector<16x128xf32>
    %c0_185 = arith.constant 0 : index
    %c0_186 = arith.constant 0 : index
    %160 = vector.load %arg18[%c0_185, %c0_186] : memref<8x48xf32, #tpu.memory_space<vmem>>, vector<8x48xf32>
    %c0_187 = arith.constant 0 : index
    %c0_188 = arith.constant 0 : index
    %161 = vector.load %arg19[%c0_187, %c0_188] : memref<8x1xf32, #tpu.memory_space<vmem>>, vector<8x1xf32>
    %c1_i32_189 = arith.constant 1 : i32
    %162 = tpu.dynamic_rotate %159 by %c1_i32_189 dim 1 : vector<16x128xf32>, i32 -> vector<16x128xf32>
    %163 = vector.broadcast %89 : vector<1x128xf32> to vector<16x128xf32>
    %164 = arith.mulf %162, %163 : vector<16x128xf32>
    %c127_i32_190 = arith.constant 127 : i32
    %165 = tpu.dynamic_rotate %159 by %c127_i32_190 dim 1 : vector<16x128xf32>, i32 -> vector<16x128xf32>
    %166 = vector.broadcast %90 : vector<1x128xf32> to vector<16x128xf32>
    %167 = arith.mulf %165, %166 : vector<16x128xf32>
    %168 = tpu.concatenate %164, %159, %167 in 0 : vector<16x128xf32>, vector<16x128xf32>, vector<16x128xf32> -> vector<48x128xf32>
    %cst_191 = arith.constant dense<0.000000e+00> : vector<8x128xf32>
    %169 = tpu.matmul %160, %168, %cst_191 {dimension_numbers = #tpu.dot_dimension_numbers<[1], [0], [0], [1], [0, 0, 1, 1], [], []>} : vector<8x48xf32>, vector<48x128xf32>, vector<8x128xf32> -> vector<8x128xf32>
    %170 = vector.broadcast %161 : vector<8x1xf32> to vector<8x128xf32>
    %171 = arith.addf %169, %170 : vector<8x128xf32>
    %cst_192 = arith.constant 0.000000e+00 : f32
    %172 = vector.broadcast %cst_192 : f32 to vector<8x128xf32>
    %173 = arith.maximumf %171, %172 : vector<8x128xf32>
    %c0_193 = arith.constant 0 : index
    %c0_194 = arith.constant 0 : index
    %c0_195 = arith.constant 0 : index
    %174 = vector.load %arg20[%c0_193, %c0_194, %c0_195] : memref<6x8x1xf32, #tpu.memory_space<vmem>>, vector<1x8x1xf32>
    %175 = vector.shape_cast %174 : vector<1x8x1xf32> to vector<8x1xf32>
    %176 = vector.broadcast %175 : vector<8x1xf32> to vector<8x128xf32>
    %177 = arith.mulf %173, %176 : vector<8x128xf32>
    %c0_196 = arith.constant 0 : index
    %c0_197 = arith.constant 0 : index
    %c0_198 = arith.constant 0 : index
    %178 = vector.load %arg21[%c0_196, %c0_197, %c0_198] : memref<6x8x1xf32, #tpu.memory_space<vmem>>, vector<1x8x1xf32>
    %179 = vector.shape_cast %178 : vector<1x8x1xf32> to vector<8x1xf32>
    %180 = vector.broadcast %179 : vector<8x1xf32> to vector<8x128xf32>
    %181 = arith.addf %177, %180 : vector<8x128xf32>
    %c0_199 = arith.constant 0 : index
    %c0_200 = arith.constant 0 : index
    %c0_201 = arith.constant 0 : index
    %182 = vector.load %arg22[%c0_199, %c0_200, %c0_201] : memref<6x8x24xf32, #tpu.memory_space<vmem>>, vector<1x8x24xf32>
    %183 = vector.shape_cast %182 : vector<1x8x24xf32> to vector<8x24xf32>
    %c0_202 = arith.constant 0 : index
    %c0_203 = arith.constant 0 : index
    %c0_204 = arith.constant 0 : index
    %184 = vector.load %arg23[%c0_202, %c0_203, %c0_204] : memref<6x8x1xf32, #tpu.memory_space<vmem>>, vector<1x8x1xf32>
    %185 = vector.shape_cast %184 : vector<1x8x1xf32> to vector<8x1xf32>
    %c1_i32_205 = arith.constant 1 : i32
    %186 = tpu.dynamic_rotate %181 by %c1_i32_205 dim 1 : vector<8x128xf32>, i32 -> vector<8x128xf32>
    %187 = vector.broadcast %89 : vector<1x128xf32> to vector<8x128xf32>
    %188 = arith.mulf %186, %187 : vector<8x128xf32>
    %c127_i32_206 = arith.constant 127 : i32
    %189 = tpu.dynamic_rotate %181 by %c127_i32_206 dim 1 : vector<8x128xf32>, i32 -> vector<8x128xf32>
    %190 = vector.broadcast %90 : vector<1x128xf32> to vector<8x128xf32>
    %191 = arith.mulf %189, %190 : vector<8x128xf32>
    %192 = tpu.concatenate %188, %181, %191 in 0 : vector<8x128xf32>, vector<8x128xf32>, vector<8x128xf32> -> vector<24x128xf32>
    %cst_207 = arith.constant dense<0.000000e+00> : vector<8x128xf32>
    %193 = tpu.matmul %183, %192, %cst_207 {dimension_numbers = #tpu.dot_dimension_numbers<[1], [0], [0], [1], [0, 0, 1, 1], [], []>} : vector<8x24xf32>, vector<24x128xf32>, vector<8x128xf32> -> vector<8x128xf32>
    %194 = vector.broadcast %185 : vector<8x1xf32> to vector<8x128xf32>
    %195 = arith.addf %193, %194 : vector<8x128xf32>
    %cst_208 = arith.constant 0.000000e+00 : f32
    %196 = vector.broadcast %cst_208 : f32 to vector<8x128xf32>
    %197 = arith.maximumf %195, %196 : vector<8x128xf32>
    %198 = arith.addf %197, %173 : vector<8x128xf32>
    %c1_209 = arith.constant 1 : index
    %c0_210 = arith.constant 0 : index
    %c0_211 = arith.constant 0 : index
    %199 = vector.load %arg20[%c1_209, %c0_210, %c0_211] : memref<6x8x1xf32, #tpu.memory_space<vmem>>, vector<1x8x1xf32>
    %200 = vector.shape_cast %199 : vector<1x8x1xf32> to vector<8x1xf32>
    %201 = vector.broadcast %200 : vector<8x1xf32> to vector<8x128xf32>
    %202 = arith.mulf %198, %201 : vector<8x128xf32>
    %c1_212 = arith.constant 1 : index
    %c0_213 = arith.constant 0 : index
    %c0_214 = arith.constant 0 : index
    %203 = vector.load %arg21[%c1_212, %c0_213, %c0_214] : memref<6x8x1xf32, #tpu.memory_space<vmem>>, vector<1x8x1xf32>
    %204 = vector.shape_cast %203 : vector<1x8x1xf32> to vector<8x1xf32>
    %205 = vector.broadcast %204 : vector<8x1xf32> to vector<8x128xf32>
    %206 = arith.addf %202, %205 : vector<8x128xf32>
    %c1_215 = arith.constant 1 : index
    %c0_216 = arith.constant 0 : index
    %c0_217 = arith.constant 0 : index
    %207 = vector.load %arg22[%c1_215, %c0_216, %c0_217] : memref<6x8x24xf32, #tpu.memory_space<vmem>>, vector<1x8x24xf32>
    %208 = vector.shape_cast %207 : vector<1x8x24xf32> to vector<8x24xf32>
    %c1_218 = arith.constant 1 : index
    %c0_219 = arith.constant 0 : index
    %c0_220 = arith.constant 0 : index
    %209 = vector.load %arg23[%c1_218, %c0_219, %c0_220] : memref<6x8x1xf32, #tpu.memory_space<vmem>>, vector<1x8x1xf32>
    %210 = vector.shape_cast %209 : vector<1x8x1xf32> to vector<8x1xf32>
    %c1_i32_221 = arith.constant 1 : i32
    %211 = tpu.dynamic_rotate %206 by %c1_i32_221 dim 1 : vector<8x128xf32>, i32 -> vector<8x128xf32>
    %212 = vector.broadcast %89 : vector<1x128xf32> to vector<8x128xf32>
    %213 = arith.mulf %211, %212 : vector<8x128xf32>
    %c127_i32_222 = arith.constant 127 : i32
    %214 = tpu.dynamic_rotate %206 by %c127_i32_222 dim 1 : vector<8x128xf32>, i32 -> vector<8x128xf32>
    %215 = vector.broadcast %90 : vector<1x128xf32> to vector<8x128xf32>
    %216 = arith.mulf %214, %215 : vector<8x128xf32>
    %217 = tpu.concatenate %213, %206, %216 in 0 : vector<8x128xf32>, vector<8x128xf32>, vector<8x128xf32> -> vector<24x128xf32>
    %cst_223 = arith.constant dense<0.000000e+00> : vector<8x128xf32>
    %218 = tpu.matmul %208, %217, %cst_223 {dimension_numbers = #tpu.dot_dimension_numbers<[1], [0], [0], [1], [0, 0, 1, 1], [], []>} : vector<8x24xf32>, vector<24x128xf32>, vector<8x128xf32> -> vector<8x128xf32>
    %219 = vector.broadcast %210 : vector<8x1xf32> to vector<8x128xf32>
    %220 = arith.addf %218, %219 : vector<8x128xf32>
    %cst_224 = arith.constant 0.000000e+00 : f32
    %221 = vector.broadcast %cst_224 : f32 to vector<8x128xf32>
    %222 = arith.maximumf %220, %221 : vector<8x128xf32>
    %223 = arith.addf %222, %198 : vector<8x128xf32>
    %c2_225 = arith.constant 2 : index
    %c0_226 = arith.constant 0 : index
    %c0_227 = arith.constant 0 : index
    %224 = vector.load %arg20[%c2_225, %c0_226, %c0_227] : memref<6x8x1xf32, #tpu.memory_space<vmem>>, vector<1x8x1xf32>
    %225 = vector.shape_cast %224 : vector<1x8x1xf32> to vector<8x1xf32>
    %226 = vector.broadcast %225 : vector<8x1xf32> to vector<8x128xf32>
    %227 = arith.mulf %223, %226 : vector<8x128xf32>
    %c2_228 = arith.constant 2 : index
    %c0_229 = arith.constant 0 : index
    %c0_230 = arith.constant 0 : index
    %228 = vector.load %arg21[%c2_228, %c0_229, %c0_230] : memref<6x8x1xf32, #tpu.memory_space<vmem>>, vector<1x8x1xf32>
    %229 = vector.shape_cast %228 : vector<1x8x1xf32> to vector<8x1xf32>
    %230 = vector.broadcast %229 : vector<8x1xf32> to vector<8x128xf32>
    %231 = arith.addf %227, %230 : vector<8x128xf32>
    %c2_231 = arith.constant 2 : index
    %c0_232 = arith.constant 0 : index
    %c0_233 = arith.constant 0 : index
    %232 = vector.load %arg22[%c2_231, %c0_232, %c0_233] : memref<6x8x24xf32, #tpu.memory_space<vmem>>, vector<1x8x24xf32>
    %233 = vector.shape_cast %232 : vector<1x8x24xf32> to vector<8x24xf32>
    %c2_234 = arith.constant 2 : index
    %c0_235 = arith.constant 0 : index
    %c0_236 = arith.constant 0 : index
    %234 = vector.load %arg23[%c2_234, %c0_235, %c0_236] : memref<6x8x1xf32, #tpu.memory_space<vmem>>, vector<1x8x1xf32>
    %235 = vector.shape_cast %234 : vector<1x8x1xf32> to vector<8x1xf32>
    %c1_i32_237 = arith.constant 1 : i32
    %236 = tpu.dynamic_rotate %231 by %c1_i32_237 dim 1 : vector<8x128xf32>, i32 -> vector<8x128xf32>
    %237 = vector.broadcast %89 : vector<1x128xf32> to vector<8x128xf32>
    %238 = arith.mulf %236, %237 : vector<8x128xf32>
    %c127_i32_238 = arith.constant 127 : i32
    %239 = tpu.dynamic_rotate %231 by %c127_i32_238 dim 1 : vector<8x128xf32>, i32 -> vector<8x128xf32>
    %240 = vector.broadcast %90 : vector<1x128xf32> to vector<8x128xf32>
    %241 = arith.mulf %239, %240 : vector<8x128xf32>
    %242 = tpu.concatenate %238, %231, %241 in 0 : vector<8x128xf32>, vector<8x128xf32>, vector<8x128xf32> -> vector<24x128xf32>
    %cst_239 = arith.constant dense<0.000000e+00> : vector<8x128xf32>
    %243 = tpu.matmul %233, %242, %cst_239 {dimension_numbers = #tpu.dot_dimension_numbers<[1], [0], [0], [1], [0, 0, 1, 1], [], []>} : vector<8x24xf32>, vector<24x128xf32>, vector<8x128xf32> -> vector<8x128xf32>
    %244 = vector.broadcast %235 : vector<8x1xf32> to vector<8x128xf32>
    %245 = arith.addf %243, %244 : vector<8x128xf32>
    %cst_240 = arith.constant 0.000000e+00 : f32
    %246 = vector.broadcast %cst_240 : f32 to vector<8x128xf32>
    %247 = arith.maximumf %245, %246 : vector<8x128xf32>
    %248 = arith.addf %247, %223 : vector<8x128xf32>
    %c3_241 = arith.constant 3 : index
    %c0_242 = arith.constant 0 : index
    %c0_243 = arith.constant 0 : index
    %249 = vector.load %arg20[%c3_241, %c0_242, %c0_243] : memref<6x8x1xf32, #tpu.memory_space<vmem>>, vector<1x8x1xf32>
    %250 = vector.shape_cast %249 : vector<1x8x1xf32> to vector<8x1xf32>
    %251 = vector.broadcast %250 : vector<8x1xf32> to vector<8x128xf32>
    %252 = arith.mulf %248, %251 : vector<8x128xf32>
    %c3_244 = arith.constant 3 : index
    %c0_245 = arith.constant 0 : index
    %c0_246 = arith.constant 0 : index
    %253 = vector.load %arg21[%c3_244, %c0_245, %c0_246] : memref<6x8x1xf32, #tpu.memory_space<vmem>>, vector<1x8x1xf32>
    %254 = vector.shape_cast %253 : vector<1x8x1xf32> to vector<8x1xf32>
    %255 = vector.broadcast %254 : vector<8x1xf32> to vector<8x128xf32>
    %256 = arith.addf %252, %255 : vector<8x128xf32>
    %c3_247 = arith.constant 3 : index
    %c0_248 = arith.constant 0 : index
    %c0_249 = arith.constant 0 : index
    %257 = vector.load %arg22[%c3_247, %c0_248, %c0_249] : memref<6x8x24xf32, #tpu.memory_space<vmem>>, vector<1x8x24xf32>
    %258 = vector.shape_cast %257 : vector<1x8x24xf32> to vector<8x24xf32>
    %c3_250 = arith.constant 3 : index
    %c0_251 = arith.constant 0 : index
    %c0_252 = arith.constant 0 : index
    %259 = vector.load %arg23[%c3_250, %c0_251, %c0_252] : memref<6x8x1xf32, #tpu.memory_space<vmem>>, vector<1x8x1xf32>
    %260 = vector.shape_cast %259 : vector<1x8x1xf32> to vector<8x1xf32>
    %c1_i32_253 = arith.constant 1 : i32
    %261 = tpu.dynamic_rotate %256 by %c1_i32_253 dim 1 : vector<8x128xf32>, i32 -> vector<8x128xf32>
    %262 = vector.broadcast %89 : vector<1x128xf32> to vector<8x128xf32>
    %263 = arith.mulf %261, %262 : vector<8x128xf32>
    %c127_i32_254 = arith.constant 127 : i32
    %264 = tpu.dynamic_rotate %256 by %c127_i32_254 dim 1 : vector<8x128xf32>, i32 -> vector<8x128xf32>
    %265 = vector.broadcast %90 : vector<1x128xf32> to vector<8x128xf32>
    %266 = arith.mulf %264, %265 : vector<8x128xf32>
    %267 = tpu.concatenate %263, %256, %266 in 0 : vector<8x128xf32>, vector<8x128xf32>, vector<8x128xf32> -> vector<24x128xf32>
    %cst_255 = arith.constant dense<0.000000e+00> : vector<8x128xf32>
    %268 = tpu.matmul %258, %267, %cst_255 {dimension_numbers = #tpu.dot_dimension_numbers<[1], [0], [0], [1], [0, 0, 1, 1], [], []>} : vector<8x24xf32>, vector<24x128xf32>, vector<8x128xf32> -> vector<8x128xf32>
    %269 = vector.broadcast %260 : vector<8x1xf32> to vector<8x128xf32>
    %270 = arith.addf %268, %269 : vector<8x128xf32>
    %cst_256 = arith.constant 0.000000e+00 : f32
    %271 = vector.broadcast %cst_256 : f32 to vector<8x128xf32>
    %272 = arith.maximumf %270, %271 : vector<8x128xf32>
    %273 = arith.addf %272, %248 : vector<8x128xf32>
    %c4_257 = arith.constant 4 : index
    %c0_258 = arith.constant 0 : index
    %c0_259 = arith.constant 0 : index
    %274 = vector.load %arg20[%c4_257, %c0_258, %c0_259] : memref<6x8x1xf32, #tpu.memory_space<vmem>>, vector<1x8x1xf32>
    %275 = vector.shape_cast %274 : vector<1x8x1xf32> to vector<8x1xf32>
    %276 = vector.broadcast %275 : vector<8x1xf32> to vector<8x128xf32>
    %277 = arith.mulf %273, %276 : vector<8x128xf32>
    %c4_260 = arith.constant 4 : index
    %c0_261 = arith.constant 0 : index
    %c0_262 = arith.constant 0 : index
    %278 = vector.load %arg21[%c4_260, %c0_261, %c0_262] : memref<6x8x1xf32, #tpu.memory_space<vmem>>, vector<1x8x1xf32>
    %279 = vector.shape_cast %278 : vector<1x8x1xf32> to vector<8x1xf32>
    %280 = vector.broadcast %279 : vector<8x1xf32> to vector<8x128xf32>
    %281 = arith.addf %277, %280 : vector<8x128xf32>
    %c4_263 = arith.constant 4 : index
    %c0_264 = arith.constant 0 : index
    %c0_265 = arith.constant 0 : index
    %282 = vector.load %arg22[%c4_263, %c0_264, %c0_265] : memref<6x8x24xf32, #tpu.memory_space<vmem>>, vector<1x8x24xf32>
    %283 = vector.shape_cast %282 : vector<1x8x24xf32> to vector<8x24xf32>
    %c4_266 = arith.constant 4 : index
    %c0_267 = arith.constant 0 : index
    %c0_268 = arith.constant 0 : index
    %284 = vector.load %arg23[%c4_266, %c0_267, %c0_268] : memref<6x8x1xf32, #tpu.memory_space<vmem>>, vector<1x8x1xf32>
    %285 = vector.shape_cast %284 : vector<1x8x1xf32> to vector<8x1xf32>
    %c1_i32_269 = arith.constant 1 : i32
    %286 = tpu.dynamic_rotate %281 by %c1_i32_269 dim 1 : vector<8x128xf32>, i32 -> vector<8x128xf32>
    %287 = vector.broadcast %89 : vector<1x128xf32> to vector<8x128xf32>
    %288 = arith.mulf %286, %287 : vector<8x128xf32>
    %c127_i32_270 = arith.constant 127 : i32
    %289 = tpu.dynamic_rotate %281 by %c127_i32_270 dim 1 : vector<8x128xf32>, i32 -> vector<8x128xf32>
    %290 = vector.broadcast %90 : vector<1x128xf32> to vector<8x128xf32>
    %291 = arith.mulf %289, %290 : vector<8x128xf32>
    %292 = tpu.concatenate %288, %281, %291 in 0 : vector<8x128xf32>, vector<8x128xf32>, vector<8x128xf32> -> vector<24x128xf32>
    %cst_271 = arith.constant dense<0.000000e+00> : vector<8x128xf32>
    %293 = tpu.matmul %283, %292, %cst_271 {dimension_numbers = #tpu.dot_dimension_numbers<[1], [0], [0], [1], [0, 0, 1, 1], [], []>} : vector<8x24xf32>, vector<24x128xf32>, vector<8x128xf32> -> vector<8x128xf32>
    %294 = vector.broadcast %285 : vector<8x1xf32> to vector<8x128xf32>
    %295 = arith.addf %293, %294 : vector<8x128xf32>
    %cst_272 = arith.constant 0.000000e+00 : f32
    %296 = vector.broadcast %cst_272 : f32 to vector<8x128xf32>
    %297 = arith.maximumf %295, %296 : vector<8x128xf32>
    %298 = arith.addf %297, %273 : vector<8x128xf32>
    %c5_273 = arith.constant 5 : index
    %c0_274 = arith.constant 0 : index
    %c0_275 = arith.constant 0 : index
    %299 = vector.load %arg20[%c5_273, %c0_274, %c0_275] : memref<6x8x1xf32, #tpu.memory_space<vmem>>, vector<1x8x1xf32>
    %300 = vector.shape_cast %299 : vector<1x8x1xf32> to vector<8x1xf32>
    %301 = vector.broadcast %300 : vector<8x1xf32> to vector<8x128xf32>
    %302 = arith.mulf %298, %301 : vector<8x128xf32>
    %c5_276 = arith.constant 5 : index
    %c0_277 = arith.constant 0 : index
    %c0_278 = arith.constant 0 : index
    %303 = vector.load %arg21[%c5_276, %c0_277, %c0_278] : memref<6x8x1xf32, #tpu.memory_space<vmem>>, vector<1x8x1xf32>
    %304 = vector.shape_cast %303 : vector<1x8x1xf32> to vector<8x1xf32>
    %305 = vector.broadcast %304 : vector<8x1xf32> to vector<8x128xf32>
    %306 = arith.addf %302, %305 : vector<8x128xf32>
    %c5_279 = arith.constant 5 : index
    %c0_280 = arith.constant 0 : index
    %c0_281 = arith.constant 0 : index
    %307 = vector.load %arg22[%c5_279, %c0_280, %c0_281] : memref<6x8x24xf32, #tpu.memory_space<vmem>>, vector<1x8x24xf32>
    %308 = vector.shape_cast %307 : vector<1x8x24xf32> to vector<8x24xf32>
    %c5_282 = arith.constant 5 : index
    %c0_283 = arith.constant 0 : index
    %c0_284 = arith.constant 0 : index
    %309 = vector.load %arg23[%c5_282, %c0_283, %c0_284] : memref<6x8x1xf32, #tpu.memory_space<vmem>>, vector<1x8x1xf32>
    %310 = vector.shape_cast %309 : vector<1x8x1xf32> to vector<8x1xf32>
    %c1_i32_285 = arith.constant 1 : i32
    %311 = tpu.dynamic_rotate %306 by %c1_i32_285 dim 1 : vector<8x128xf32>, i32 -> vector<8x128xf32>
    %312 = vector.broadcast %89 : vector<1x128xf32> to vector<8x128xf32>
    %313 = arith.mulf %311, %312 : vector<8x128xf32>
    %c127_i32_286 = arith.constant 127 : i32
    %314 = tpu.dynamic_rotate %306 by %c127_i32_286 dim 1 : vector<8x128xf32>, i32 -> vector<8x128xf32>
    %315 = vector.broadcast %90 : vector<1x128xf32> to vector<8x128xf32>
    %316 = arith.mulf %314, %315 : vector<8x128xf32>
    %317 = tpu.concatenate %313, %306, %316 in 0 : vector<8x128xf32>, vector<8x128xf32>, vector<8x128xf32> -> vector<24x128xf32>
    %cst_287 = arith.constant dense<0.000000e+00> : vector<8x128xf32>
    %318 = tpu.matmul %308, %317, %cst_287 {dimension_numbers = #tpu.dot_dimension_numbers<[1], [0], [0], [1], [0, 0, 1, 1], [], []>} : vector<8x24xf32>, vector<24x128xf32>, vector<8x128xf32> -> vector<8x128xf32>
    %319 = vector.broadcast %310 : vector<8x1xf32> to vector<8x128xf32>
    %320 = arith.addf %318, %319 : vector<8x128xf32>
    %cst_288 = arith.constant 0.000000e+00 : f32
    %321 = vector.broadcast %cst_288 : f32 to vector<8x128xf32>
    %322 = arith.maximumf %320, %321 : vector<8x128xf32>
    %323 = arith.addf %322, %298 : vector<8x128xf32>
    %c0_289 = arith.constant 0 : index
    %c0_290 = arith.constant 0 : index
    %324 = vector.load %arg24[%c0_289, %c0_290] : memref<8x1xf32, #tpu.memory_space<vmem>>, vector<8x1xf32>
    %325 = vector.broadcast %324 : vector<8x1xf32> to vector<8x128xf32>
    %326 = arith.mulf %323, %325 : vector<8x128xf32>
    %c0_291 = arith.constant 0 : index
    %c0_292 = arith.constant 0 : index
    %327 = vector.load %arg25[%c0_291, %c0_292] : memref<8x1xf32, #tpu.memory_space<vmem>>, vector<8x1xf32>
    %328 = vector.broadcast %327 : vector<8x1xf32> to vector<8x128xf32>
    %329 = arith.addf %326, %328 : vector<8x128xf32>
    %c0_293 = arith.constant 0 : index
    %c0_294 = arith.constant 0 : index
    %330 = vector.load %arg26[%c0_293, %c0_294] : memref<4x24xf32, #tpu.memory_space<vmem>>, vector<4x24xf32>
    %c0_295 = arith.constant 0 : index
    %c0_296 = arith.constant 0 : index
    %331 = vector.load %arg27[%c0_295, %c0_296] : memref<4x1xf32, #tpu.memory_space<vmem>>, vector<4x1xf32>
    %c1_i32_297 = arith.constant 1 : i32
    %332 = tpu.dynamic_rotate %329 by %c1_i32_297 dim 1 : vector<8x128xf32>, i32 -> vector<8x128xf32>
    %333 = vector.broadcast %89 : vector<1x128xf32> to vector<8x128xf32>
    %334 = arith.mulf %332, %333 : vector<8x128xf32>
    %c127_i32_298 = arith.constant 127 : i32
    %335 = tpu.dynamic_rotate %329 by %c127_i32_298 dim 1 : vector<8x128xf32>, i32 -> vector<8x128xf32>
    %336 = vector.broadcast %90 : vector<1x128xf32> to vector<8x128xf32>
    %337 = arith.mulf %335, %336 : vector<8x128xf32>
    %338 = tpu.concatenate %334, %329, %337 in 0 : vector<8x128xf32>, vector<8x128xf32>, vector<8x128xf32> -> vector<24x128xf32>
    %cst_299 = arith.constant dense<0.000000e+00> : vector<4x128xf32>
    %339 = tpu.matmul %330, %338, %cst_299 {dimension_numbers = #tpu.dot_dimension_numbers<[1], [0], [0], [1], [0, 0, 1, 1], [], []>} : vector<4x24xf32>, vector<24x128xf32>, vector<4x128xf32> -> vector<4x128xf32>
    %340 = vector.broadcast %331 : vector<4x1xf32> to vector<4x128xf32>
    %341 = arith.addf %339, %340 : vector<4x128xf32>
    %cst_300 = arith.constant 0.000000e+00 : f32
    %342 = vector.broadcast %cst_300 : f32 to vector<4x128xf32>
    %343 = arith.maximumf %341, %342 : vector<4x128xf32>
    %c0_301 = arith.constant 0 : index
    %c0_302 = arith.constant 0 : index
    %c0_303 = arith.constant 0 : index
    %344 = vector.load %arg28[%c0_301, %c0_302, %c0_303] : memref<1x4x128xf32, #tpu.memory_space<vmem>>, vector<1x4x128xf32>
    %345 = vector.shape_cast %344 : vector<1x4x128xf32> to vector<4x128xf32>
    %346 = vector.shape_cast %343 : vector<4x128xf32> to vector<1x4x128xf32>
    tpu.vector_store %arg28[%c0_301, %c0_302, %c0_303], %346 {strides = array<i32>} : memref<1x4x128xf32, #tpu.memory_space<vmem>>, vector<1x4x128xf32>,
    return
  }
  func.func @transform_0(%arg0: i32) -> (i32, i32) {
    %c0_i32 = arith.constant 0 : i32
    %c0_i32_0 = arith.constant 0 : i32
    return %arg0, %c0_i32 : i32, i32
  }
  func.func @transform_1(%arg0: i32) -> (i32, i32) {
    %c0_i32 = arith.constant 0 : i32
    %c0_i32_0 = arith.constant 0 : i32
    %c0_i32_1 = arith.constant 0 : i32
    return %c0_i32, %c0_i32_0 : i32, i32
  }
  func.func @transform_2(%arg0: i32) -> (i32, i32) {
    %c0_i32 = arith.constant 0 : i32
    %c0_i32_0 = arith.constant 0 : i32
    %c0_i32_1 = arith.constant 0 : i32
    return %c0_i32, %c0_i32_0 : i32, i32
  }
  func.func @transform_3(%arg0: i32) -> (i32, i32) {
    %c0_i32 = arith.constant 0 : i32
    %c0_i32_0 = arith.constant 0 : i32
    %c0_i32_1 = arith.constant 0 : i32
    return %c0_i32, %c0_i32_0 : i32, i32
  }
  func.func @transform_4(%arg0: i32) -> (i32, i32) {
    %c0_i32 = arith.constant 0 : i32
    %c0_i32_0 = arith.constant 0 : i32
    %c0_i32_1 = arith.constant 0 : i32
    return %c0_i32, %c0_i32_0 : i32, i32
  }
  func.func @transform_5(%arg0: i32) -> (i32, i32) {
    %c0_i32 = arith.constant 0 : i32
    %c0_i32_0 = arith.constant 0 : i32
    %c0_i32_1 = arith.constant 0 : i32
    return %c0_i32, %c0_i32_0 : i32, i32
  }
  func.func @transform_6(%arg0: i32) -> (i32, i32) {
    %c0_i32 = arith.constant 0 : i32
    %c0_i32_0 = arith.constant 0 : i32
    %c0_i32_1 = arith.constant 0 : i32
    return %c0_i32, %c0_i32_0 : i32, i32
  }
  func.func @transform_7(%arg0: i32) -> (i32, i32, i32) {
    %c0_i32 = arith.constant 0 : i32
    %c0_i32_0 = arith.constant 0 : i32
    %c0_i32_1 = arith.constant 0 : i32
    %c0_i32_2 = arith.constant 0 : i32
    return %c0_i32, %c0_i32_0, %c0_i32_1 : i32, i32, i32
  }
  func.func @transform_8(%arg0: i32) -> (i32, i32) {
    %c0_i32 = arith.constant 0 : i32
    %c0_i32_0 = arith.constant 0 : i32
    %c0_i32_1 = arith.constant 0 : i32
    return %c0_i32, %c0_i32_0 : i32, i32
  }
  func.func @transform_9(%arg0: i32) -> (i32, i32) {
    %c0_i32 = arith.constant 0 : i32
    %c0_i32_0 = arith.constant 0 : i32
    %c0_i32_1 = arith.constant 0 : i32
    return %c0_i32, %c0_i32_0 : i32, i32
  }
  func.func @transform_10(%arg0: i32) -> (i32, i32) {
    %c0_i32 = arith.constant 0 : i32
    %c0_i32_0 = arith.constant 0 : i32
    %c0_i32_1 = arith.constant 0 : i32
    return %c0_i32, %c0_i32_0 : i32, i32
  }
  func.func @transform_11(%arg0: i32) -> (i32, i32) {
    %c0_i32 = arith.constant 0 : i32
    %c0_i32_0 = arith.constant 0 : i32
    %c0_i32_1 = arith.constant 0 : i32
    return %c0_i32, %c0_i32_0 : i32, i32
  }
  func.func @transform_12(%arg0: i32) -> (i32, i32) {
    %c0_i32 = arith.constant 0 : i32
    %c0_i32_0 = arith.constant 0 : i32
    %c0_i32_1 = arith.constant 0 : i32
    return %c0_i32, %c0_i32_0 : i32, i32
  }
  func.func @transform_13(%arg0: i32) -> (i32, i32) {
    %c0_i32 = arith.constant 0 : i32
    %c0_i32_0 = arith.constant 0 : i32
    %c0_i32_1 = arith.constant 0 : i32
    return %c0_i32, %c0_i32_0 : i32, i32
  }
  func.func @transform_14(%arg0: i32) -> (i32, i32) {
    %c0_i32 = arith.constant 0 : i32
    %c0_i32_0 = arith.constant 0 : i32
    %c0_i32_1 = arith.constant 0 : i32
    return %c0_i32, %c0_i32_0 : i32, i32
  }
  func.func @transform_15(%arg0: i32) -> (i32, i32) {
    %c0_i32 = arith.constant 0 : i32
    %c0_i32_0 = arith.constant 0 : i32
    %c0_i32_1 = arith.constant 0 : i32
    return %c0_i32, %c0_i32_0 : i32, i32
  }
  func.func @transform_16(%arg0: i32) -> (i32, i32) {
    %c0_i32 = arith.constant 0 : i32
    %c0_i32_0 = arith.constant 0 : i32
    %c0_i32_1 = arith.constant 0 : i32
    return %c0_i32, %c0_i32_0 : i32, i32
  }
  func.func @transform_17(%arg0: i32) -> (i32, i32) {
    %c0_i32 = arith.constant 0 : i32
    %c0_i32_0 = arith.constant 0 : i32
    %c0_i32_1 = arith.constant 0 : i32
    return %c0_i32, %c0_i32_0 : i32, i32
  }
  func.func @transform_18(%arg0: i32) -> (i32, i32) {
    %c0_i32 = arith.constant 0 : i32
    %c0_i32_0 = arith.constant 0 : i32
    %c0_i32_1 = arith.constant 0 : i32
    return %c0_i32, %c0_i32_0 : i32, i32
  }
  func.func @transform_19(%arg0: i32) -> (i32, i32, i32) {
    %c0_i32 = arith.constant 0 : i32
    %c0_i32_0 = arith.constant 0 : i32
    %c0_i32_1 = arith.constant 0 : i32
    %c0_i32_2 = arith.constant 0 : i32
    return %c0_i32, %c0_i32_0, %c0_i32_1 : i32, i32, i32
  }
  func.func @transform_20(%arg0: i32) -> (i32, i32, i32) {
    %c0_i32 = arith.constant 0 : i32
    %c0_i32_0 = arith.constant 0 : i32
    %c0_i32_1 = arith.constant 0 : i32
    %c0_i32_2 = arith.constant 0 : i32
    return %c0_i32, %c0_i32_0, %c0_i32_1 : i32, i32, i32
  }
  func.func @transform_21(%arg0: i32) -> (i32, i32, i32) {
    %c0_i32 = arith.constant 0 : i32
    %c0_i32_0 = arith.constant 0 : i32
    %c0_i32_1 = arith.constant 0 : i32
    %c0_i32_2 = arith.constant 0 : i32
    return %c0_i32, %c0_i32_0, %c0_i32_1 : i32, i32, i32
  }
  func.func @transform_22(%arg0: i32) -> (i32, i32, i32) {
    %c0_i32 = arith.constant 0 : i32
    %c0_i32_0 = arith.constant 0 : i32
    %c0_i32_1 = arith.constant 0 : i32
    %c0_i32_2 = arith.constant 0 : i32
    return %c0_i32, %c0_i32_0, %c0_i32_1 : i32, i32, i32
  }
  func.func @transform_23(%arg0: i32) -> (i32, i32) {
    %c0_i32 = arith.constant 0 : i32
    %c0_i32_0 = arith.constant 0 : i32
    %c0_i32_1 = arith.constant 0 : i32
    return %c0_i32, %c0_i32_0 : i32, i32
  }
  func.func @transform_24(%arg0: i32) -> (i32, i32) {
    %c0_i32 = arith.constant 0 : i32
    %c0_i32_0 = arith.constant 0 : i32
    %c0_i32_1 = arith.constant 0 : i32
    return %c0_i32, %c0_i32_0 : i32, i32
  }
  func.func @transform_25(%arg0: i32) -> (i32, i32) {
    %c0_i32 = arith.constant 0 : i32
    %c0_i32_0 = arith.constant 0 : i32
    %c0_i32_1 = arith.constant 0 : i32
    return %c0_i32, %c0_i32_0 : i32, i32
  }
  func.func @transform_26(%arg0: i32) -> (i32, i32) {
    %c0_i32 = arith.constant 0 : i32
    %c0_i32_0 = arith.constant 0 : i32
    %c0_i32_1 = arith.constant 0 : i32
    return %c0_i32, %c0_i32_0 : i32, i32
  }
  func.func @transform_27(%arg0: i32) -> (i32, i32, i32) {
    %c0_i32 = arith.constant 0 : i32
    %c0_i32_0 = arith.constant 0 : i32
    %c0_i32_1 = arith.constant 0 : i32
    return %arg0, %c0_i32, %c0_i32_0 : i32, i32, i32
  }
}

</mosaic_0001>

<llo_original>
// kernel: tpu_custom_call.1
$region0: #{tpu_custom_call.1}
  #allocation0 [shape = 'u32[]', space=smem, size = 0x4, offset = 0x4, fixed_abs, tag = 'smem constant byte address 0x4 - core index']
  #allocation1 [shape = 'u32[72,128]{1,0:T(1,128)}', space=vmem, size = 0x9000, scoped, tag = 'internal scratch']
  #allocation2 [shape = 'f32[8,128]{1,0:T(8,128)}', space=vmem, size = 0x1000, scoped, tag = 'scratch operand']
  #allocation3 [shape = 'f32[4,256]{1,0:T(4,128)}', space=vmem, size = 0x1000, scoped, tag = 'scratch operand']
  %s0 = inlined_call_operand.vmem [shape: f32[16,4], index: 0, kind: input, shape index: {}]
  %s1 = inlined_call_operand.vmem [shape: f32[1,4], index: 1, kind: input, shape index: {}]
  %s2 = inlined_call_operand.vmem [shape: f32[1,4], index: 2, kind: input, shape index: {}]
  %s3 = inlined_call_operand.vmem [shape: f32[4,128], index: 3, kind: input, shape index: {}]
  %s4 = inlined_call_operand.vmem [shape: f32[1,128], index: 4, kind: input, shape index: {}]
  %s5 = inlined_call_operand.vmem [shape: f32[4,1], index: 5, kind: input, shape index: {}]
  %s6 = inlined_call_operand.vmem [shape: f32[4,1], index: 6, kind: input, shape index: {}]
  %s7 = inlined_call_operand.vmem [shape: f32[5,16,4], index: 7, kind: input, shape index: {}]
  %s8 = inlined_call_operand.vmem [shape: f32[4,256], index: 8, kind: input, shape index: {}]
  %s9 = inlined_call_operand.hbm [shape: f32[256,128], index: 9, kind: input, shape index: {}]
  %s10 = inlined_call_operand.vmem [shape: f32[16,1], index: 10, kind: input, shape index: {}]
  %s11 = inlined_call_operand.vmem [shape: f32[16,1], index: 11, kind: input, shape index: {}]
  %s12 = inlined_call_operand.vmem [shape: f32[16,48], index: 12, kind: input, shape index: {}]
  %s13 = inlined_call_operand.vmem [shape: f32[16,1], index: 13, kind: input, shape index: {}]
  %s14 = inlined_call_operand.vmem [shape: f32[2,128], index: 14, kind: input, shape index: {}]
  %s15 = inlined_call_operand.vmem [shape: f32[16,1], index: 15, kind: input, shape index: {}]
  %s16 = inlined_call_operand.vmem [shape: f32[16,1], index: 16, kind: input, shape index: {}]
  %s17 = inlined_call_operand.vmem [shape: f32[8,48], index: 17, kind: input, shape index: {}]
  %s18 = inlined_call_operand.vmem [shape: f32[8,1], index: 18, kind: input, shape index: {}]
  %s19 = inlined_call_operand.vmem [shape: f32[6,8,1], index: 19, kind: input, shape index: {}]
  %s20 = inlined_call_operand.vmem [shape: f32[6,8,1], index: 20, kind: input, shape index: {}]
  %s21 = inlined_call_operand.vmem [shape: f32[6,8,24], index: 21, kind: input, shape index: {}]
  %s22 = inlined_call_operand.vmem [shape: f32[6,8,1], index: 22, kind: input, shape index: {}]
  %s23 = inlined_call_operand.vmem [shape: f32[8,1], index: 23, kind: input, shape index: {}]
  %s24 = inlined_call_operand.vmem [shape: f32[8,1], index: 24, kind: input, shape index: {}]
  %s25 = inlined_call_operand.vmem [shape: f32[4,24], index: 25, kind: input, shape index: {}]
  %s26 = inlined_call_operand.vmem [shape: f32[4,1], index: 26, kind: input, shape index: {}]
  %s27 = inlined_call_operand.hbm [shape: f32[2,4,128], index: 27, kind: output, shape index: {}]
  %s28 = sld [smem:[#allocation0]]
  $region145: #{tpu_custom_call.1} parent=0
    _
  %s30 = ssub.s32 1, %s28
  %s31 = scalar_select 0, %s30, %s28
  $region1: #{tpu_custom_call.1} parent=0
    #allocation4 [shape = 'u8[131072]{0}', space=vmem, size = 0x20000, scoped, tag = 'input window, operand 9, single buffered']
    #allocation5 [shape = 's32[2]{0}', space=sflag, size = 0x8, scoped, tag = 'scoped memory for tpu_custom_call.1']
    #allocation6 [shape = 's32[2]{0}', space=sflag, size = 0x8, scoped, tag = 'scoped memory for tpu_custom_call.1']
    #allocation7 [shape = 'u8[4096]{0}', space=vmem, size = 0x1000, scoped, tag = 'output window, operand 0']
    %32 = vsyncpa [#allocation5], 0
    %33 = vsyncpa [#allocation6], 0
    %s34 = scalar_lea.sflag [#allocation6], 1
    %35 = vsyncpa %s34, 0
    loop: start=0, step=1, limit=4
    $region2: #{tpu_custom_call.1} parent=1 // loop_pre_header
      _
    $region3: #{tpu_custom_call.1} parent=1 // loop_header
      %s37 = sphi 0, %s41
      %p38 = scmp.ge.s32.totalorder %s37, 4
      %s47 = sphi 0, %s49
      %s50 = sphi 0, %s47
      %s51 = sphi 0, %s50
      %s67 = sphi 0, %s51
      %s71 = sphi 0, %s71
      %s73 = sphi 0, %s71
      %s74 = sphi 0, %s73
      %s88 = sphi 0, %s74
      %s92 = sphi 0, %s92
      %s94 = sphi 0, %s92
      %s95 = sphi 0, %s94
      %s109 = sphi 0, %s95
      %s113 = sphi 0, %s113
      %s115 = sphi 0, %s113
      %s116 = sphi 0, %s115
      %s130 = sphi 0, %s116
      %s134 = sphi 0, %s134
      %s136 = sphi 0, %s134
      %s137 = sphi 0, %s136
      %s151 = sphi 0, %s137
      %s155 = sphi 0, %s155
      %s157 = sphi 0, %s155
      %s158 = sphi 0, %s157
      %s172 = sphi 0, %s158
      %s176 = sphi 0, %s176
      %s178 = sphi 0, %s176
      %s179 = sphi 0, %s178
      %s193 = sphi 0, %s179
      %s197 = sphi 0, %s197
      %s199 = sphi 0, %s197
      %s200 = sphi 0, %s199
      %s214 = sphi 0, %s200
      %s218 = sphi 0, %s218
      %s220 = sphi 0, %s218
      %s221 = sphi 0, %s220
      %s235 = sphi 0, %s221
      %s239 = sphi 0, %s239
      %s241 = sphi 0, %s239
      %s242 = sphi 0, %s241
      %s256 = sphi 0, %s242
      %s260 = sphi 0, %s260
      %s262 = sphi 0, %s260
      %s263 = sphi 0, %s262
      %s277 = sphi 0, %s263
      %s281 = sphi 0, %s281
      %s283 = sphi 0, %s281
      %s284 = sphi 0, %s283
      %s298 = sphi 0, %s284
      %s302 = sphi 0, %s302
      %s304 = sphi 0, %s302
      %s305 = sphi 0, %s304
      %s319 = sphi 0, %s305
      %s323 = sphi 0, %s323
      %s325 = sphi 0, %s323
      %s326 = sphi 0, %s325
      %s340 = sphi 0, %s326
      %s344 = sphi 0, %s344
      %s346 = sphi 0, %s344
      %s347 = sphi 0, %s346
      %s361 = sphi 0, %s347
      %s365 = sphi 0, %s365
      %s367 = sphi 0, %s365
      %s368 = sphi 0, %s367
      %s382 = sphi 0, %s368
      %s386 = sphi 0, %s386
      %s388 = sphi 0, %s386
      %s389 = sphi 0, %s388
      %s403 = sphi 0, %s389
      %s407 = sphi 0, %s407
      %s409 = sphi 0, %s407
      %s410 = sphi 0, %s409
      %s424 = sphi 0, %s410
      %s428 = sphi 0, %s428
      %s430 = sphi 0, %s428
      %s431 = sphi 0, %s430
      %s445 = sphi 0, %s431
      %s449 = sphi 0, %s449
      %s451 = sphi 0, %s449
      %s452 = sphi 0, %s451
      %s466 = sphi 0, %s452
      %s470 = sphi 0, %s470
      %s472 = sphi 0, %s470
      %s473 = sphi 0, %s472
      %s487 = sphi 0, %s473
      %s491 = sphi 0, %s491
      %s493 = sphi 0, %s491
      %s494 = sphi 0, %s493
      %s508 = sphi 0, %s494
      %s512 = sphi 0, %s512
      %s514 = sphi 0, %s512
      %s515 = sphi 0, %s514
      %s529 = sphi 0, %s515
      %s533 = sphi 0, %s533
      %s535 = sphi 0, %s533
      %s536 = sphi 0, %s535
      %s550 = sphi 0, %s536
      %s554 = sphi 0, %s554
      %s556 = sphi 0, %s554
      %s557 = sphi 0, %s556
      %s571 = sphi 0, %s557
      %s575 = sphi 0, %s575
      %s577 = sphi 0, %s575
      %s578 = sphi 0, %s577
      %s592 = sphi 0, %s578
      %s596 = sphi 0, %s596
      %s598 = sphi 0, %s596
      %s599 = sphi 0, %s598
      %s613 = sphi 0, %s599
      %s619 = sphi 0, %s621
      %s622 = sphi 0, %s619
      %s623 = sphi 0, %s622
      %s639 = sphi 0, %s623
    $region4: #{tpu_custom_call.1} parent=1 // loop_header_branch
      %40 = sbr.rel (%p38) target = $region8
    $region5: #{tpu_custom_call.1} parent=1 // loop_body
      %s42 = ssub.s32 %s37, 1
      %s43 = ssub.s32 %s37, 2
      %s44 = sadd.s32 %s37, 1
      %s45 = ssub.s32 %s37, %s44
      %p46 = scmp.eq.s32.totalorder %s45, 0
      %s48 = sadd.s32 %s47, 1
      %s49 = scalar_select %p46, %s47, %s48
      %p52 = pneg %p46
      %p53 = scmp.eq.s32.totalorder %s37, 1
      %p54 = por %p52, %p53
      %p55 = scmp.ne.s32.totalorder %s47, %s50
      %p56 = scmp.eq.s32.totalorder %s37, 0
      %p57 = por %p55, %p56
      %p58 = scmp.ne.s32.totalorder %s47, %s50
      %p59 = scmp.eq.s32.totalorder %s42, 1
      %p60 = por %p58, %p59
      %p61 = scmp.ne.s32.totalorder %s50, %s51
      %p62 = scmp.eq.s32.totalorder %s42, 0
      %p63 = por %p61, %p62
      %p64 = scmp.ne.s32.totalorder %s50, %s51
      %p65 = scmp.eq.s32.totalorder %s43, 1
      %p66 = por %p64, %p65
      %p68 = scmp.ne.s32.totalorder %s51, %s67
      %p69 = scmp.eq.s32.totalorder %s43, 0
      %p70 = por %p68, %p69
      %s72 = sadd.s32 %s71, 1
      %p75 = scmp.eq.s32.totalorder %s37, 1
      %p76 = scmp.ne.s32.totalorder %s71, %s73
      %p77 = scmp.eq.s32.totalorder %s37, 0
      %p78 = por %p76, %p77
      %p79 = scmp.ne.s32.totalorder %s71, %s73
      %p80 = scmp.eq.s32.totalorder %s42, 1
      %p81 = por %p79, %p80
      %p82 = scmp.ne.s32.totalorder %s73, %s74
      %p83 = scmp.eq.s32.totalorder %s42, 0
      %p84 = por %p82, %p83
      %p85 = scmp.ne.s32.totalorder %s73, %s74
      %p86 = scmp.eq.s32.totalorder %s43, 1
      %p87 = por %p85, %p86
      %p89 = scmp.ne.s32.totalorder %s74, %s88
      %p90 = scmp.eq.s32.totalorder %s43, 0
      %p91 = por %p89, %p90
      %s93 = sadd.s32 %s92, 1
      %p96 = scmp.eq.s32.totalorder %s37, 1
      %p97 = scmp.ne.s32.totalorder %s92, %s94
      %p98 = scmp.eq.s32.totalorder %s37, 0
      %p99 = por %p97, %p98
      %p100 = scmp.ne.s32.totalorder %s92, %s94
      %p101 = scmp.eq.s32.totalorder %s42, 1
      %p102 = por %p100, %p101
      %p103 = scmp.ne.s32.totalorder %s94, %s95
      %p104 = scmp.eq.s32.totalorder %s42, 0
      %p105 = por %p103, %p104
      %p106 = scmp.ne.s32.totalorder %s94, %s95
      %p107 = scmp.eq.s32.totalorder %s43, 1
      %p108 = por %p106, %p107
      %p110 = scmp.ne.s32.totalorder %s95, %s109
      %p111 = scmp.eq.s32.totalorder %s43, 0
      %p112 = por %p110, %p111
      %s114 = sadd.s32 %s113, 1
      %p117 = scmp.eq.s32.totalorder %s37, 1
      %p118 = scmp.ne.s32.totalorder %s113, %s115
      %p119 = scmp.eq.s32.totalorder %s37, 0
      %p120 = por %p118, %p119
      %p121 = scmp.ne.s32.totalorder %s113, %s115
      %p122 = scmp.eq.s32.totalorder %s42, 1
      %p123 = por %p121, %p122
      %p124 = scmp.ne.s32.totalorder %s115, %s116
      %p125 = scmp.eq.s32.totalorder %s42, 0
      %p126 = por %p124, %p125
      %p127 = scmp.ne.s32.totalorder %s115, %s116
      %p128 = scmp.eq.s32.totalorder %s43, 1
      %p129 = por %p127, %p128
      %p131 = scmp.ne.s32.totalorder %s116, %s130
      %p132 = scmp.eq.s32.totalorder %s43, 0
      %p133 = por %p131, %p132
      %s135 = sadd.s32 %s134, 1
      %p138 = scmp.eq.s32.totalorder %s37, 1
      %p139 = scmp.ne.s32.totalorder %s134, %s136
      %p140 = scmp.eq.s32.totalorder %s37, 0
      %p141 = por %p139, %p140
      %p142 = scmp.ne.s32.totalorder %s134, %s136
      %p143 = scmp.eq.s32.totalorder %s42, 1
      %p144 = por %p142, %p143
      %p145 = scmp.ne.s32.totalorder %s136, %s137
      %p146 = scmp.eq.s32.totalorder %s42, 0
      %p147 = por %p145, %p146
      %p148 = scmp.ne.s32.totalorder %s136, %s137
      %p149 = scmp.eq.s32.totalorder %s43, 1
      %p150 = por %p148, %p149
      %p152 = scmp.ne.s32.totalorder %s137, %s151
      %p153 = scmp.eq.s32.totalorder %s43, 0
      %p154 = por %p152, %p153
      %s156 = sadd.s32 %s155, 1
      %p159 = scmp.eq.s32.totalorder %s37, 1
      %p160 = scmp.ne.s32.totalorder %s155, %s157
      %p161 = scmp.eq.s32.totalorder %s37, 0
      %p162 = por %p160, %p161
      %p163 = scmp.ne.s32.totalorder %s155, %s157
      %p164 = scmp.eq.s32.totalorder %s42, 1
      %p165 = por %p163, %p164
      %p166 = scmp.ne.s32.totalorder %s157, %s158
      %p167 = scmp.eq.s32.totalorder %s42, 0
      %p168 = por %p166, %p167
      %p169 = scmp.ne.s32.totalorder %s157, %s158
      %p170 = scmp.eq.s32.totalorder %s43, 1
      %p171 = por %p169, %p170
      %p173 = scmp.ne.s32.totalorder %s158, %s172
      %p174 = scmp.eq.s32.totalorder %s43, 0
      %p175 = por %p173, %p174
      %s177 = sadd.s32 %s176, 1
      %p180 = scmp.eq.s32.totalorder %s37, 1
      %p181 = scmp.ne.s32.totalorder %s176, %s178
      %p182 = scmp.eq.s32.totalorder %s37, 0
      %p183 = por %p181, %p182
      %p184 = scmp.ne.s32.totalorder %s176, %s178
      %p185 = scmp.eq.s32.totalorder %s42, 1
      %p186 = por %p184, %p185
      %p187 = scmp.ne.s32.totalorder %s178, %s179
      %p188 = scmp.eq.s32.totalorder %s42, 0
      %p189 = por %p187, %p188
      %p190 = scmp.ne.s32.totalorder %s178, %s179
      %p191 = scmp.eq.s32.totalorder %s43, 1
      %p192 = por %p190, %p191
      %p194 = scmp.ne.s32.totalorder %s179, %s193
      %p195 = scmp.eq.s32.totalorder %s43, 0
      %p196 = por %p194, %p195
      %s198 = sadd.s32 %s197, 1
      %p201 = scmp.eq.s32.totalorder %s37, 1
      %p202 = scmp.ne.s32.totalorder %s197, %s199
      %p203 = scmp.eq.s32.totalorder %s37, 0
      %p204 = por %p202, %p203
      %p205 = scmp.ne.s32.totalorder %s197, %s199
      %p206 = scmp.eq.s32.totalorder %s42, 1
      %p207 = por %p205, %p206
      %p208 = scmp.ne.s32.totalorder %s199, %s200
      %p209 = scmp.eq.s32.totalorder %s42, 0
      %p210 = por %p208, %p209
      %p211 = scmp.ne.s32.totalorder %s199, %s200
      %p212 = scmp.eq.s32.totalorder %s43, 1
      %p213 = por %p211, %p212
      %p215 = scmp.ne.s32.totalorder %s200, %s214
      %p216 = scmp.eq.s32.totalorder %s43, 0
      %p217 = por %p215, %p216
      %s219 = sadd.s32 %s218, 1
      %p222 = scmp.eq.s32.totalorder %s37, 1
      %p223 = scmp.ne.s32.totalorder %s218, %s220
      %p224 = scmp.eq.s32.totalorder %s37, 0
      %p225 = por %p223, %p224
      %p226 = scmp.ne.s32.totalorder %s218, %s220
      %p227 = scmp.eq.s32.totalorder %s42, 1
      %p228 = por %p226, %p227
      %p229 = scmp.ne.s32.totalorder %s220, %s221
      %p230 = scmp.eq.s32.totalorder %s42, 0
      %p231 = por %p229, %p230
      %p232 = scmp.ne.s32.totalorder %s220, %s221
      %p233 = scmp.eq.s32.totalorder %s43, 1
      %p234 = por %p232, %p233
      %p236 = scmp.ne.s32.totalorder %s221, %s235
      %p237 = scmp.eq.s32.totalorder %s43, 0
      %p238 = por %p236, %p237
      %s240 = sadd.s32 %s239, 1
      %p243 = scmp.eq.s32.totalorder %s37, 1
      %p244 = scmp.ne.s32.totalorder %s239, %s241
      %p245 = scmp.eq.s32.totalorder %s37, 0
      %p246 = por %p244, %p245
      %p247 = scmp.ne.s32.totalorder %s239, %s241
      %p248 = scmp.eq.s32.totalorder %s42, 1
      %p249 = por %p247, %p248
      %p250 = scmp.ne.s32.totalorder %s241, %s242
      %p251 = scmp.eq.s32.totalorder %s42, 0
      %p252 = por %p250, %p251
      %p253 = scmp.ne.s32.totalorder %s241, %s242
      %p254 = scmp.eq.s32.totalorder %s43, 1
      %p255 = por %p253, %p254
      %p257 = scmp.ne.s32.totalorder %s242, %s256
      %p258 = scmp.eq.s32.totalorder %s43, 0
      %p259 = por %p257, %p258
      %s261 = sadd.s32 %s260, 1
      %p264 = scmp.eq.s32.totalorder %s37, 1
      %p265 = scmp.ne.s32.totalorder %s260, %s262
      %p266 = scmp.eq.s32.totalorder %s37, 0
      %p267 = por %p265, %p266
      %p268 = scmp.ne.s32.totalorder %s260, %s262
      %p269 = scmp.eq.s32.totalorder %s42, 1
      %p270 = por %p268, %p269
      %p271 = scmp.ne.s32.totalorder %s262, %s263
      %p272 = scmp.eq.s32.totalorder %s42, 0
      %p273 = por %p271, %p272
      %p274 = scmp.ne.s32.totalorder %s262, %s263
      %p275 = scmp.eq.s32.totalorder %s43, 1
      %p276 = por %p274, %p275
      %p278 = scmp.ne.s32.totalorder %s263, %s277
      %p279 = scmp.eq.s32.totalorder %s43, 0
      %p280 = por %p278, %p279
      %s282 = sadd.s32 %s281, 1
      %p285 = scmp.eq.s32.totalorder %s37, 1
      %p286 = scmp.ne.s32.totalorder %s281, %s283
      %p287 = scmp.eq.s32.totalorder %s37, 0
      %p288 = por %p286, %p287
      %p289 = scmp.ne.s32.totalorder %s281, %s283
      %p290 = scmp.eq.s32.totalorder %s42, 1
      %p291 = por %p289, %p290
      %p292 = scmp.ne.s32.totalorder %s283, %s284
      %p293 = scmp.eq.s32.totalorder %s42, 0
      %p294 = por %p292, %p293
      %p295 = scmp.ne.s32.totalorder %s283, %s284
      %p296 = scmp.eq.s32.totalorder %s43, 1
      %p297 = por %p295, %p296
      %p299 = scmp.ne.s32.totalorder %s284, %s298
      %p300 = scmp.eq.s32.totalorder %s43, 0
      %p301 = por %p299, %p300
      %s303 = sadd.s32 %s302, 1
      %p306 = scmp.eq.s32.totalorder %s37, 1
      %p307 = scmp.ne.s32.totalorder %s302, %s304
      %p308 = scmp.eq.s32.totalorder %s37, 0
      %p309 = por %p307, %p308
      %p310 = scmp.ne.s32.totalorder %s302, %s304
      %p311 = scmp.eq.s32.totalorder %s42, 1
      %p312 = por %p310, %p311
      %p313 = scmp.ne.s32.totalorder %s304, %s305
      %p314 = scmp.eq.s32.totalorder %s42, 0
      %p315 = por %p313, %p314
      %p316 = scmp.ne.s32.totalorder %s304, %s305
      %p317 = scmp.eq.s32.totalorder %s43, 1
      %p318 = por %p316, %p317
      %p320 = scmp.ne.s32.totalorder %s305, %s319
      %p321 = scmp.eq.s32.totalorder %s43, 0
      %p322 = por %p320, %p321
      %s324 = sadd.s32 %s323, 1
      %p327 = scmp.eq.s32.totalorder %s37, 1
      %p328 = scmp.ne.s32.totalorder %s323, %s325
      %p329 = scmp.eq.s32.totalorder %s37, 0
      %p330 = por %p328, %p329
      %p331 = scmp.ne.s32.totalorder %s323, %s325
      %p332 = scmp.eq.s32.totalorder %s42, 1
      %p333 = por %p331, %p332
      %p334 = scmp.ne.s32.totalorder %s325, %s326
      %p335 = scmp.eq.s32.totalorder %s42, 0
      %p336 = por %p334, %p335
      %p337 = scmp.ne.s32.totalorder %s325, %s326
      %p338 = scmp.eq.s32.totalorder %s43, 1
      %p339 = por %p337, %p338
      %p341 = scmp.ne.s32.totalorder %s326, %s340
      %p342 = scmp.eq.s32.totalorder %s43, 0
      %p343 = por %p341, %p342
      %s345 = sadd.s32 %s344, 1
      %p348 = scmp.eq.s32.totalorder %s37, 1
      %p349 = scmp.ne.s32.totalorder %s344, %s346
      %p350 = scmp.eq.s32.totalorder %s37, 0
      %p351 = por %p349, %p350
      %p352 = scmp.ne.s32.totalorder %s344, %s346
      %p353 = scmp.eq.s32.totalorder %s42, 1
      %p354 = por %p352, %p353
      %p355 = scmp.ne.s32.totalorder %s346, %s347
      %p356 = scmp.eq.s32.totalorder %s42, 0
      %p357 = por %p355, %p356
      %p358 = scmp.ne.s32.totalorder %s346, %s347
      %p359 = scmp.eq.s32.totalorder %s43, 1
      %p360 = por %p358, %p359
      %p362 = scmp.ne.s32.totalorder %s347, %s361
      %p363 = scmp.eq.s32.totalorder %s43, 0
      %p364 = por %p362, %p363
      %s366 = sadd.s32 %s365, 1
      %p369 = scmp.eq.s32.totalorder %s37, 1
      %p370 = scmp.ne.s32.totalorder %s365, %s367
      %p371 = scmp.eq.s32.totalorder %s37, 0
      %p372 = por %p370, %p371
      %p373 = scmp.ne.s32.totalorder %s365, %s367
      %p374 = scmp.eq.s32.totalorder %s42, 1
      %p375 = por %p373, %p374
      %p376 = scmp.ne.s32.totalorder %s367, %s368
      %p377 = scmp.eq.s32.totalorder %s42, 0
      %p378 = por %p376, %p377
      %p379 = scmp.ne.s32.totalorder %s367, %s368
      %p380 = scmp.eq.s32.totalorder %s43, 1
      %p381 = por %p379, %p380
      %p383 = scmp.ne.s32.totalorder %s368, %s382
      %p384 = scmp.eq.s32.totalorder %s43, 0
      %p385 = por %p383, %p384
      %s387 = sadd.s32 %s386, 1
      %p390 = scmp.eq.s32.totalorder %s37, 1
      %p391 = scmp.ne.s32.totalorder %s386, %s388
      %p392 = scmp.eq.s32.totalorder %s37, 0
      %p393 = por %p391, %p392
      %p394 = scmp.ne.s32.totalorder %s386, %s388
      %p395 = scmp.eq.s32.totalorder %s42, 1
      %p396 = por %p394, %p395
      %p397 = scmp.ne.s32.totalorder %s388, %s389
      %p398 = scmp.eq.s32.totalorder %s42, 0
      %p399 = por %p397, %p398
      %p400 = scmp.ne.s32.totalorder %s388, %s389
      %p401 = scmp.eq.s32.totalorder %s43, 1
      %p402 = por %p400, %p401
      %p404 = scmp.ne.s32.totalorder %s389, %s403
      %p405 = scmp.eq.s32.totalorder %s43, 0
      %p406 = por %p404, %p405
      %s408 = sadd.s32 %s407, 1
      %p411 = scmp.eq.s32.totalorder %s37, 1
      %p412 = scmp.ne.s32.totalorder %s407, %s409
      %p413 = scmp.eq.s32.totalorder %s37, 0
      %p414 = por %p412, %p413
      %p415 = scmp.ne.s32.totalorder %s407, %s409
      %p416 = scmp.eq.s32.totalorder %s42, 1
      %p417 = por %p415, %p416
      %p418 = scmp.ne.s32.totalorder %s409, %s410
      %p419 = scmp.eq.s32.totalorder %s42, 0
      %p420 = por %p418, %p419
      %p421 = scmp.ne.s32.totalorder %s409, %s410
      %p422 = scmp.eq.s32.totalorder %s43, 1
      %p423 = por %p421, %p422
      %p425 = scmp.ne.s32.totalorder %s410, %s424
      %p426 = scmp.eq.s32.totalorder %s43, 0
      %p427 = por %p425, %p426
      %s429 = sadd.s32 %s428, 1
      %p432 = scmp.eq.s32.totalorder %s37, 1
      %p433 = scmp.ne.s32.totalorder %s428, %s430
      %p434 = scmp.eq.s32.totalorder %s37, 0
      %p435 = por %p433, %p434
      %p436 = scmp.ne.s32.totalorder %s428, %s430
      %p437 = scmp.eq.s32.totalorder %s42, 1
      %p438 = por %p436, %p437
      %p439 = scmp.ne.s32.totalorder %s430, %s431
      %p440 = scmp.eq.s32.totalorder %s42, 0
      %p441 = por %p439, %p440
      %p442 = scmp.ne.s32.totalorder %s430, %s431
      %p443 = scmp.eq.s32.totalorder %s43, 1
      %p444 = por %p442, %p443
      %p446 = scmp.ne.s32.totalorder %s431, %s445
      %p447 = scmp.eq.s32.totalorder %s43, 0
      %p448 = por %p446, %p447
      %s450 = sadd.s32 %s449, 1
      %p453 = scmp.eq.s32.totalorder %s37, 1
      %p454 = scmp.ne.s32.totalorder %s449, %s451
      %p455 = scmp.eq.s32.totalorder %s37, 0
      %p456 = por %p454, %p455
      %p457 = scmp.ne.s32.totalorder %s449, %s451
      %p458 = scmp.eq.s32.totalorder %s42, 1
      %p459 = por %p457, %p458
      %p460 = scmp.ne.s32.totalorder %s451, %s452
      %p461 = scmp.eq.s32.totalorder %s42, 0
      %p462 = por %p460, %p461
      %p463 = scmp.ne.s32.totalorder %s451, %s452
      %p464 = scmp.eq.s32.totalorder %s43, 1
      %p465 = por %p463, %p464
      %p467 = scmp.ne.s32.totalorder %s452, %s466
      %p468 = scmp.eq.s32.totalorder %s43, 0
      %p469 = por %p467, %p468
      %s471 = sadd.s32 %s470, 1
      %p474 = scmp.eq.s32.totalorder %s37, 1
      %p475 = scmp.ne.s32.totalorder %s470, %s472
      %p476 = scmp.eq.s32.totalorder %s37, 0
      %p477 = por %p475, %p476
      %p478 = scmp.ne.s32.totalorder %s470, %s472
      %p479 = scmp.eq.s32.totalorder %s42, 1
      %p480 = por %p478, %p479
      %p481 = scmp.ne.s32.totalorder %s472, %s473
      %p482 = scmp.eq.s32.totalorder %s42, 0
      %p483 = por %p481, %p482
      %p484 = scmp.ne.s32.totalorder %s472, %s473
      %p485 = scmp.eq.s32.totalorder %s43, 1
      %p486 = por %p484, %p485
      %p488 = scmp.ne.s32.totalorder %s473, %s487
      %p489 = scmp.eq.s32.totalorder %s43, 0
      %p490 = por %p488, %p489
      %s492 = sadd.s32 %s491, 1
      %p495 = scmp.eq.s32.totalorder %s37, 1
      %p496 = scmp.ne.s32.totalorder %s491, %s493
      %p497 = scmp.eq.s32.totalorder %s37, 0
      %p498 = por %p496, %p497
      %p499 = scmp.ne.s32.totalorder %s491, %s493
      %p500 = scmp.eq.s32.totalorder %s42, 1
      %p501 = por %p499, %p500
      %p502 = scmp.ne.s32.totalorder %s493, %s494
      %p503 = scmp.eq.s32.totalorder %s42, 0
      %p504 = por %p502, %p503
      %p505 = scmp.ne.s32.totalorder %s493, %s494
      %p506 = scmp.eq.s32.totalorder %s43, 1
      %p507 = por %p505, %p506
      %p509 = scmp.ne.s32.totalorder %s494, %s508
      %p510 = scmp.eq.s32.totalorder %s43, 0
      %p511 = por %p509, %p510
      %s513 = sadd.s32 %s512, 1
      %p516 = scmp.eq.s32.totalorder %s37, 1
      %p517 = scmp.ne.s32.totalorder %s512, %s514
      %p518 = scmp.eq.s32.totalorder %s37, 0
      %p519 = por %p517, %p518
      %p520 = scmp.ne.s32.totalorder %s512, %s514
      %p521 = scmp.eq.s32.totalorder %s42, 1
      %p522 = por %p520, %p521
      %p523 = scmp.ne.s32.totalorder %s514, %s515
      %p524 = scmp.eq.s32.totalorder %s42, 0
      %p525 = por %p523, %p524
      %p526 = scmp.ne.s32.totalorder %s514, %s515
      %p527 = scmp.eq.s32.totalorder %s43, 1
      %p528 = por %p526, %p527
      %p530 = scmp.ne.s32.totalorder %s515, %s529
      %p531 = scmp.eq.s32.totalorder %s43, 0
      %p532 = por %p530, %p531
      %s534 = sadd.s32 %s533, 1
      %p537 = scmp.eq.s32.totalorder %s37, 1
      %p538 = scmp.ne.s32.totalorder %s533, %s535
      %p539 = scmp.eq.s32.totalorder %s37, 0
      %p540 = por %p538, %p539
      %p541 = scmp.ne.s32.totalorder %s533, %s535
      %p542 = scmp.eq.s32.totalorder %s42, 1
      %p543 = por %p541, %p542
      %p544 = scmp.ne.s32.totalorder %s535, %s536
      %p545 = scmp.eq.s32.totalorder %s42, 0
      %p546 = por %p544, %p545
      %p547 = scmp.ne.s32.totalorder %s535, %s536
      %p548 = scmp.eq.s32.totalorder %s43, 1
      %p549 = por %p547, %p548
      %p551 = scmp.ne.s32.totalorder %s536, %s550
      %p552 = scmp.eq.s32.totalorder %s43, 0
      %p553 = por %p551, %p552
      %s555 = sadd.s32 %s554, 1
      %p558 = scmp.eq.s32.totalorder %s37, 1
      %p559 = scmp.ne.s32.totalorder %s554, %s556
      %p560 = scmp.eq.s32.totalorder %s37, 0
      %p561 = por %p559, %p560
      %p562 = scmp.ne.s32.totalorder %s554, %s556
      %p563 = scmp.eq.s32.totalorder %s42, 1
      %p564 = por %p562, %p563
      %p565 = scmp.ne.s32.totalorder %s556, %s557
      %p566 = scmp.eq.s32.totalorder %s42, 0
      %p567 = por %p565, %p566
      %p568 = scmp.ne.s32.totalorder %s556, %s557
      %p569 = scmp.eq.s32.totalorder %s43, 1
      %p570 = por %p568, %p569
      %p572 = scmp.ne.s32.totalorder %s557, %s571
      %p573 = scmp.eq.s32.totalorder %s43, 0
      %p574 = por %p572, %p573
      %s576 = sadd.s32 %s575, 1
      %p579 = scmp.eq.s32.totalorder %s37, 1
      %p580 = scmp.ne.s32.totalorder %s575, %s577
      %p581 = scmp.eq.s32.totalorder %s37, 0
      %p582 = por %p580, %p581
      %p583 = scmp.ne.s32.totalorder %s575, %s577
      %p584 = scmp.eq.s32.totalorder %s42, 1
      %p585 = por %p583, %p584
      %p586 = scmp.ne.s32.totalorder %s577, %s578
      %p587 = scmp.eq.s32.totalorder %s42, 0
      %p588 = por %p586, %p587
      %p589 = scmp.ne.s32.totalorder %s577, %s578
      %p590 = scmp.eq.s32.totalorder %s43, 1
      %p591 = por %p589, %p590
      %p593 = scmp.ne.s32.totalorder %s578, %s592
      %p594 = scmp.eq.s32.totalorder %s43, 0
      %p595 = por %p593, %p594
      %s597 = sadd.s32 %s596, 1
      %p600 = scmp.eq.s32.totalorder %s37, 1
      %p601 = scmp.ne.s32.totalorder %s596, %s598
      %p602 = scmp.eq.s32.totalorder %s37, 0
      %p603 = por %p601, %p602
      %p604 = scmp.ne.s32.totalorder %s596, %s598
      %p605 = scmp.eq.s32.totalorder %s42, 1
      %p606 = por %p604, %p605
      %p607 = scmp.ne.s32.totalorder %s598, %s599
      %p608 = scmp.eq.s32.totalorder %s42, 0
      %p609 = por %p607, %p608
      %p610 = scmp.ne.s32.totalorder %s598, %s599
      %p611 = scmp.eq.s32.totalorder %s43, 1
      %p612 = por %p610, %p611
      %p614 = scmp.ne.s32.totalorder %s599, %s613
      %p615 = scmp.eq.s32.totalorder %s43, 0
      %p616 = por %p614, %p615
      %s617 = ssub.s32 %s37, %s44
      %p618 = scmp.eq.s32.totalorder %s617, 0
      %s620 = sadd.s32 %s619, 1
      %s621 = scalar_select %p618, %s619, %s620
      %p624 = pneg %p618
      %p625 = scmp.eq.s32.totalorder %s37, 1
      %p626 = por %p624, %p625
      %p627 = scmp.ne.s32.totalorder %s619, %s622
      %p628 = scmp.eq.s32.totalorder %s37, 0
      %p629 = por %p627, %p628
      %p630 = scmp.ne.s32.totalorder %s619, %s622
      %p631 = scmp.eq.s32.totalorder %s42, 1
      %p632 = por %p630, %p631
      %p633 = scmp.ne.s32.totalorder %s622, %s623
      %p634 = scmp.eq.s32.totalorder %s42, 0
      %p635 = por %p633, %p634
      %p636 = scmp.ne.s32.totalorder %s622, %s623
      %p637 = scmp.eq.s32.totalorder %s43, 1
      %p638 = por %p636, %p637
      %p640 = scmp.ne.s32.totalorder %s623, %s639
      %p641 = scmp.eq.s32.totalorder %s43, 0
      %p642 = por %p640, %p641
      %p643 = scmp.le.s32.totalorder 1, %s37
      %p644 = scmp.lt.s32.totalorder %s37, 3
      %p645 = pnand %p643, %p644
      %p646 = pneg %p645
      // Predicated region
      $region9: #{tpu_custom_call.1} parent=5 // pred_check
        _
      $region10: #{tpu_custom_call.1} parent=5 // pred_check_branch
        %648 = sbr.rel (%p645) target = $region12
      $region11: #{tpu_custom_call.1} parent=5 // pred_region
        %s649 = ssub.s32 %s37, 1
        // Predicated region
        $region13: #{tpu_custom_call.1} parent=11 // pred_check
          %p650 = pneg %p84
        $region14: #{tpu_custom_call.1} parent=11 // pred_check_branch
          %652 = sbr.rel (%p650) target = $region16
        $region15: #{tpu_custom_call.1} parent=11 // pred_region
          _
        $region16: #{tpu_custom_call.1} parent=11 // pred_fallthru
          _
        // Predicated region
        $region17: #{tpu_custom_call.1} parent=11 // pred_check
          %p653 = pneg %p105
        $region18: #{tpu_custom_call.1} parent=11 // pred_check_branch
          %655 = sbr.rel (%p653) target = $region20
        $region19: #{tpu_custom_call.1} parent=11 // pred_region
          _
        $region20: #{tpu_custom_call.1} parent=11 // pred_fallthru
          _
        // Predicated region
        $region21: #{tpu_custom_call.1} parent=11 // pred_check
          %p656 = pneg %p126
        $region22: #{tpu_custom_call.1} parent=11 // pred_check_branch
          %658 = sbr.rel (%p656) target = $region24
        $region23: #{tpu_custom_call.1} parent=11 // pred_region
          _
        $region24: #{tpu_custom_call.1} parent=11 // pred_fallthru
          _
        // Predicated region
        $region25: #{tpu_custom_call.1} parent=11 // pred_check
          %p659 = pneg %p147
        $region26: #{tpu_custom_call.1} parent=11 // pred_check_branch
          %661 = sbr.rel (%p659) target = $region28
        $region27: #{tpu_custom_call.1} parent=11 // pred_region
          _
        $region28: #{tpu_custom_call.1} parent=11 // pred_fallthru
          _
        // Predicated region
        $region29: #{tpu_custom_call.1} parent=11 // pred_check
          %p662 = pneg %p168
        $region30: #{tpu_custom_call.1} parent=11 // pred_check_branch
          %664 = sbr.rel (%p662) target = $region32
        $region31: #{tpu_custom_call.1} parent=11 // pred_region
          _
        $region32: #{tpu_custom_call.1} parent=11 // pred_fallthru
          _
        // Predicated region
        $region33: #{tpu_custom_call.1} parent=11 // pred_check
          %p665 = pneg %p189
        $region34: #{tpu_custom_call.1} parent=11 // pred_check_branch
          %667 = sbr.rel (%p665) target = $region36
        $region35: #{tpu_custom_call.1} parent=11 // pred_region
          _
        $region36: #{tpu_custom_call.1} parent=11 // pred_fallthru
          _
        // Predicated region
        $region37: #{tpu_custom_call.1} parent=11 // pred_check
          %p668 = pneg %p210
        $region38: #{tpu_custom_call.1} parent=11 // pred_check_branch
          %670 = sbr.rel (%p668) target = $region40
        $region39: #{tpu_custom_call.1} parent=11 // pred_region
          _
        $region40: #{tpu_custom_call.1} parent=11 // pred_fallthru
          _
        // Predicated region
        $region41: #{tpu_custom_call.1} parent=11 // pred_check
          %p671 = pneg %p231
        $region42: #{tpu_custom_call.1} parent=11 // pred_check_branch
          %673 = sbr.rel (%p671) target = $region44
        $region43: #{tpu_custom_call.1} parent=11 // pred_region
          _
        $region44: #{tpu_custom_call.1} parent=11 // pred_fallthru
          _
        // Predicated region
        $region45: #{tpu_custom_call.1} parent=11 // pred_check
          %p674 = pneg %p252
        $region46: #{tpu_custom_call.1} parent=11 // pred_check_branch
          %676 = sbr.rel (%p674) target = $region48
        $region47: #{tpu_custom_call.1} parent=11 // pred_region
          %678 = vsyncadd [#allocation5], 0
          %s679 = sshll.u32 %s9, 4
          %s680 = int_to_ptr.hbm [resolvable:$true] %s679
          %s681 = sshll.u32 [#allocation4], 4
          %s682 = int_to_ptr.vmem [resolvable:$true] %s681
          %687 = dma.hbm_to_vmem [thread:$0]  %s680, 4096, %s682, [#allocation5], 128, 128, 8
        $region48: #{tpu_custom_call.1} parent=11 // pred_fallthru
          _
        // Predicated region
        $region49: #{tpu_custom_call.1} parent=11 // pred_check
          %p688 = pneg %p273
        $region50: #{tpu_custom_call.1} parent=11 // pred_check_branch
          %690 = sbr.rel (%p688) target = $region52
        $region51: #{tpu_custom_call.1} parent=11 // pred_region
          _
        $region52: #{tpu_custom_call.1} parent=11 // pred_fallthru
          _
        // Predicated region
        $region53: #{tpu_custom_call.1} parent=11 // pred_check
          %p691 = pneg %p294
        $region54: #{tpu_custom_call.1} parent=11 // pred_check_branch
          %693 = sbr.rel (%p691) target = $region56
        $region55: #{tpu_custom_call.1} parent=11 // pred_region
          _
        $region56: #{tpu_custom_call.1} parent=11 // pred_fallthru
          _
        // Predicated region
        $region57: #{tpu_custom_call.1} parent=11 // pred_check
          %p694 = pneg %p315
        $region58: #{tpu_custom_call.1} parent=11 // pred_check_branch
          %696 = sbr.rel (%p694) target = $region60
        $region59: #{tpu_custom_call.1} parent=11 // pred_region
          _
        $region60: #{tpu_custom_call.1} parent=11 // pred_fallthru
          _
        // Predicated region
        $region61: #{tpu_custom_call.1} parent=11 // pred_check
          %p697 = pneg %p336
        $region62: #{tpu_custom_call.1} parent=11 // pred_check_branch
          %699 = sbr.rel (%p697) target = $region64
        $region63: #{tpu_custom_call.1} parent=11 // pred_region
          _
        $region64: #{tpu_custom_call.1} parent=11 // pred_fallthru
          _
        // Predicated region
        $region65: #{tpu_custom_call.1} parent=11 // pred_check
          %p700 = pneg %p357
        $region66: #{tpu_custom_call.1} parent=11 // pred_check_branch
          %702 = sbr.rel (%p700) target = $region68
        $region67: #{tpu_custom_call.1} parent=11 // pred_region
          _
        $region68: #{tpu_custom_call.1} parent=11 // pred_fallthru
          _
        // Predicated region
        $region69: #{tpu_custom_call.1} parent=11 // pred_check
          %p703 = pneg %p378
        $region70: #{tpu_custom_call.1} parent=11 // pred_check_branch
          %705 = sbr.rel (%p703) target = $region72
        $region71: #{tpu_custom_call.1} parent=11 // pred_region
          _
        $region72: #{tpu_custom_call.1} parent=11 // pred_fallthru
          _
        // Predicated region
        $region73: #{tpu_custom_call.1} parent=11 // pred_check
          %p706 = pneg %p399
        $region74: #{tpu_custom_call.1} parent=11 // pred_check_branch
          %708 = sbr.rel (%p706) target = $region76
        $region75: #{tpu_custom_call.1} parent=11 // pred_region
          _
        $region76: #{tpu_custom_call.1} parent=11 // pred_fallthru
          _
        // Predicated region
        $region77: #{tpu_custom_call.1} parent=11 // pred_check
          %p709 = pneg %p420
        $region78: #{tpu_custom_call.1} parent=11 // pred_check_branch
          %711 = sbr.rel (%p709) target = $region80
        $region79: #{tpu_custom_call.1} parent=11 // pred_region
          _
        $region80: #{tpu_custom_call.1} parent=11 // pred_fallthru
          _
        // Predicated region
        $region81: #{tpu_custom_call.1} parent=11 // pred_check
          %p712 = pneg %p441
        $region82: #{tpu_custom_call.1} parent=11 // pred_check_branch
          %714 = sbr.rel (%p712) target = $region84
        $region83: #{tpu_custom_call.1} parent=11 // pred_region
          _
        $region84: #{tpu_custom_call.1} parent=11 // pred_fallthru
          _
        // Predicated region
        $region85: #{tpu_custom_call.1} parent=11 // pred_check
          %p715 = pneg %p462
        $region86: #{tpu_custom_call.1} parent=11 // pred_check_branch
          %717 = sbr.rel (%p715) target = $region88
        $region87: #{tpu_custom_call.1} parent=11 // pred_region
          _
        $region88: #{tpu_custom_call.1} parent=11 // pred_fallthru
          _
        // Predicated region
        $region89: #{tpu_custom_call.1} parent=11 // pred_check
          %p718 = pneg %p483
        $region90: #{tpu_custom_call.1} parent=11 // pred_check_branch
          %720 = sbr.rel (%p718) target = $region92
        $region91: #{tpu_custom_call.1} parent=11 // pred_region
          _
        $region92: #{tpu_custom_call.1} parent=11 // pred_fallthru
          _
        // Predicated region
        $region93: #{tpu_custom_call.1} parent=11 // pred_check
          %p721 = pneg %p504
        $region94: #{tpu_custom_call.1} parent=11 // pred_check_branch
          %723 = sbr.rel (%p721) target = $region96
        $region95: #{tpu_custom_call.1} parent=11 // pred_region
          _
        $region96: #{tpu_custom_call.1} parent=11 // pred_fallthru
          _
        // Predicated region
        $region97: #{tpu_custom_call.1} parent=11 // pred_check
          %p724 = pneg %p525
        $region98: #{tpu_custom_call.1} parent=11 // pred_check_branch
          %726 = sbr.rel (%p724) target = $region100
        $region99: #{tpu_custom_call.1} parent=11 // pred_region
          _
        $region100: #{tpu_custom_call.1} parent=11 // pred_fallthru
          _
        // Predicated region
        $region101: #{tpu_custom_call.1} parent=11 // pred_check
          %p727 = pneg %p546
        $region102: #{tpu_custom_call.1} parent=11 // pred_check_branch
          %729 = sbr.rel (%p727) target = $region104
        $region103: #{tpu_custom_call.1} parent=11 // pred_region
          _
        $region104: #{tpu_custom_call.1} parent=11 // pred_fallthru
          _
        // Predicated region
        $region105: #{tpu_custom_call.1} parent=11 // pred_check
          %p730 = pneg %p567
        $region106: #{tpu_custom_call.1} parent=11 // pred_check_branch
          %732 = sbr.rel (%p730) target = $region108
        $region107: #{tpu_custom_call.1} parent=11 // pred_region
          _
        $region108: #{tpu_custom_call.1} parent=11 // pred_fallthru
          _
        // Predicated region
        $region109: #{tpu_custom_call.1} parent=11 // pred_check
          %p733 = pneg %p588
        $region110: #{tpu_custom_call.1} parent=11 // pred_check_branch
          %735 = sbr.rel (%p733) target = $region112
        $region111: #{tpu_custom_call.1} parent=11 // pred_region
          _
        $region112: #{tpu_custom_call.1} parent=11 // pred_fallthru
          _
        // Predicated region
        $region113: #{tpu_custom_call.1} parent=11 // pred_check
          %p736 = pneg %p609
        $region114: #{tpu_custom_call.1} parent=11 // pred_check_branch
          %738 = sbr.rel (%p736) target = $region116
        $region115: #{tpu_custom_call.1} parent=11 // pred_region
          _
        $region116: #{tpu_custom_call.1} parent=11 // pred_fallthru
          _
      $region12: #{tpu_custom_call.1} parent=5 // pred_fallthru
        _
      %p739 = scmp.lt.s32.totalorder %s37, 2
      // Predicated region
      $region117: #{tpu_custom_call.1} parent=5 // pred_check
        %p740 = pneg %p739
      $region118: #{tpu_custom_call.1} parent=5 // pred_check_branch
        %742 = sbr.rel (%p740) target = $region120
      $region119: #{tpu_custom_call.1} parent=5 // pred_region
        // Predicated region
        $region121: #{tpu_custom_call.1} parent=119 // pred_check
          %p743 = pneg %p57
        $region122: #{tpu_custom_call.1} parent=119 // pred_check_branch
          %745 = sbr.rel (%p743) target = $region124
        $region123: #{tpu_custom_call.1} parent=119 // pred_region
          %p746 = scmp.lt.s32.totalorder %s37, 1
          %s747 = scalar_select %p746, %s37, 1
          %s748 = smul.addr %s747, 8
          %s749 = scalar_lea.vmem %s0, %s748
        $region124: #{tpu_custom_call.1} parent=119 // pred_fallthru
          _
      $region120: #{tpu_custom_call.1} parent=5 // pred_fallthru
        _
      %p750 = scmp.le.s32.totalorder 1, %s37
      %p751 = scmp.lt.s32.totalorder %s37, 3
      %p752 = pnand %p750, %p751
      %p753 = pneg %p752
      // Predicated region
      $region125: #{tpu_custom_call.1} parent=5 // pred_check
        _
      $region126: #{tpu_custom_call.1} parent=5 // pred_check_branch
        %755 = sbr.rel (%p752) target = $region128
      $region127: #{tpu_custom_call.1} parent=5 // pred_region
        %s756 = ssub.s32 %s37, 1
        // Predicated region
        $region129: #{tpu_custom_call.1} parent=127 // pred_check
          %p757 = pneg %p252
        $region130: #{tpu_custom_call.1} parent=127 // pred_check_branch
          %759 = sbr.rel (%p757) target = $region132
        $region131: #{tpu_custom_call.1} parent=127 // pred_region
          %761 = dma.done [#allocation5], 4096
        $region132: #{tpu_custom_call.1} parent=127 // pred_fallthru
          _
        %p762 = scmp.lt.s32.totalorder %s42, 1
        %s763 = scalar_select %p762, %s42, 1
        %s764 = smul.addr %s763, 8
        %s765 = scalar_lea.vmem %s0, %s764
        %p766 = pneg %p63
        %p767 = pneg %p60
        %p768 = pneg %p84
        %p769 = pneg %p81
        %p770 = pneg %p105
        %p771 = pneg %p102
        %p772 = pneg %p126
        %p773 = pneg %p123
        %p774 = pneg %p147
        %p775 = pneg %p144
        %p776 = pneg %p168
        %p777 = pneg %p165
        %p778 = pneg %p189
        %p779 = pneg %p186
        %p780 = pneg %p210
        %p781 = pneg %p207
        %p782 = pneg %p231
        %p783 = pneg %p228
        %p784 = pneg %p252
        %p785 = pneg %p249
        %p786 = pneg %p273
        %p787 = pneg %p270
        %p788 = pneg %p294
        %p789 = pneg %p291
        %p790 = pneg %p315
        %p791 = pneg %p312
        %p792 = pneg %p336
        %p793 = pneg %p333
        %p794 = pneg %p357
        %p795 = pneg %p354
        %p796 = pneg %p378
        %p797 = pneg %p375
        %p798 = pneg %p399
        %p799 = pneg %p396
        %p800 = pneg %p420
        %p801 = pneg %p417
        %p802 = pneg %p441
        %p803 = pneg %p438
        %p804 = pneg %p462
        %p805 = pneg %p459
        %p806 = pneg %p483
        %p807 = pneg %p480
        %p808 = pneg %p504
        %p809 = pneg %p501
        %p810 = pneg %p525
        %p811 = pneg %p522
        %p812 = pneg %p546
        %p813 = pneg %p543
        %p814 = pneg %p567
        %p815 = pneg %p564
        %p816 = pneg %p588
        %p817 = pneg %p585
        %p818 = pneg %p609
        %p819 = pneg %p606
        %p820 = pneg %p635
        %p821 = pneg %p632
        %s822 = sand.u32 %s622, 1
        %s823 = scalar_lea.sflag [#allocation6], %s822
        %s824 = sand.u32 %s622, 1
        %s825 = smul.addr %s824, 4
        %s826 = scalar_lea.vmem [#allocation7], %s825
        %p827 = scmp.lt.s32.totalorder %s42, 1
        %s828 = scalar_select %p827, %s42, 1
        %s829 = smul.addr %s828, 8
        %s830 = scalar_lea.vmem %s0, %s829
        %v831 = vld [vmem:[%s830] sm:$0xff]
        %v832 = vld [vmem:[%s1] sm:$0x1]
        %v834 = vperm.slane %v832, 0
        %v836 = vmul.f32 %v831, %v834
        %v837 = vld [vmem:[%s2] sm:$0x1]
        %v839 = vperm.slane %v837, 0
        %v841 = vadd.f32 %v836, %v839
        %v842 = vld [vmem:[%s3] sm:$0xf]
        %v843 = vld [vmem:[%s4] sm:$0x1]
        %v845 = vperm.slane %v843, 0
        %vm847 = vcmask 31744
        %v849 = vsel %vm847, %v841, 0
        %vm851 = vcmask 1043456
        %v853 = vsel %vm851, %v842, 0
        %855 = vmatpush.msra.mxu0 0.0
        %856 = vmatpush.msra.mxu0 0.0
        %857 = vmatpush.msra.mxu0 0.0
        %858 = vmatpush.msra.mxu0 0.0
        %859 = vmatpush.msra.mxu0 0.0
        %860 = vmatpush.msra.mxu0 0.0
        %861 = vmatpush.msra.mxu0 0.0
        %862 = vmatpush.msra.mxu0 0.0
        %863 = vmatpush.msra.mxu0 0.0
        %864 = vmatpush.msra.mxu0 0.0
        %865 = vmatpush.msra.mxu0 0.0
        %866 = vmatpush.msra.mxu0 0.0
        %867 = vmatpush.msra.mxu0 0.0
        %868 = vmatpush.msra.mxu0 0.0
        %869 = vmatpush.msra.mxu0 0.0
        %870 = vmatpush.msra.mxu0 %v853
        %871 = vmatmul.f32.gmra.mxu0 %v849
        %v872 = vpop.f32.mrf.mxu0
        %v873 = vadd.f32 %v845, %v872
        %874 = vdwg.mxu0
        %vm875 = vcmp.gt.f32.partialorder %v873, 0.0
        %v876 = vmin.f32 %v873, 0.0
        %v877 = vmul.f32 %v876, 1.442695
        %v878 = vpow.pop %v877
        %v879 = vsub.f32 %v878, 1.0
        %v880 = vsel %vm875, %v873, %v879
        %881 = vst [vmem:[#allocation2] sm:$0xff] %v880
        %v882 = vld [vmem:[#allocation2] sm:$0x1]
        %vm883 = vcmask 253952
        %884 = vst.msk [vmem:[#allocation3] sm:$0x1] %vm883, %v882
        %v885 = vld [vmem:[#allocation2 + $0x1] sm:$0x1]
        %887 = vrot.lane.b32.xlu0 %v885, 32
        %v888 = vpop.permute.xlu0 %887
        %vm890 = vcmask 516352
        %891 = vst.msk [vmem:[#allocation3] sm:$0x1] %vm890, %v888
        %v892 = vld [vmem:[#allocation2 + $0x2] sm:$0x1]
        %894 = vrot.lane.b32.xlu0 %v892, 64
        %v895 = vpop.permute.xlu0 %894
        %vm897 = vcmask 778752
        %898 = vst.msk [vmem:[#allocation3] sm:$0x1] %vm897, %v895
        %v899 = vld [vmem:[#allocation2 + $0x3] sm:$0x1]
        %901 = vrot.lane.b32.xlu0 %v899, 96
        %v902 = vpop.permute.xlu0 %901
        %vm904 = vcmask 1041152
        %905 = vst.msk [vmem:[#allocation3] sm:$0x1] %vm904, %v902
        %v906 = vld [vmem:[#allocation2 + $0x4] sm:$0x1]
        %907 = vst.msk [vmem:[#allocation3 + $0x4] sm:$0x1] %vm883, %v906
        %v908 = vld [vmem:[#allocation2 + $0x5] sm:$0x1]
        %910 = vrot.lane.b32.xlu0 %v908, 32
        %v911 = vpop.permute.xlu0 %910
        %913 = vst.msk [vmem:[#allocation3 + $0x4] sm:$0x1] %vm890, %v911
        %v914 = vld [vmem:[#allocation2 + $0x6] sm:$0x1]
        %916 = vrot.lane.b32.xlu0 %v914, 64
        %v917 = vpop.permute.xlu0 %916
        %919 = vst.msk [vmem:[#allocation3 + $0x4] sm:$0x1] %vm897, %v917
        %v920 = vld [vmem:[#allocation2 + $0x7] sm:$0x1]
        %922 = vrot.lane.b32.xlu0 %v920, 96
        %v923 = vpop.permute.xlu0 %922
        %925 = vst.msk [vmem:[#allocation3 + $0x4] sm:$0x1] %vm904, %v923
        %v926 = vld [vmem:[#allocation2] sm:$0x1]
        %928 = vrot.lane.b32.xlu0 %v926, 96
        %v929 = vpop.permute.xlu0 %928
        %931 = vst.msk [vmem:[#allocation3 + $0x1] sm:$0x1] %vm883, %v929
        %v932 = vld [vmem:[#allocation2 + $0x1] sm:$0x1]
        %933 = vst.msk [vmem:[#allocation3 + $0x1] sm:$0x1] %vm890, %v932
        %v934 = vld [vmem:[#allocation2 + $0x2] sm:$0x1]
        %936 = vrot.lane.b32.xlu0 %v934, 32
        %v937 = vpop.permute.xlu0 %936
        %939 = vst.msk [vmem:[#allocation3 + $0x1] sm:$0x1] %vm897, %v937
        %v940 = vld [vmem:[#allocation2 + $0x3] sm:$0x1]
        %942 = vrot.lane.b32.xlu0 %v940, 64
        %v943 = vpop.permute.xlu0 %942
        %945 = vst.msk [vmem:[#allocation3 + $0x1] sm:$0x1] %vm904, %v943
        %v946 = vld [vmem:[#allocation2 + $0x4] sm:$0x1]
        %948 = vrot.lane.b32.xlu0 %v946, 96
        %v949 = vpop.permute.xlu0 %948
        %951 = vst.msk [vmem:[#allocation3 + $0x5] sm:$0x1] %vm883, %v949
        %v952 = vld [vmem:[#allocation2 + $0x5] sm:$0x1]
        %953 = vst.msk [vmem:[#allocation3 + $0x5] sm:$0x1] %vm890, %v952
        %v954 = vld [vmem:[#allocation2 + $0x6] sm:$0x1]
        %956 = vrot.lane.b32.xlu0 %v954, 32
        %v957 = vpop.permute.xlu0 %956
        %959 = vst.msk [vmem:[#allocation3 + $0x5] sm:$0x1] %vm897, %v957
        %v960 = vld [vmem:[#allocation2 + $0x7] sm:$0x1]
        %962 = vrot.lane.b32.xlu0 %v960, 64
        %v963 = vpop.permute.xlu0 %962
        %965 = vst.msk [vmem:[#allocation3 + $0x5] sm:$0x1] %vm904, %v963
        %v966 = vld [vmem:[#allocation2] sm:$0x1]
        %968 = vrot.lane.b32.xlu0 %v966, 64
        %v969 = vpop.permute.xlu0 %968
        %971 = vst.msk [vmem:[#allocation3 + $0x2] sm:$0x1] %vm883, %v969
        %v972 = vld [vmem:[#allocation2 + $0x1] sm:$0x1]
        %974 = vrot.lane.b32.xlu0 %v972, 96
        %v975 = vpop.permute.xlu0 %974
        %977 = vst.msk [vmem:[#allocation3 + $0x2] sm:$0x1] %vm890, %v975
        %v978 = vld [vmem:[#allocation2 + $0x2] sm:$0x1]
        %979 = vst.msk [vmem:[#allocation3 + $0x2] sm:$0x1] %vm897, %v978
        %v980 = vld [vmem:[#allocation2 + $0x3] sm:$0x1]
        %982 = vrot.lane.b32.xlu0 %v980, 32
        %v983 = vpop.permute.xlu0 %982
        %985 = vst.msk [vmem:[#allocation3 + $0x2] sm:$0x1] %vm904, %v983
        %v986 = vld [vmem:[#allocation2 + $0x4] sm:$0x1]
        %988 = vrot.lane.b32.xlu0 %v986, 64
        %v989 = vpop.permute.xlu0 %988
        %991 = vst.msk [vmem:[#allocation3 + $0x6] sm:$0x1] %vm883, %v989
        %v992 = vld [vmem:[#allocation2 + $0x5] sm:$0x1]
        %994 = vrot.lane.b32.xlu0 %v992, 96
        %v995 = vpop.permute.xlu0 %994
        %997 = vst.msk [vmem:[#allocation3 + $0x6] sm:$0x1] %vm890, %v995
        %v998 = vld [vmem:[#allocation2 + $0x6] sm:$0x1]
        %999 = vst.msk [vmem:[#allocation3 + $0x6] sm:$0x1] %vm897, %v998
        %v1000 = vld [vmem:[#allocation2 + $0x7] sm:$0x1]
        %1002 = vrot.lane.b32.xlu0 %v1000, 32
        %v1003 = vpop.permute.xlu0 %1002
        %1005 = vst.msk [vmem:[#allocation3 + $0x6] sm:$0x1] %vm904, %v1003
        %v1006 = vld [vmem:[#allocation2] sm:$0x1]
        %1008 = vrot.lane.b32.xlu0 %v1006, 32
        %v1009 = vpop.permute.xlu0 %1008
        %1011 = vst.msk [vmem:[#allocation3 + $0x3] sm:$0x1] %vm883, %v1009
        %v1012 = vld [vmem:[#allocation2 + $0x1] sm:$0x1]
        %1014 = vrot.lane.b32.xlu0 %v1012, 64
        %v1015 = vpop.permute.xlu0 %1014
        %1017 = vst.msk [vmem:[#allocation3 + $0x3] sm:$0x1] %vm890, %v1015
        %v1018 = vld [vmem:[#allocation2 + $0x2] sm:$0x1]
        %1020 = vrot.lane.b32.xlu0 %v1018, 96
        %v1021 = vpop.permute.xlu0 %1020
        %1023 = vst.msk [vmem:[#allocation3 + $0x3] sm:$0x1] %vm897, %v1021
        %v1024 = vld [vmem:[#allocation2 + $0x3] sm:$0x1]
        %1025 = vst.msk [vmem:[#allocation3 + $0x3] sm:$0x1] %vm904, %v1024
        %v1026 = vld [vmem:[#allocation2 + $0x4] sm:$0x1]
        %1028 = vrot.lane.b32.xlu0 %v1026, 32
        %v1029 = vpop.permute.xlu0 %1028
        %1031 = vst.msk [vmem:[#allocation3 + $0x7] sm:$0x1] %vm883, %v1029
        %v1032 = vld [vmem:[#allocation2 + $0x5] sm:$0x1]
        %1034 = vrot.lane.b32.xlu0 %v1032, 64
        %v1035 = vpop.permute.xlu0 %1034
        %1037 = vst.msk [vmem:[#allocation3 + $0x7] sm:$0x1] %vm890, %v1035
        %v1038 = vld [vmem:[#allocation2 + $0x6] sm:$0x1]
        %1040 = vrot.lane.b32.xlu0 %v1038, 96
        %v1041 = vpop.permute.xlu0 %1040
        %1043 = vst.msk [vmem:[#allocation3 + $0x7] sm:$0x1] %vm897, %v1041
        %v1044 = vld [vmem:[#allocation2 + $0x7] sm:$0x1]
        %1045 = vst.msk [vmem:[#allocation3 + $0x7] sm:$0x1] %vm904, %v1044
        %v1046 = vld [vmem:[%s8] ss:$4 sm:$0x3]
        %s1047 = scalar_lea.vmem %s8, 1
        %v1048 = vld [vmem:[%s1047] ss:$4 sm:$0x3]
        %s1049 = scalar_lea.vmem %s8, 2
        %v1050 = vld [vmem:[%s1049] ss:$4 sm:$0x3]
        %s1051 = scalar_lea.vmem %s8, 3
        %v1052 = vld [vmem:[%s1051] ss:$4 sm:$0x3]
        %v1053 = vld [vmem:[%s14] sm:$0x1]
        %v1054 = vld [vmem:[%s14 + $0x1] sm:$0x1]
        %v1055 = vld [vmem:[#allocation3] sm:$0xff]
        %v1056 = vld [vmem:[%s5] sm:$0xf]
        %1058 = vset.pattern.permute.xlu0 0
        %1059 = vperm.xlu0 %1058, %v1056
        %v1060 = vpop.permute.xlu0 %1059
        %v1062 = vunpack.c.l.s4 839922192
        %v1063 = vunpack.c.0.s8 %v1062
        %v1064 = vperm.slane %v1060, %v1063
        %v1066 = vmul.f32 %v1055, %v1064
        %v1067 = vld [vmem:[%s6] sm:$0xf]
        %1069 = vset.pattern.permute.xlu0 0
        %1070 = vperm.xlu0 %1069, %v1067
        %v1071 = vpop.permute.xlu0 %1070
        %v1073 = vunpack.c.l.s4 839922192
        %v1074 = vunpack.c.0.s8 %v1073
        %v1075 = vperm.slane %v1071, %v1074
        %v1077 = vadd.f32 %v1066, %v1075
        %s1078 = scalar_lea.vmem %s7, 32
        %v1079 = vld [vmem:[%s1078] sm:$0xff]
        %v1080 = vld [vmem:[%s1078 + $0x8] sm:$0xff]
        %v1081 = vld [vmem:[%s7] sm:$0xff]
        %v1082 = vld [vmem:[%s7 + $0x8] sm:$0xff]
        %1084 = vst [vmem:[#allocation1] ss:$2 sm:$0xff] %v1077
        %v1085 = vld.sshfl [vmem:[#allocation1] sm:$0xff pattern:$0x75316420]
        %v1086 = vld.sshfl [vmem:[#allocation1 + $0x8] sm:$0xff pattern:$0x75316420]
        %1089 = vrot.lane.b32.xlu0 %v1085, 2
        %v1090 = vpop.permute.xlu0 %1089
        %1091 = vrot.lane.b32.xlu0 %v1086, 2
        %v1092 = vpop.permute.xlu0 %1091
        %v1093 = vlaneseq
        %v1094 = vand.u32 %v1093, 127
        %vm1095 = vcmp.lt.s32.totalorder %v1094, 2
        %v1096 = vsel %vm1095, %v1090, %v1092
        %v1097 = vsel %vm1095, %v1092, %v1090
        %v1099 = vperm.slane %v1046, 0
        %v1100 = vperm.slane %v1046, 1
        %v1103 = vmul.f32 %v1097, %v1099
        %v1104 = vmul.f32 %v1096, %v1100
        %v1106 = vsel %vm847, %v1081, 0
        %v1109 = vsel %vm847, %v1082, 0
        %v1112 = vsel %vm851, %v1103, 0
        %v1115 = vsel %vm851, %v1104, 0
        %1117 = vmatpush.msra.mxu0 0.0
        %1118 = vmatpush.msra.mxu0 0.0
        %1119 = vmatpush.msra.mxu0 0.0
        %1120 = vmatpush.msra.mxu0 0.0
        %1121 = vmatpush.msra.mxu0 0.0
        %1122 = vmatpush.msra.mxu0 0.0
        %1123 = vmatpush.msra.mxu0 0.0
        %1124 = vmatpush.msra.mxu0 0.0
        %1125 = vmatpush.msra.mxu0 0.0
        %1126 = vmatpush.msra.mxu0 0.0
        %1127 = vmatpush.msra.mxu0 0.0
        %1128 = vmatpush.msra.mxu0 0.0
        %1129 = vmatpush.msra.mxu0 0.0
        %1130 = vmatpush.msra.mxu0 0.0
        %1131 = vmatpush.msra.mxu0 0.0
        %1132 = vmatpush.msra.mxu0 %v1112
        %1133 = vmatmul.f32.gmra.mxu0 %v1106
        %v1134 = vpop.f32.mrf.mxu0
        %v1135 = vadd.f32 0.0, %v1134
        %1136 = vmatmul.f32.gmra.mxu0 %v1109
        %v1137 = vpop.f32.mrf.mxu0
        %v1138 = vadd.f32 0.0, %v1137
        %1139 = vdwg.mxu0
        %1140 = vmatpush.msra.mxu0 0.0
        %1141 = vmatpush.msra.mxu0 0.0
        %1142 = vmatpush.msra.mxu0 0.0
        %1143 = vmatpush.msra.mxu0 0.0
        %1144 = vmatpush.msra.mxu0 0.0
        %1145 = vmatpush.msra.mxu0 0.0
        %1146 = vmatpush.msra.mxu0 0.0
        %1147 = vmatpush.msra.mxu0 0.0
        %1148 = vmatpush.msra.mxu0 0.0
        %1149 = vmatpush.msra.mxu0 0.0
        %1150 = vmatpush.msra.mxu0 0.0
        %1151 = vmatpush.msra.mxu0 0.0
        %1152 = vmatpush.msra.mxu0 0.0
        %1153 = vmatpush.msra.mxu0 0.0
        %1154 = vmatpush.msra.mxu0 0.0
        %1155 = vmatpush.msra.mxu0 %v1115
        %1156 = vmatmul.f32.gmra.mxu0 %v1106
        %v1157 = vpop.f32.mrf.mxu0
        %v1158 = vadd.f32 0.0, %v1157
        %1159 = vmatmul.f32.gmra.mxu0 %v1109
        %v1160 = vpop.f32.mrf.mxu0
        %v1161 = vadd.f32 0.0, %v1160
        %1162 = vdwg.mxu0
        %1163 = vst [vmem:[#allocation1] ss:$2 sm:$0xff] %v1077
        %v1164 = vld.sshfl [vmem:[#allocation1] sm:$0xff pattern:$0x75316420]
        %v1165 = vld.sshfl [vmem:[#allocation1 + $0x8] sm:$0xff pattern:$0x75316420]
        %v1167 = vsel %vm847, %v1079, 0
        %v1170 = vsel %vm847, %v1080, 0
        %v1172 = vsel %vm851, %v1164, 0
        %v1174 = vsel %vm851, %v1165, 0
        %1176 = vmatpush.msra.mxu0 0.0
        %1177 = vmatpush.msra.mxu0 0.0
        %1178 = vmatpush.msra.mxu0 0.0
        %1179 = vmatpush.msra.mxu0 0.0
        %1180 = vmatpush.msra.mxu0 0.0
        %1181 = vmatpush.msra.mxu0 0.0
        %1182 = vmatpush.msra.mxu0 0.0
        %1183 = vmatpush.msra.mxu0 0.0
        %1184 = vmatpush.msra.mxu0 0.0
        %1185 = vmatpush.msra.mxu0 0.0
        %1186 = vmatpush.msra.mxu0 0.0
        %1187 = vmatpush.msra.mxu0 0.0
        %1188 = vmatpush.msra.mxu0 0.0
        %1189 = vmatpush.msra.mxu0 0.0
        %1190 = vmatpush.msra.mxu0 0.0
        %1191 = vmatpush.msra.mxu0 %v1172
        %1192 = vmatmul.f32.gmra.mxu0 %v1167
        %v1193 = vpop.f32.mrf.mxu0
        %v1194 = vadd.f32 %v1135, %v1193
        %1195 = vmatmul.f32.gmra.mxu0 %v1170
        %v1196 = vpop.f32.mrf.mxu0
        %v1197 = vadd.f32 %v1138, %v1196
        %1198 = vdwg.mxu0
        %1199 = vmatpush.msra.mxu0 0.0
        %1200 = vmatpush.msra.mxu0 0.0
        %1201 = vmatpush.msra.mxu0 0.0
        %1202 = vmatpush.msra.mxu0 0.0
        %1203 = vmatpush.msra.mxu0 0.0
        %1204 = vmatpush.msra.mxu0 0.0
        %1205 = vmatpush.msra.mxu0 0.0
        %1206 = vmatpush.msra.mxu0 0.0
        %1207 = vmatpush.msra.mxu0 0.0
        %1208 = vmatpush.msra.mxu0 0.0
        %1209 = vmatpush.msra.mxu0 0.0
        %1210 = vmatpush.msra.mxu0 0.0
        %1211 = vmatpush.msra.mxu0 0.0
        %1212 = vmatpush.msra.mxu0 0.0
        %1213 = vmatpush.msra.mxu0 0.0
        %1214 = vmatpush.msra.mxu0 %v1174
        %1215 = vmatmul.f32.gmra.mxu0 %v1167
        %v1216 = vpop.f32.mrf.mxu0
        %v1217 = vadd.f32 %v1158, %v1216
        %1218 = vmatmul.f32.gmra.mxu0 %v1170
        %v1219 = vpop.f32.mrf.mxu0
        %v1220 = vadd.f32 %v1161, %v1219
        %1221 = vdwg.mxu0
        %s1222 = scalar_lea.vmem %s7, 16
        %v1223 = vld [vmem:[%s1222] sm:$0xff]
        %v1224 = vld [vmem:[%s1222 + $0x8] sm:$0xff]
        %1225 = vst [vmem:[#allocation1] ss:$2 sm:$0xff] %v1077
        %v1226 = vld.sshfl [vmem:[#allocation1] sm:$0xff pattern:$0x75316420]
        %v1227 = vld.sshfl [vmem:[#allocation1 + $0x8] sm:$0xff pattern:$0x75316420]
        %1230 = vrot.lane.b32.xlu0 %v1226, 1
        %v1231 = vpop.permute.xlu0 %1230
        %1232 = vrot.lane.b32.xlu0 %v1227, 1
        %v1233 = vpop.permute.xlu0 %1232
        %vm1234 = vcmp.lt.s32.totalorder %v1094, 1
        %v1235 = vsel %vm1234, %v1231, %v1233
        %v1236 = vsel %vm1234, %v1233, %v1231
        %v1238 = vperm.slane %v1048, 0
        %v1239 = vperm.slane %v1048, 1
        %v1242 = vmul.f32 %v1236, %v1238
        %v1243 = vmul.f32 %v1235, %v1239
        %v1245 = vsel %vm847, %v1223, 0
        %v1248 = vsel %vm847, %v1224, 0
        %v1251 = vsel %vm851, %v1242, 0
        %v1254 = vsel %vm851, %v1243, 0
        %1256 = vmatpush.msra.mxu0 0.0
        %1257 = vmatpush.msra.mxu0 0.0
        %1258 = vmatpush.msra.mxu0 0.0
        %1259 = vmatpush.msra.mxu0 0.0
        %1260 = vmatpush.msra.mxu0 0.0
        %1261 = vmatpush.msra.mxu0 0.0
        %1262 = vmatpush.msra.mxu0 0.0
        %1263 = vmatpush.msra.mxu0 0.0
        %1264 = vmatpush.msra.mxu0 0.0
        %1265 = vmatpush.msra.mxu0 0.0
        %1266 = vmatpush.msra.mxu0 0.0
        %1267 = vmatpush.msra.mxu0 0.0
        %1268 = vmatpush.msra.mxu0 0.0
        %1269 = vmatpush.msra.mxu0 0.0
        %1270 = vmatpush.msra.mxu0 0.0
        %1271 = vmatpush.msra.mxu0 %v1251
        %1272 = vmatmul.f32.gmra.mxu0 %v1245
        %v1273 = vpop.f32.mrf.mxu0
        %v1274 = vadd.f32 0.0, %v1273
        %1275 = vmatmul.f32.gmra.mxu0 %v1248
        %v1276 = vpop.f32.mrf.mxu0
        %v1277 = vadd.f32 0.0, %v1276
        %1278 = vdwg.mxu0
        %1279 = vmatpush.msra.mxu0 0.0
        %1280 = vmatpush.msra.mxu0 0.0
        %1281 = vmatpush.msra.mxu0 0.0
        %1282 = vmatpush.msra.mxu0 0.0
        %1283 = vmatpush.msra.mxu0 0.0
        %1284 = vmatpush.msra.mxu0 0.0
        %1285 = vmatpush.msra.mxu0 0.0
        %1286 = vmatpush.msra.mxu0 0.0
        %1287 = vmatpush.msra.mxu0 0.0
        %1288 = vmatpush.msra.mxu0 0.0
        %1289 = vmatpush.msra.mxu0 0.0
        %1290 = vmatpush.msra.mxu0 0.0
        %1291 = vmatpush.msra.mxu0 0.0
        %1292 = vmatpush.msra.mxu0 0.0
        %1293 = vmatpush.msra.mxu0 0.0
        %1294 = vmatpush.msra.mxu0 %v1254
        %1295 = vmatmul.f32.gmra.mxu0 %v1245
        %v1296 = vpop.f32.mrf.mxu0
        %v1297 = vadd.f32 0.0, %v1296
        %1298 = vmatmul.f32.gmra.mxu0 %v1248
        %v1299 = vpop.f32.mrf.mxu0
        %v1300 = vadd.f32 0.0, %v1299
        %1301 = vdwg.mxu0
        %v1302 = vadd.f32 %v1194, %v1274
        %v1303 = vadd.f32 %v1217, %v1297
        %v1304 = vadd.f32 %v1197, %v1277
        %v1305 = vadd.f32 %v1220, %v1300
        %s1306 = scalar_lea.vmem %s7, 48
        %v1307 = vld [vmem:[%s1306] sm:$0xff]
        %v1308 = vld [vmem:[%s1306 + $0x8] sm:$0xff]
        %1309 = vst [vmem:[#allocation1] ss:$2 sm:$0xff] %v1077
        %v1310 = vld.sshfl [vmem:[#allocation1] sm:$0xff pattern:$0x75316420]
        %v1311 = vld.sshfl [vmem:[#allocation1 + $0x8] sm:$0xff pattern:$0x75316420]
        %1314 = vrot.lane.b32.xlu0 %v1310, 127
        %v1315 = vpop.permute.xlu0 %1314
        %1316 = vrot.lane.b32.xlu0 %v1311, 127
        %v1317 = vpop.permute.xlu0 %1316
        %vm1318 = vcmp.lt.s32.totalorder %v1094, 127
        %v1319 = vsel %vm1318, %v1315, %v1317
        %v1320 = vsel %vm1318, %v1317, %v1315
        %v1322 = vperm.slane %v1050, 0
        %v1323 = vperm.slane %v1050, 1
        %v1326 = vmul.f32 %v1319, %v1322
        %v1327 = vmul.f32 %v1320, %v1323
        %v1329 = vsel %vm847, %v1307, 0
        %v1332 = vsel %vm847, %v1308, 0
        %v1335 = vsel %vm851, %v1326, 0
        %v1338 = vsel %vm851, %v1327, 0
        %1340 = vmatpush.msra.mxu0 0.0
        %1341 = vmatpush.msra.mxu0 0.0
        %1342 = vmatpush.msra.mxu0 0.0
        %1343 = vmatpush.msra.mxu0 0.0
        %1344 = vmatpush.msra.mxu0 0.0
        %1345 = vmatpush.msra.mxu0 0.0
        %1346 = vmatpush.msra.mxu0 0.0
        %1347 = vmatpush.msra.mxu0 0.0
        %1348 = vmatpush.msra.mxu0 0.0
        %1349 = vmatpush.msra.mxu0 0.0
        %1350 = vmatpush.msra.mxu0 0.0
        %1351 = vmatpush.msra.mxu0 0.0
        %1352 = vmatpush.msra.mxu0 0.0
        %1353 = vmatpush.msra.mxu0 0.0
        %1354 = vmatpush.msra.mxu0 0.0
        %1355 = vmatpush.msra.mxu0 %v1335
        %1356 = vmatmul.f32.gmra.mxu0 %v1329
        %v1357 = vpop.f32.mrf.mxu0
        %v1358 = vadd.f32 0.0, %v1357
        %1359 = vmatmul.f32.gmra.mxu0 %v1332
        %v1360 = vpop.f32.mrf.mxu0
        %v1361 = vadd.f32 0.0, %v1360
        %1362 = vdwg.mxu0
        %1363 = vmatpush.msra.mxu0 0.0
        %1364 = vmatpush.msra.mxu0 0.0
        %1365 = vmatpush.msra.mxu0 0.0
        %1366 = vmatpush.msra.mxu0 0.0
        %1367 = vmatpush.msra.mxu0 0.0
        %1368 = vmatpush.msra.mxu0 0.0
        %1369 = vmatpush.msra.mxu0 0.0
        %1370 = vmatpush.msra.mxu0 0.0
        %1371 = vmatpush.msra.mxu0 0.0
        %1372 = vmatpush.msra.mxu0 0.0
        %1373 = vmatpush.msra.mxu0 0.0
        %1374 = vmatpush.msra.mxu0 0.0
        %1375 = vmatpush.msra.mxu0 0.0
        %1376 = vmatpush.msra.mxu0 0.0
        %1377 = vmatpush.msra.mxu0 0.0
        %1378 = vmatpush.msra.mxu0 %v1338
        %1379 = vmatmul.f32.gmra.mxu0 %v1329
        %v1380 = vpop.f32.mrf.mxu0
        %v1381 = vadd.f32 0.0, %v1380
        %1382 = vmatmul.f32.gmra.mxu0 %v1332
        %v1383 = vpop.f32.mrf.mxu0
        %v1384 = vadd.f32 0.0, %v1383
        %1385 = vdwg.mxu0
        %v1386 = vadd.f32 %v1302, %v1358
        %v1387 = vadd.f32 %v1303, %v1381
        %v1388 = vadd.f32 %v1304, %v1361
        %v1389 = vadd.f32 %v1305, %v1384
        %s1390 = scalar_lea.vmem %s7, 64
        %v1391 = vld [vmem:[%s1390] sm:$0xff]
        %v1392 = vld [vmem:[%s1390 + $0x8] sm:$0xff]
        %1393 = vst [vmem:[#allocation1] ss:$2 sm:$0xff] %v1077
        %v1394 = vld.sshfl [vmem:[#allocation1] sm:$0xff pattern:$0x75316420]
        %v1395 = vld.sshfl [vmem:[#allocation1 + $0x8] sm:$0xff pattern:$0x75316420]
        %1398 = vrot.lane.b32.xlu0 %v1394, 126
        %v1399 = vpop.permute.xlu0 %1398
        %1400 = vrot.lane.b32.xlu0 %v1395, 126
        %v1401 = vpop.permute.xlu0 %1400
        %vm1402 = vcmp.lt.s32.totalorder %v1094, 126
        %v1403 = vsel %vm1402, %v1399, %v1401
        %v1404 = vsel %vm1402, %v1401, %v1399
        %v1406 = vperm.slane %v1052, 0
        %v1407 = vperm.slane %v1052, 1
        %v1410 = vmul.f32 %v1403, %v1406
        %v1411 = vmul.f32 %v1404, %v1407
        %v1413 = vsel %vm847, %v1391, 0
        %v1416 = vsel %vm847, %v1392, 0
        %v1419 = vsel %vm851, %v1410, 0
        %v1422 = vsel %vm851, %v1411, 0
        %1424 = vmatpush.msra.mxu0 0.0
        %1425 = vmatpush.msra.mxu0 0.0
        %1426 = vmatpush.msra.mxu0 0.0
        %1427 = vmatpush.msra.mxu0 0.0
        %1428 = vmatpush.msra.mxu0 0.0
        %1429 = vmatpush.msra.mxu0 0.0
        %1430 = vmatpush.msra.mxu0 0.0
        %1431 = vmatpush.msra.mxu0 0.0
        %1432 = vmatpush.msra.mxu0 0.0
        %1433 = vmatpush.msra.mxu0 0.0
        %1434 = vmatpush.msra.mxu0 0.0
        %1435 = vmatpush.msra.mxu0 0.0
        %1436 = vmatpush.msra.mxu0 0.0
        %1437 = vmatpush.msra.mxu0 0.0
        %1438 = vmatpush.msra.mxu0 0.0
        %1439 = vmatpush.msra.mxu0 %v1419
        %1440 = vmatmul.f32.gmra.mxu0 %v1413
        %v1441 = vpop.f32.mrf.mxu0
        %v1442 = vadd.f32 0.0, %v1441
        %1443 = vmatmul.f32.gmra.mxu0 %v1416
        %v1444 = vpop.f32.mrf.mxu0
        %v1445 = vadd.f32 0.0, %v1444
        %1446 = vdwg.mxu0
        %1447 = vmatpush.msra.mxu0 0.0
        %1448 = vmatpush.msra.mxu0 0.0
        %1449 = vmatpush.msra.mxu0 0.0
        %1450 = vmatpush.msra.mxu0 0.0
        %1451 = vmatpush.msra.mxu0 0.0
        %1452 = vmatpush.msra.mxu0 0.0
        %1453 = vmatpush.msra.mxu0 0.0
        %1454 = vmatpush.msra.mxu0 0.0
        %1455 = vmatpush.msra.mxu0 0.0
        %1456 = vmatpush.msra.mxu0 0.0
        %1457 = vmatpush.msra.mxu0 0.0
        %1458 = vmatpush.msra.mxu0 0.0
        %1459 = vmatpush.msra.mxu0 0.0
        %1460 = vmatpush.msra.mxu0 0.0
        %1461 = vmatpush.msra.mxu0 0.0
        %1462 = vmatpush.msra.mxu0 %v1422
        %1463 = vmatmul.f32.gmra.mxu0 %v1413
        %v1464 = vpop.f32.mrf.mxu0
        %v1465 = vadd.f32 0.0, %v1464
        %1466 = vmatmul.f32.gmra.mxu0 %v1416
        %v1467 = vpop.f32.mrf.mxu0
        %v1468 = vadd.f32 0.0, %v1467
        %1469 = vdwg.mxu0
        %v1470 = vadd.f32 %v1386, %v1442
        %v1471 = vadd.f32 %v1387, %v1465
        %v1472 = vadd.f32 %v1388, %v1445
        %v1473 = vadd.f32 %v1389, %v1468
        %v1474 = vmax.f32 %v1470, 0.0
        %v1475 = vmax.f32 %v1471, 0.0
        %v1476 = vmax.f32 %v1472, 0.0
        %v1477 = vmax.f32 %v1473, 0.0
        %v1478 = vld [vmem:[#allocation4] sm:$0xff]
        %v1479 = vld [vmem:[#allocation4 + $0x8] sm:$0xff]
        %v1480 = vld [vmem:[#allocation4 + $0x10] sm:$0xff]
        %v1481 = vld [vmem:[#allocation4 + $0x18] sm:$0xff]
        %v1482 = vld [vmem:[#allocation4 + $0x20] sm:$0xff]
        %v1483 = vld [vmem:[#allocation4 + $0x28] sm:$0xff]
        %v1484 = vld [vmem:[#allocation4 + $0x30] sm:$0xff]
        %v1485 = vld [vmem:[#allocation4 + $0x38] sm:$0xff]
        %v1486 = vld [vmem:[#allocation4 + $0x40] sm:$0xff]
        %v1487 = vld [vmem:[#allocation4 + $0x48] sm:$0xff]
        %v1488 = vld [vmem:[#allocation4 + $0x50] sm:$0xff]
        %v1489 = vld [vmem:[#allocation4 + $0x58] sm:$0xff]
        %v1490 = vld [vmem:[#allocation4 + $0x60] sm:$0xff]
        %v1491 = vld [vmem:[#allocation4 + $0x68] sm:$0xff]
        %v1492 = vld [vmem:[#allocation4 + $0x70] sm:$0xff]
        %v1493 = vld [vmem:[#allocation4 + $0x78] sm:$0xff]
        %v1494 = vld [vmem:[#allocation4 + $0x80] sm:$0xff]
        %v1495 = vld [vmem:[#allocation4 + $0x88] sm:$0xff]
        %v1496 = vld [vmem:[#allocation4 + $0x90] sm:$0xff]
        %v1497 = vld [vmem:[#allocation4 + $0x98] sm:$0xff]
        %v1498 = vld [vmem:[#allocation4 + $0xa0] sm:$0xff]
        %v1499 = vld [vmem:[#allocation4 + $0xa8] sm:$0xff]
        %v1500 = vld [vmem:[#allocation4 + $0xb0] sm:$0xff]
        %v1501 = vld [vmem:[#allocation4 + $0xb8] sm:$0xff]
        %v1502 = vld [vmem:[#allocation4 + $0xc0] sm:$0xff]
        %v1503 = vld [vmem:[#allocation4 + $0xc8] sm:$0xff]
        %v1504 = vld [vmem:[#allocation4 + $0xd0] sm:$0xff]
        %v1505 = vld [vmem:[#allocation4 + $0xd8] sm:$0xff]
        %v1506 = vld [vmem:[#allocation4 + $0xe0] sm:$0xff]
        %v1507 = vld [vmem:[#allocation4 + $0xe8] sm:$0xff]
        %v1508 = vld [vmem:[#allocation4 + $0xf0] sm:$0xff]
        %v1509 = vld [vmem:[#allocation4 + $0xf8] sm:$0xff]
        %1510 = vmatpush.msra.mxu0 %v1493
        %1511 = vmatpush.msra.mxu0 %v1492
        %1512 = vmatpush.msra.mxu0 %v1491
        %1513 = vmatpush.msra.mxu0 %v1490
        %1514 = vmatpush.msra.mxu0 %v1489
        %1515 = vmatpush.msra.mxu0 %v1488
        %1516 = vmatpush.msra.mxu0 %v1487
        %1517 = vmatpush.msra.mxu0 %v1486
        %1518 = vmatpush.msra.mxu0 %v1485
        %1519 = vmatpush.msra.mxu0 %v1484
        %1520 = vmatpush.msra.mxu0 %v1483
        %1521 = vmatpush.msra.mxu0 %v1482
        %1522 = vmatpush.msra.mxu0 %v1481
        %1523 = vmatpush.msra.mxu0 %v1480
        %1524 = vmatpush.msra.mxu0 %v1479
        %1525 = vmatpush.msra.mxu0 %v1478
        %1526 = vmatmul.f32.gmra.mxu0 %v1474
        %v1527 = vpop.f32.mrf.mxu0
        %v1528 = vadd.f32 0.0, %v1527
        %1529 = vmatmul.f32.gmra.mxu0 %v1476
        %v1530 = vpop.f32.mrf.mxu0
        %v1531 = vadd.f32 0.0, %v1530
        %1532 = vdwg.mxu0
        %1533 = vmatpush.msra.mxu0 %v1509
        %1534 = vmatpush.msra.mxu0 %v1508
        %1535 = vmatpush.msra.mxu0 %v1507
        %1536 = vmatpush.msra.mxu0 %v1506
        %1537 = vmatpush.msra.mxu0 %v1505
        %1538 = vmatpush.msra.mxu0 %v1504
        %1539 = vmatpush.msra.mxu0 %v1503
        %1540 = vmatpush.msra.mxu0 %v1502
        %1541 = vmatpush.msra.mxu0 %v1501
        %1542 = vmatpush.msra.mxu0 %v1500
        %1543 = vmatpush.msra.mxu0 %v1499
        %1544 = vmatpush.msra.mxu0 %v1498
        %1545 = vmatpush.msra.mxu0 %v1497
        %1546 = vmatpush.msra.mxu0 %v1496
        %1547 = vmatpush.msra.mxu0 %v1495
        %1548 = vmatpush.msra.mxu0 %v1494
        %1549 = vmatmul.f32.gmra.mxu0 %v1475
        %v1550 = vpop.f32.mrf.mxu0
        %v1551 = vadd.f32 %v1528, %v1550
        %1552 = vmatmul.f32.gmra.mxu0 %v1477
        %v1553 = vpop.f32.mrf.mxu0
        %v1554 = vadd.f32 %v1531, %v1553
        %1555 = vdwg.mxu0
        %v1556 = vld [vmem:[%s10] sm:$0xff]
        %v1557 = vld [vmem:[%s10 + $0x8] sm:$0xff]
        %1559 = vset.pattern.permute.xlu0 0
        %1560 = vperm.xlu0 %1559, %v1556
        %v1561 = vpop.permute.xlu0 %1560
        %1564 = vset.pattern.permute.xlu0 0
        %1565 = vperm.xlu0 %1564, %v1557
        %v1566 = vpop.permute.xlu0 %1565
        %v1568 = vmul.f32 %v1551, %v1561
        %v1569 = vmul.f32 %v1554, %v1566
        %v1570 = vld [vmem:[%s11] sm:$0xff]
        %v1571 = vld [vmem:[%s11 + $0x8] sm:$0xff]
        %1573 = vset.pattern.permute.xlu0 0
        %1574 = vperm.xlu0 %1573, %v1570
        %v1575 = vpop.permute.xlu0 %1574
        %1578 = vset.pattern.permute.xlu0 0
        %1579 = vperm.xlu0 %1578, %v1571
        %v1580 = vpop.permute.xlu0 %1579
        %v1582 = vadd.f32 %v1568, %v1575
        %v1583 = vadd.f32 %v1569, %v1580
        %v1584 = vld [vmem:[%s12] sm:$0xff]
        %v1585 = vld [vmem:[%s12 + $0x8] sm:$0xff]
        %v1586 = vld [vmem:[%s13] sm:$0xff]
        %v1587 = vld [vmem:[%s13 + $0x8] sm:$0xff]
        %1588 = vrot.lane.b32.xlu0 %v1582, 1
        %v1589 = vpop.permute.xlu0 %1588
        %1590 = vrot.lane.b32.xlu0 %v1583, 1
        %v1591 = vpop.permute.xlu0 %1590
        %v1592 = vperm.slane %v1053, 0
        %v1593 = vmul.f32 %v1589, %v1592
        %v1594 = vmul.f32 %v1591, %v1592
        %1595 = vrot.lane.b32.xlu0 %v1582, 127
        %v1596 = vpop.permute.xlu0 %1595
        %1597 = vrot.lane.b32.xlu0 %v1583, 127
        %v1598 = vpop.permute.xlu0 %1597
        %v1599 = vperm.slane %v1054, 0
        %v1600 = vmul.f32 %v1596, %v1599
        %v1601 = vmul.f32 %v1598, %v1599
        %1603 = vset.pattern.permute.xlu0 0
        %1604 = vperm.xlu0 %1603, %v1586
        %v1605 = vpop.permute.xlu0 %1604
        %1608 = vset.pattern.permute.xlu0 0
        %1609 = vperm.xlu0 %1608, %v1587
        %v1610 = vpop.permute.xlu0 %1609
        %vm1612 = vcmask 392192
        %v1614 = vsel %vm1612, %v1584, 0
        %v1617 = vsel %vm1612, %v1585, 0
        %1619 = vmatpush.msra.mxu0 0.0
        %1620 = vmatpush.msra.mxu0 0.0
        %1621 = vmatpush.msra.mxu0 0.0
        %1622 = vmatpush.msra.mxu0 0.0
        %1623 = vmatpush.msra.mxu0 0.0
        %1624 = vmatpush.msra.mxu0 0.0
        %1625 = vmatpush.msra.mxu0 0.0
        %1626 = vmatpush.msra.mxu0 0.0
        %1627 = vmatpush.msra.mxu0 0.0
        %1628 = vmatpush.msra.mxu0 0.0
        %1629 = vmatpush.msra.mxu0 %v1601
        %1630 = vmatpush.msra.mxu0 %v1600
        %1631 = vmatpush.msra.mxu0 %v1583
        %1632 = vmatpush.msra.mxu0 %v1582
        %1633 = vmatpush.msra.mxu0 %v1594
        %1634 = vmatpush.msra.mxu0 %v1593
        %1635 = vmatmul.f32.gmra.mxu0 %v1614
        %v1636 = vpop.f32.mrf.mxu0
        %v1637 = vadd.f32 %v1605, %v1636
        %1638 = vmatmul.f32.gmra.mxu0 %v1617
        %v1639 = vpop.f32.mrf.mxu0
        %v1640 = vadd.f32 %v1610, %v1639
        %1641 = vdwg.mxu0
        %v1642 = vmax.f32 %v1637, 0.0
        %v1643 = vmax.f32 %v1640, 0.0
        %v1644 = vadd.f32 %v1642, %v1551
        %v1645 = vadd.f32 %v1643, %v1554
        %v1646 = vld [vmem:[%s15] sm:$0xff]
        %v1647 = vld [vmem:[%s15 + $0x8] sm:$0xff]
        %1649 = vset.pattern.permute.xlu0 0
        %1650 = vperm.xlu0 %1649, %v1646
        %v1651 = vpop.permute.xlu0 %1650
        %1654 = vset.pattern.permute.xlu0 0
        %1655 = vperm.xlu0 %1654, %v1647
        %v1656 = vpop.permute.xlu0 %1655
        %v1658 = vmul.f32 %v1644, %v1651
        %v1659 = vmul.f32 %v1645, %v1656
        %v1660 = vld [vmem:[%s16] sm:$0xff]
        %v1661 = vld [vmem:[%s16 + $0x8] sm:$0xff]
        %1663 = vset.pattern.permute.xlu0 0
        %1664 = vperm.xlu0 %1663, %v1660
        %v1665 = vpop.permute.xlu0 %1664
        %1668 = vset.pattern.permute.xlu0 0
        %1669 = vperm.xlu0 %1668, %v1661
        %v1670 = vpop.permute.xlu0 %1669
        %v1672 = vadd.f32 %v1658, %v1665
        %v1673 = vadd.f32 %v1659, %v1670
        %v1674 = vld [vmem:[%s17] sm:$0xff]
        %v1675 = vld [vmem:[%s18] sm:$0xff]
        %1676 = vrot.lane.b32.xlu0 %v1672, 1
        %v1677 = vpop.permute.xlu0 %1676
        %1678 = vrot.lane.b32.xlu0 %v1673, 1
        %v1679 = vpop.permute.xlu0 %1678
        %v1680 = vmul.f32 %v1677, %v1592
        %v1681 = vmul.f32 %v1679, %v1592
        %1682 = vrot.lane.b32.xlu0 %v1672, 127
        %v1683 = vpop.permute.xlu0 %1682
        %1684 = vrot.lane.b32.xlu0 %v1673, 127
        %v1685 = vpop.permute.xlu0 %1684
        %v1686 = vmul.f32 %v1683, %v1599
        %v1687 = vmul.f32 %v1685, %v1599
        %1689 = vset.pattern.permute.xlu0 0
        %1690 = vperm.xlu0 %1689, %v1675
        %v1691 = vpop.permute.xlu0 %1690
        %v1694 = vsel %vm1612, %v1674, 0
        %1696 = vmatpush.msra.mxu0 0.0
        %1697 = vmatpush.msra.mxu0 0.0
        %1698 = vmatpush.msra.mxu0 0.0
        %1699 = vmatpush.msra.mxu0 0.0
        %1700 = vmatpush.msra.mxu0 0.0
        %1701 = vmatpush.msra.mxu0 0.0
        %1702 = vmatpush.msra.mxu0 0.0
        %1703 = vmatpush.msra.mxu0 0.0
        %1704 = vmatpush.msra.mxu0 0.0
        %1705 = vmatpush.msra.mxu0 0.0
        %1706 = vmatpush.msra.mxu0 %v1687
        %1707 = vmatpush.msra.mxu0 %v1686
        %1708 = vmatpush.msra.mxu0 %v1673
        %1709 = vmatpush.msra.mxu0 %v1672
        %1710 = vmatpush.msra.mxu0 %v1681
        %1711 = vmatpush.msra.mxu0 %v1680
        %1712 = vmatmul.f32.gmra.mxu0 %v1694
        %v1713 = vpop.f32.mrf.mxu0
        %v1714 = vadd.f32 %v1691, %v1713
        %1715 = vdwg.mxu0
        %v1716 = vmax.f32 %v1714, 0.0
        %v1717 = vld [vmem:[%s19] sm:$0xff]
        %1719 = vset.pattern.permute.xlu0 0
        %1720 = vperm.xlu0 %1719, %v1717
        %v1721 = vpop.permute.xlu0 %1720
        %v1723 = vmul.f32 %v1716, %v1721
        %v1724 = vld [vmem:[%s20] sm:$0xff]
        %1726 = vset.pattern.permute.xlu0 0
        %1727 = vperm.xlu0 %1726, %v1724
        %v1728 = vpop.permute.xlu0 %1727
        %v1730 = vadd.f32 %v1723, %v1728
        %v1731 = vld [vmem:[%s21] sm:$0xff]
        %v1732 = vld [vmem:[%s22] sm:$0xff]
        %1733 = vrot.lane.b32.xlu0 %v1730, 1
        %v1734 = vpop.permute.xlu0 %1733
        %v1735 = vmul.f32 %v1734, %v1592
        %1736 = vrot.lane.b32.xlu0 %v1730, 127
        %v1737 = vpop.permute.xlu0 %1736
        %v1738 = vmul.f32 %v1737, %v1599
        %1740 = vset.pattern.permute.xlu0 0
        %1741 = vperm.xlu0 %1740, %v1732
        %v1742 = vpop.permute.xlu0 %1741
        %vm1744 = vcmask 195584
        %v1746 = vsel %vm1744, %v1731, 0
        %1748 = vmatpush.msra.mxu0 0.0
        %1749 = vmatpush.msra.mxu0 0.0
        %1750 = vmatpush.msra.mxu0 0.0
        %1751 = vmatpush.msra.mxu0 0.0
        %1752 = vmatpush.msra.mxu0 0.0
        %1753 = vmatpush.msra.mxu0 0.0
        %1754 = vmatpush.msra.mxu0 0.0
        %1755 = vmatpush.msra.mxu0 0.0
        %1756 = vmatpush.msra.mxu0 0.0
        %1757 = vmatpush.msra.mxu0 0.0
        %1758 = vmatpush.msra.mxu0 0.0
        %1759 = vmatpush.msra.mxu0 0.0
        %1760 = vmatpush.msra.mxu0 0.0
        %1761 = vmatpush.msra.mxu0 %v1738
        %1762 = vmatpush.msra.mxu0 %v1730
        %1763 = vmatpush.msra.mxu0 %v1735
        %1764 = vmatmul.f32.gmra.mxu0 %v1746
        %v1765 = vpop.f32.mrf.mxu0
        %v1766 = vadd.f32 %v1742, %v1765
        %1767 = vdwg.mxu0
        %v1768 = vmax.f32 %v1766, 0.0
        %v1769 = vadd.f32 %v1768, %v1716
        %s1770 = scalar_lea.vmem %s19, 8
        %v1771 = vld [vmem:[%s1770] sm:$0xff]
        %1773 = vset.pattern.permute.xlu0 0
        %1774 = vperm.xlu0 %1773, %v1771
        %v1775 = vpop.permute.xlu0 %1774
        %v1777 = vmul.f32 %v1769, %v1775
        %s1778 = scalar_lea.vmem %s20, 8
        %v1779 = vld [vmem:[%s1778] sm:$0xff]
        %1781 = vset.pattern.permute.xlu0 0
        %1782 = vperm.xlu0 %1781, %v1779
        %v1783 = vpop.permute.xlu0 %1782
        %v1785 = vadd.f32 %v1777, %v1783
        %s1786 = scalar_lea.vmem %s21, 8
        %v1787 = vld [vmem:[%s1786] sm:$0xff]
        %s1788 = scalar_lea.vmem %s22, 8
        %v1789 = vld [vmem:[%s1788] sm:$0xff]
        %1790 = vrot.lane.b32.xlu0 %v1785, 1
        %v1791 = vpop.permute.xlu0 %1790
        %v1792 = vmul.f32 %v1791, %v1592
        %1793 = vrot.lane.b32.xlu0 %v1785, 127
        %v1794 = vpop.permute.xlu0 %1793
        %v1795 = vmul.f32 %v1794, %v1599
        %1797 = vset.pattern.permute.xlu0 0
        %1798 = vperm.xlu0 %1797, %v1789
        %v1799 = vpop.permute.xlu0 %1798
        %v1802 = vsel %vm1744, %v1787, 0
        %1804 = vmatpush.msra.mxu0 0.0
        %1805 = vmatpush.msra.mxu0 0.0
        %1806 = vmatpush.msra.mxu0 0.0
        %1807 = vmatpush.msra.mxu0 0.0
        %1808 = vmatpush.msra.mxu0 0.0
        %1809 = vmatpush.msra.mxu0 0.0
        %1810 = vmatpush.msra.mxu0 0.0
        %1811 = vmatpush.msra.mxu0 0.0
        %1812 = vmatpush.msra.mxu0 0.0
        %1813 = vmatpush.msra.mxu0 0.0
        %1814 = vmatpush.msra.mxu0 0.0
        %1815 = vmatpush.msra.mxu0 0.0
        %1816 = vmatpush.msra.mxu0 0.0
        %1817 = vmatpush.msra.mxu0 %v1795
        %1818 = vmatpush.msra.mxu0 %v1785
        %1819 = vmatpush.msra.mxu0 %v1792
        %1820 = vmatmul.f32.gmra.mxu0 %v1802
        %v1821 = vpop.f32.mrf.mxu0
        %v1822 = vadd.f32 %v1799, %v1821
        %1823 = vdwg.mxu0
        %v1824 = vmax.f32 %v1822, 0.0
        %v1825 = vadd.f32 %v1824, %v1769
        %s1826 = scalar_lea.vmem %s19, 16
        %v1827 = vld [vmem:[%s1826] sm:$0xff]
        %1829 = vset.pattern.permute.xlu0 0
        %1830 = vperm.xlu0 %1829, %v1827
        %v1831 = vpop.permute.xlu0 %1830
        %v1833 = vmul.f32 %v1825, %v1831
        %s1834 = scalar_lea.vmem %s20, 16
        %v1835 = vld [vmem:[%s1834] sm:$0xff]
        %1837 = vset.pattern.permute.xlu0 0
        %1838 = vperm.xlu0 %1837, %v1835
        %v1839 = vpop.permute.xlu0 %1838
        %v1841 = vadd.f32 %v1833, %v1839
        %s1842 = scalar_lea.vmem %s21, 16
        %v1843 = vld [vmem:[%s1842] sm:$0xff]
        %s1844 = scalar_lea.vmem %s22, 16
        %v1845 = vld [vmem:[%s1844] sm:$0xff]
        %1846 = vrot.lane.b32.xlu0 %v1841, 1
        %v1847 = vpop.permute.xlu0 %1846
        %v1848 = vmul.f32 %v1847, %v1592
        %1849 = vrot.lane.b32.xlu0 %v1841, 127
        %v1850 = vpop.permute.xlu0 %1849
        %v1851 = vmul.f32 %v1850, %v1599
        %1853 = vset.pattern.permute.xlu0 0
        %1854 = vperm.xlu0 %1853, %v1845
        %v1855 = vpop.permute.xlu0 %1854
        %v1858 = vsel %vm1744, %v1843, 0
        %1860 = vmatpush.msra.mxu0 0.0
        %1861 = vmatpush.msra.mxu0 0.0
        %1862 = vmatpush.msra.mxu0 0.0
        %1863 = vmatpush.msra.mxu0 0.0
        %1864 = vmatpush.msra.mxu0 0.0
        %1865 = vmatpush.msra.mxu0 0.0
        %1866 = vmatpush.msra.mxu0 0.0
        %1867 = vmatpush.msra.mxu0 0.0
        %1868 = vmatpush.msra.mxu0 0.0
        %1869 = vmatpush.msra.mxu0 0.0
        %1870 = vmatpush.msra.mxu0 0.0
        %1871 = vmatpush.msra.mxu0 0.0
        %1872 = vmatpush.msra.mxu0 0.0
        %1873 = vmatpush.msra.mxu0 %v1851
        %1874 = vmatpush.msra.mxu0 %v1841
        %1875 = vmatpush.msra.mxu0 %v1848
        %1876 = vmatmul.f32.gmra.mxu0 %v1858
        %v1877 = vpop.f32.mrf.mxu0
        %v1878 = vadd.f32 %v1855, %v1877
        %1879 = vdwg.mxu0
        %v1880 = vmax.f32 %v1878, 0.0
        %v1881 = vadd.f32 %v1880, %v1825
        %s1882 = scalar_lea.vmem %s19, 24
        %v1883 = vld [vmem:[%s1882] sm:$0xff]
        %1885 = vset.pattern.permute.xlu0 0
        %1886 = vperm.xlu0 %1885, %v1883
        %v1887 = vpop.permute.xlu0 %1886
        %v1889 = vmul.f32 %v1881, %v1887
        %s1890 = scalar_lea.vmem %s20, 24
        %v1891 = vld [vmem:[%s1890] sm:$0xff]
        %1893 = vset.pattern.permute.xlu0 0
        %1894 = vperm.xlu0 %1893, %v1891
        %v1895 = vpop.permute.xlu0 %1894
        %v1897 = vadd.f32 %v1889, %v1895
        %s1898 = scalar_lea.vmem %s21, 24
        %v1899 = vld [vmem:[%s1898] sm:$0xff]
        %s1900 = scalar_lea.vmem %s22, 24
        %v1901 = vld [vmem:[%s1900] sm:$0xff]
        %1902 = vrot.lane.b32.xlu0 %v1897, 1
        %v1903 = vpop.permute.xlu0 %1902
        %v1904 = vmul.f32 %v1903, %v1592
        %1905 = vrot.lane.b32.xlu0 %v1897, 127
        %v1906 = vpop.permute.xlu0 %1905
        %v1907 = vmul.f32 %v1906, %v1599
        %1909 = vset.pattern.permute.xlu0 0
        %1910 = vperm.xlu0 %1909, %v1901
        %v1911 = vpop.permute.xlu0 %1910
        %v1914 = vsel %vm1744, %v1899, 0
        %1916 = vmatpush.msra.mxu0 0.0
        %1917 = vmatpush.msra.mxu0 0.0
        %1918 = vmatpush.msra.mxu0 0.0
        %1919 = vmatpush.msra.mxu0 0.0
        %1920 = vmatpush.msra.mxu0 0.0
        %1921 = vmatpush.msra.mxu0 0.0
        %1922 = vmatpush.msra.mxu0 0.0
        %1923 = vmatpush.msra.mxu0 0.0
        %1924 = vmatpush.msra.mxu0 0.0
        %1925 = vmatpush.msra.mxu0 0.0
        %1926 = vmatpush.msra.mxu0 0.0
        %1927 = vmatpush.msra.mxu0 0.0
        %1928 = vmatpush.msra.mxu0 0.0
        %1929 = vmatpush.msra.mxu0 %v1907
        %1930 = vmatpush.msra.mxu0 %v1897
        %1931 = vmatpush.msra.mxu0 %v1904
        %1932 = vmatmul.f32.gmra.mxu0 %v1914
        %v1933 = vpop.f32.mrf.mxu0
        %v1934 = vadd.f32 %v1911, %v1933
        %1935 = vdwg.mxu0
        %v1936 = vmax.f32 %v1934, 0.0
        %v1937 = vadd.f32 %v1936, %v1881
        %s1938 = scalar_lea.vmem %s19, 32
        %v1939 = vld [vmem:[%s1938] sm:$0xff]
        %1941 = vset.pattern.permute.xlu0 0
        %1942 = vperm.xlu0 %1941, %v1939
        %v1943 = vpop.permute.xlu0 %1942
        %v1945 = vmul.f32 %v1937, %v1943
        %s1946 = scalar_lea.vmem %s20, 32
        %v1947 = vld [vmem:[%s1946] sm:$0xff]
        %1949 = vset.pattern.permute.xlu0 0
        %1950 = vperm.xlu0 %1949, %v1947
        %v1951 = vpop.permute.xlu0 %1950
        %v1953 = vadd.f32 %v1945, %v1951
        %s1954 = scalar_lea.vmem %s21, 32
        %v1955 = vld [vmem:[%s1954] sm:$0xff]
        %s1956 = scalar_lea.vmem %s22, 32
        %v1957 = vld [vmem:[%s1956] sm:$0xff]
        %1958 = vrot.lane.b32.xlu0 %v1953, 1
        %v1959 = vpop.permute.xlu0 %1958
        %v1960 = vmul.f32 %v1959, %v1592
        %1961 = vrot.lane.b32.xlu0 %v1953, 127
        %v1962 = vpop.permute.xlu0 %1961
        %v1963 = vmul.f32 %v1962, %v1599
        %1965 = vset.pattern.permute.xlu0 0
        %1966 = vperm.xlu0 %1965, %v1957
        %v1967 = vpop.permute.xlu0 %1966
        %v1970 = vsel %vm1744, %v1955, 0
        %1972 = vmatpush.msra.mxu0 0.0
        %1973 = vmatpush.msra.mxu0 0.0
        %1974 = vmatpush.msra.mxu0 0.0
        %1975 = vmatpush.msra.mxu0 0.0
        %1976 = vmatpush.msra.mxu0 0.0
        %1977 = vmatpush.msra.mxu0 0.0
        %1978 = vmatpush.msra.mxu0 0.0
        %1979 = vmatpush.msra.mxu0 0.0
        %1980 = vmatpush.msra.mxu0 0.0
        %1981 = vmatpush.msra.mxu0 0.0
        %1982 = vmatpush.msra.mxu0 0.0
        %1983 = vmatpush.msra.mxu0 0.0
        %1984 = vmatpush.msra.mxu0 0.0
        %1985 = vmatpush.msra.mxu0 %v1963
        %1986 = vmatpush.msra.mxu0 %v1953
        %1987 = vmatpush.msra.mxu0 %v1960
        %1988 = vmatmul.f32.gmra.mxu0 %v1970
        %v1989 = vpop.f32.mrf.mxu0
        %v1990 = vadd.f32 %v1967, %v1989
        %1991 = vdwg.mxu0
        %v1992 = vmax.f32 %v1990, 0.0
        %v1993 = vadd.f32 %v1992, %v1937
        %s1994 = scalar_lea.vmem %s19, 40
        %v1995 = vld [vmem:[%s1994] sm:$0xff]
        %1997 = vset.pattern.permute.xlu0 0
        %1998 = vperm.xlu0 %1997, %v1995
        %v1999 = vpop.permute.xlu0 %1998
        %v2001 = vmul.f32 %v1993, %v1999
        %s2002 = scalar_lea.vmem %s20, 40
        %v2003 = vld [vmem:[%s2002] sm:$0xff]
        %2005 = vset.pattern.permute.xlu0 0
        %2006 = vperm.xlu0 %2005, %v2003
        %v2007 = vpop.permute.xlu0 %2006
        %v2009 = vadd.f32 %v2001, %v2007
        %s2010 = scalar_lea.vmem %s21, 40
        %v2011 = vld [vmem:[%s2010] sm:$0xff]
        %s2012 = scalar_lea.vmem %s22, 40
        %v2013 = vld [vmem:[%s2012] sm:$0xff]
        %2014 = vrot.lane.b32.xlu0 %v2009, 1
        %v2015 = vpop.permute.xlu0 %2014
        %v2016 = vmul.f32 %v2015, %v1592
        %2017 = vrot.lane.b32.xlu0 %v2009, 127
        %v2018 = vpop.permute.xlu0 %2017
        %v2019 = vmul.f32 %v2018, %v1599
        %2021 = vset.pattern.permute.xlu0 0
        %2022 = vperm.xlu0 %2021, %v2013
        %v2023 = vpop.permute.xlu0 %2022
        %v2026 = vsel %vm1744, %v2011, 0
        %2028 = vmatpush.msra.mxu0 0.0
        %2029 = vmatpush.msra.mxu0 0.0
        %2030 = vmatpush.msra.mxu0 0.0
        %2031 = vmatpush.msra.mxu0 0.0
        %2032 = vmatpush.msra.mxu0 0.0
        %2033 = vmatpush.msra.mxu0 0.0
        %2034 = vmatpush.msra.mxu0 0.0
        %2035 = vmatpush.msra.mxu0 0.0
        %2036 = vmatpush.msra.mxu0 0.0
        %2037 = vmatpush.msra.mxu0 0.0
        %2038 = vmatpush.msra.mxu0 0.0
        %2039 = vmatpush.msra.mxu0 0.0
        %2040 = vmatpush.msra.mxu0 0.0
        %2041 = vmatpush.msra.mxu0 %v2019
        %2042 = vmatpush.msra.mxu0 %v2009
        %2043 = vmatpush.msra.mxu0 %v2016
        %2044 = vmatmul.f32.gmra.mxu0 %v2026
        %v2045 = vpop.f32.mrf.mxu0
        %v2046 = vadd.f32 %v2023, %v2045
        %2047 = vdwg.mxu0
        %v2048 = vmax.f32 %v2046, 0.0
        %v2049 = vadd.f32 %v2048, %v1993
        %v2050 = vld [vmem:[%s23] sm:$0xff]
        %2052 = vset.pattern.permute.xlu0 0
        %2053 = vperm.xlu0 %2052, %v2050
        %v2054 = vpop.permute.xlu0 %2053
        %v2056 = vmul.f32 %v2049, %v2054
        %v2057 = vld [vmem:[%s24] sm:$0xff]
        %2059 = vset.pattern.permute.xlu0 0
        %2060 = vperm.xlu0 %2059, %v2057
        %v2061 = vpop.permute.xlu0 %2060
        %v2063 = vadd.f32 %v2056, %v2061
        %v2064 = vld [vmem:[%s25] sm:$0xf]
        %v2065 = vld [vmem:[%s26] sm:$0xf]
        %2066 = vrot.lane.b32.xlu0 %v2063, 1
        %v2067 = vpop.permute.xlu0 %2066
        %v2068 = vmul.f32 %v2067, %v1592
        %2069 = vrot.lane.b32.xlu0 %v2063, 127
        %v2070 = vpop.permute.xlu0 %2069
        %v2071 = vmul.f32 %v2070, %v1599
        %2073 = vset.pattern.permute.xlu0 0
        %2074 = vperm.xlu0 %2073, %v2065
        %v2075 = vpop.permute.xlu0 %2074
        %v2078 = vsel %vm1744, %v2064, 0
        %2080 = vmatpush.msra.mxu0 0.0
        %2081 = vmatpush.msra.mxu0 0.0
        %2082 = vmatpush.msra.mxu0 0.0
        %2083 = vmatpush.msra.mxu0 0.0
        %2084 = vmatpush.msra.mxu0 0.0
        %2085 = vmatpush.msra.mxu0 0.0
        %2086 = vmatpush.msra.mxu0 0.0
        %2087 = vmatpush.msra.mxu0 0.0
        %2088 = vmatpush.msra.mxu0 0.0
        %2089 = vmatpush.msra.mxu0 0.0
        %2090 = vmatpush.msra.mxu0 0.0
        %2091 = vmatpush.msra.mxu0 0.0
        %2092 = vmatpush.msra.mxu0 0.0
        %2093 = vmatpush.msra.mxu0 %v2071
        %2094 = vmatpush.msra.mxu0 %v2063
        %2095 = vmatpush.msra.mxu0 %v2068
        %2096 = vmatmul.f32.gmra.mxu0 %v2078
        %v2097 = vpop.f32.mrf.mxu0
        %v2098 = vadd.f32 %v2075, %v2097
        %2099 = vdwg.mxu0
        %v2100 = vmax.f32 %v2098, 0.0
        %2101 = vst [vmem:[%s826] sm:$0xf] %v2100
        %s2102 = sand.u32 %s622, 1
        %s2103 = scalar_lea.sflag [#allocation6], %s2102
        %s2104 = sand.u32 %s622, 1
        %s2105 = smul.addr %s2104, 4
        %s2106 = scalar_lea.vmem [#allocation7], %s2105
        // Predicated region
        $region133: #{tpu_custom_call.1} parent=127 // pred_check
          %p2107 = pneg %p632
        $region134: #{tpu_custom_call.1} parent=127 // pred_check_branch
          %2109 = sbr.rel (%p2107) target = $region136
        $region135: #{tpu_custom_call.1} parent=127 // pred_region
          %2111 = vsyncadd %s2103, 0
          %s2112 = smul.addr %s42, 4
          %s2113 = scalar_lea.hbm %s27, %s2112
          %s2115 = sshll.u32 %s2106, 4
          %s2116 = int_to_ptr.vmem [resolvable:$true] %s2115
          %s2117 = sshll.u32 %s2113, 4
          %s2118 = int_to_ptr.hbm [resolvable:$true] %s2117
          %2120 = dma.vmem_to_hbm [thread:$0]  %s2116, 64, %s2118, %s2103
        $region136: #{tpu_custom_call.1} parent=127 // pred_fallthru
          _
      $region128: #{tpu_custom_call.1} parent=5 // pred_fallthru
        _
      %p2121 = scmp.le.s32.totalorder 2, %s37
      // Predicated region
      $region137: #{tpu_custom_call.1} parent=5 // pred_check
        %p2122 = pneg %p2121
      $region138: #{tpu_custom_call.1} parent=5 // pred_check_branch
        %2124 = sbr.rel (%p2122) target = $region140
      $region139: #{tpu_custom_call.1} parent=5 // pred_region
        %s2125 = ssub.s32 %s37, 2
        // Predicated region
        $region141: #{tpu_custom_call.1} parent=139 // pred_check
          %p2126 = pneg %p638
        $region142: #{tpu_custom_call.1} parent=139 // pred_check_branch
          %2128 = sbr.rel (%p2126) target = $region144
        $region143: #{tpu_custom_call.1} parent=139 // pred_region
          %s2129 = sand.u32 %s623, 1
          %s2130 = scalar_lea.sflag [#allocation6], %s2129
          %s2131 = sand.u32 %s623, 1
          %s2132 = smul.addr %s2131, 4
          %s2133 = scalar_lea.vmem [#allocation7], %s2132
          %2135 = dma.done %s2130, 64
        $region144: #{tpu_custom_call.1} parent=139 // pred_fallthru
          _
      $region140: #{tpu_custom_call.1} parent=5 // pred_fallthru
        _
    $region6: #{tpu_custom_call.1} parent=1 // loop_footer
      %s41 = sadd.s32 1, %s37
    $region7: #{tpu_custom_call.1} parent=1 // loop_footer_branch
      %36 = sbr.rel target = $region3
    $region8: #{tpu_custom_call.1} parent=1 // loop_exit
      _
    %2136 = vsyncpa [#allocation5], 1
    %s2137 = scalar_lea.sflag [#allocation5], 1
    %2138 = vsyncpa %s2137, 1
    %2139 = vsyncpa [#allocation6], 1
    %s2140 = scalar_lea.sflag [#allocation6], 1
    %2141 = vsyncpa %s2140, 1

</llo_original>
